<compile_context>
chip_gen: v7x
topology: tpu7x:2x2x1
jax: 0.10.0
libtpu: 0.0.40
codegen_flags: <defaults>
</compile_context>

<pallas_src>
import math

import jax
import jax.numpy as jnp
from jax.experimental import pallas as pl
from jax.experimental.pallas import tpu as pltpu


# --------------------------------------------------------------------------- #
# Small host-side helpers
# --------------------------------------------------------------------------- #
def _round_up(x, m):
    return -(-x // m) * m


def _pick_tile(n, t_req, t_min=256):
    """Largest multiple of 256 <= t_req that still gives >= 2 grid blocks when the
    problem allows it (keeps the 'parallel' axis shardable across v7x's 2 TCs)."""
    t_req = max(t_min, _round_up(t_req, t_min))
    t = min(t_req, _round_up(n, t_min))
    while t > t_min and _round_up(n, t) // t < 2:
        t -= t_min
    return t


def _static_max(x, fallback):
    """Concrete max of a small int array (grid extents must be static Python ints).
    Falls back to the dense grid extent if the wrapper is traced under jit."""
    try:
        return max(int(jnp.max(x)), 1)
    except jax.errors.ConcretizationTypeError:
        return max(int(fallback), 1)


def _blk_table(tlo, tcnt, max_tiles):
    """Flat (G*max_tiles,) int32 table: blk[g, j] = tlo[g] + min(j, max(tcnt[g]-1, 0)).
    Skipped steps re-reference the previously fetched block, so their DMA is elided."""
    j_ids = jnp.arange(max_tiles, dtype=jnp.int32)
    clamped = jnp.minimum(j_ids[None, :], jnp.maximum(tcnt - 1, 0)[:, None])
    return (tlo[:, None] + clamped).astype(jnp.int32).reshape(-1)


# --------------------------------------------------------------------------- #
# Kernel A: node update (mean aggregation of edge feats + W_apply + relu,
#           with W_edge pre-applied to produce the two gather tables)
# --------------------------------------------------------------------------- #
def _node_kernel(eblk_ref, tcnt_ref, dst_ref, ef_ref, nf_ref, wan_ref, wae_ref,
                 ba_ref, weu_ref, wev_ref, h_ref, hu_ref, hv_ref, acc_ref):
    i = pl.program_id(0)          # node tile (parallel)
    j = pl.program_id(1)          # local edge-tile step (reduction, tile-skipped)
    tn = nf_ref.shape[0]
    te = dst_ref.shape[1]

    @pl.when(j == 0)
    def _():
        acc_ref[...] = jnp.zeros_like(acc_ref)

    @pl.when(j < tcnt_ref[i])
    def _():
        n_off = i * tn
        # Offset applied to the small (1, TE) dst row, not the (TN, TE) iota.
        row_ids = jax.lax.broadcasted_iota(jnp.int32, (tn, te), 0)
        mask = (row_ids == (dst_ref[...] - n_off)).astype(jnp.bfloat16)
        # ef tile is [efeats | 0-pad | 1]; the trailing ones column makes the last
        # accumulator lane the in-degree (same MXU matmul, lane-dense (TN,128) acc).
        acc_ref[...] += jnp.dot(mask, ef_ref[...],
                                preferred_element_type=jnp.float32)

    @pl.when(j == pl.num_programs(1) - 1)
    def _():
        acc = acc_ref[...]
        deg = jnp.maximum(acc[:, -1:], 1.0)                 # in-degree lane
        h_neigh = acc * pl.reciprocal(deg, approx=True)     # mean aggregation
        # cat([nfeats, h_neigh]) @ W_apply rewritten as two dots (no in-kernel concat;
        # wae rows beyond edim are zero so the padded lanes contribute nothing).
        h = (jnp.dot(nf_ref[...], wan_ref[...], preferred_element_type=jnp.float32)
             + jnp.dot(h_neigh, wae_ref[...], preferred_element_type=jnp.float32)
             + ba_ref[...])
        h = jnp.maximum(h, 0.0)
        h_ref[...] = h
        # W_edge folded here: the edge stage only gathers rows of these tables.
        hu_ref[...] = jnp.dot(h, weu_ref[...],
                              preferred_element_type=jnp.float32).astype(jnp.bfloat16)
        hv_ref[...] = jnp.dot(h, wev_ref[...],
                              preferred_element_type=jnp.float32).astype(jnp.bfloat16)


# --------------------------------------------------------------------------- #
# Kernel B: generic "gather table rows by sorted index" via one-hot matmul,
#           with scalar-prefetch tile skipping on the node axis.
# --------------------------------------------------------------------------- #
def _gather_kernel(nblk_ref, tcnt_ref, idx_ref, tbl_ref, out_ref, acc_ref):
    k = pl.program_id(0)          # edge tile (parallel)
    j = pl.program_id(1)          # local node-tile step (reduction, tile-skipped)
    te = idx_ref.shape[0]
    tn = tbl_ref.shape[0]

    @pl.when(j == 0)
    def _():
        acc_ref[...] = jnp.zeros_like(acc_ref)

    @pl.when(j < tcnt_ref[k])
    def _():
        ntile = nblk_ref[k * pl.num_programs(1) + j]
        n_off = ntile * tn
        lane_ids = jax.lax.broadcasted_iota(jnp.int32, (te, tn), 1)
        mask = (lane_ids == (idx_ref[...] - n_off)).astype(jnp.bfloat16)
        acc_ref[...] += jnp.dot(mask, tbl_ref[...],
                                preferred_element_type=jnp.float32)

    @pl.when(j == pl.num_programs(1) - 1)
    def _():
        out_ref[...] = acc_ref[...]


def _gather_rows(idx_col, table, nblk, tcnt, max_tiles, *, grid_e, te, tn,
                 compiler_params):
    """out[e] = table[idx[e]] for a sorted (e_pad, 1) index column."""
    e_pad = idx_col.shape[0]
    n_pad, c = table.shape
    cost = pl.CostEstimate(
        flops=2 * grid_e * max_tiles * te * tn * c,
        transcendentals=0,
        bytes_accessed=grid_e * max_tiles * tn * c * 2 + e_pad * (4 + c * 4))

    def _tbl_map(k, j, nblk_ref, tcnt_ref):
        return (nblk_ref[k * max_tiles + j], 0)

    return pl.pallas_call(
        _gather_kernel,
        out_shape=jax.ShapeDtypeStruct((e_pad, c), jnp.float32),
        grid_spec=pltpu.PrefetchScalarGridSpec(
            num_scalar_prefetch=2,
            grid=(grid_e, max_tiles),
            in_specs=[
                pl.BlockSpec((te, 1), lambda k, j, *_: (k, 0)),
                pl.BlockSpec((tn, c), _tbl_map),
            ],
            out_specs=pl.BlockSpec((te, c), lambda k, j, *_: (k, 0)),
            scratch_shapes=[pltpu.VMEM((te, c), jnp.float32)],
        ),
        compiler_params=compiler_params,
        cost_estimate=cost,
    )(nblk, tcnt, idx_col, table)


# --------------------------------------------------------------------------- #
# Wrapper
# --------------------------------------------------------------------------- #
def sage_forward(src, dst, nfeats, efeats, w_apply, b_apply, w_edge, b_edge,
                 *, tn=1024, te=1024):
    """src/dst: (E,) int; nfeats: (N, ndim_in); efeats: (E, edim).
    w_apply: (ndim_in+edim, 128); b_apply: (1, 128); w_edge: (256, 256); b_edge: (1, 256)."""
    N, ndim_in = nfeats.shape
    E, edim = efeats.shape
    ndim_out = 128
    edge_out = 256
    f32, bf16 = jnp.float32, jnp.bfloat16

    tn = _pick_tile(N, tn)
    te = _pick_tile(E, te)
    n_pad = _round_up(N, tn)
    e_pad = _round_up(E, te)
    grid_n, grid_e = n_pad // tn, e_pad // te

    nfeats = nfeats.astype(f32)
    efeats = efeats.astype(f32)
    w_apply = jnp.asarray(w_apply, f32)
    w_edge = jnp.asarray(w_edge, f32)
    b_apply = jnp.asarray(b_apply, f32).reshape(1, ndim_out)
    b_edge = jnp.asarray(b_edge, f32).reshape(1, edge_out)

    # Lane-dense edge feature slab: [efeats | zeros | 1]; the trailing ones column
    # is the degree counter.  W_apply's edge half is zero-padded to match.
    ef_w = max(128, _round_up(edim + 1, 128))
    wa_n = w_apply[:ndim_in]                                           # (ndim_in, 128)
    wa_e_pad = jnp.zeros((ef_w, ndim_out), f32).at[:edim].set(w_apply[ndim_in:])
    we_u = w_edge[:ndim_out]                                           # (128, 256)
    we_v = w_edge[ndim_out:]                                           # (128, 256)

    # Pad nodes with zero features.  Padded edges use sentinel id n_pad: they sort
    # last and (n_pad - n_off) >= tn for every node tile, so they never match a
    # mask row/lane.  Padded node rows N..n_pad get h = relu(b_apply) != 0, which
    # is harmless because no real edge references an id >= N.
    nfeats_p = jnp.zeros((n_pad, ndim_in), f32).at[:N].set(nfeats)
    src_p = jnp.full((e_pad,), n_pad, jnp.int32).at[:E].set(src.astype(jnp.int32))
    dst_p = jnp.full((e_pad,), n_pad, jnp.int32).at[:E].set(dst.astype(jnp.int32))
    ef_aug = (jnp.zeros((e_pad, ef_w), f32)
              .at[:E, :edim].set(efeats)
              .at[:E, ef_w - 1].set(1.0))

    # ---- sort edges by dst; per-node-tile edge-tile ranges (kernel A skipping) ----
    perm_d = jnp.argsort(dst_p).astype(jnp.int32)
    dst_sd = jnp.take(dst_p, perm_d)
    ef_sd = jnp.take(ef_aug, perm_d, axis=0).astype(bf16)

    bounds = jnp.arange(grid_n + 1, dtype=jnp.int32) * tn
    pos = jnp.searchsorted(dst_sd, bounds).astype(jnp.int32)
    lo, hi = pos[:-1], pos[1:]
    has_a = hi > lo
    tlo_a = jnp.where(has_a, lo // te, 0).astype(jnp.int32)
    tcnt_a = jnp.where(has_a,
                       (jnp.maximum(hi, 1) - 1) // te - lo // te + 1,
                       0).astype(jnp.int32)
    max_a = _static_max(tcnt_a, grid_e)
    eblk_a = _blk_table(tlo_a, tcnt_a, max_a)

    compiler_params = pltpu.CompilerParams(
        dimension_semantics=("parallel", "arbitrary"),
        vmem_limit_bytes=32 * 1024 * 1024)

    cost_a = pl.CostEstimate(
        flops=2 * grid_n * max_a * tn * te * ndim_out
              + 2 * n_pad * (ndim_in + ef_w) * ndim_out
              + 4 * n_pad * ndim_out * edge_out,
        transcendentals=n_pad,
        bytes_accessed=grid_n * max_a * te * (ef_w * 2 + 4)
                       + n_pad * (ndim_in * 4 + ndim_out * 4 + 2 * edge_out * 2))

    def _dst_map(i, j, eblk, tcnt):
        return (0, eblk[i * max_a + j])

    def _ef_map(i, j, eblk, tcnt):
        return (eblk[i * max_a + j], 0)

    h_f32, hu_w, hv_w = pl.pallas_call(
        _node_kernel,
        out_shape=(jax.ShapeDtypeStruct((n_pad, ndim_out), f32),
                   jax.ShapeDtypeStruct((n_pad, edge_out), bf16),
                   jax.ShapeDtypeStruct((n_pad, edge_out), bf16)),
        grid_spec=pltpu.PrefetchScalarGridSpec(
            num_scalar_prefetch=2,
            grid=(grid_n, max_a),
            in_specs=[
                pl.BlockSpec((1, te), _dst_map),                          # dst row (sorted)
                pl.BlockSpec((te, ef_w), _ef_map),                        # [efeats|1] bf16
                pl.BlockSpec((tn, ndim_in), lambda i, j, *_: (i, 0)),     # nfeats
                pl.BlockSpec((ndim_in, ndim_out), lambda i, j, *_: (0, 0)),
                pl.BlockSpec((ef_w, ndim_out), lambda i, j, *_: (0, 0)),
                pl.BlockSpec((1, ndim_out), lambda i, j, *_: (0, 0)),
                pl.BlockSpec((ndim_out, edge_out), lambda i, j, *_: (0, 0)),
                pl.BlockSpec((ndim_out, edge_out), lambda i, j, *_: (0, 0)),
            ],
            out_specs=[
                pl.BlockSpec((tn, ndim_out), lambda i, j, *_: (i, 0)),
                pl.BlockSpec((tn, edge_out), lambda i, j, *_: (i, 0)),
                pl.BlockSpec((tn, edge_out), lambda i, j, *_: (i, 0)),
            ],
            scratch_shapes=[pltpu.VMEM((tn, ef_w), f32)],
        ),
        compiler_params=compiler_params,
        cost_estimate=cost_a,
    )(eblk_a, tcnt_a, dst_sd.reshape(1, e_pad), ef_sd, nfeats_p,
      wa_n, wa_e_pad, b_apply, we_u, we_v)

    # ---- edge stage: two tile-skipped row gathers (dst-sorted / src-sorted) ----
    def _edge_tile_ranges(idx_sorted):
        starts = jnp.arange(grid_e, dtype=jnp.int32) * te
        n_real = jnp.minimum(starts + te, E) - starts          # real edges per tile
        has = n_real > 0
        first = jnp.take(idx_sorted, starts)
        last = jnp.take(idx_sorted, jnp.maximum(starts + n_real - 1, 0))
        nlo = jnp.where(has, first // tn, 0).astype(jnp.int32)
        nhi = jnp.where(has, last // tn, 0).astype(jnp.int32)
        return nlo, jnp.where(has, nhi - nlo + 1, 0).astype(jnp.int32)

    tlo_v, tcnt_v = _edge_tile_ranges(dst_sd)
    max_v = _static_max(tcnt_v, grid_n)
    nblk_v = _blk_table(tlo_v, tcnt_v, max_v)

    perm_s = jnp.argsort(src_p).astype(jnp.int32)
    src_ss = jnp.take(src_p, perm_s)
    tlo_u, tcnt_u = _edge_tile_ranges(src_ss)
    max_u = _static_max(tcnt_u, grid_n)
    nblk_u = _blk_table(tlo_u, tcnt_u, max_u)

    outv_sd = _gather_rows(dst_sd.reshape(e_pad, 1), hv_w, nblk_v, tcnt_v, max_v,
                           grid_e=grid_e, te=te, tn=tn,
                           compiler_params=compiler_params)
    outu_ss = _gather_rows(src_ss.reshape(e_pad, 1), hu_w, nblk_u, tcnt_u, max_u,
                           grid_e=grid_e, te=te, tn=tn,
                           compiler_params=compiler_params)

    # Un-permute to the original edge order and combine (cheap XLA gathers + add).
    inv_d = jnp.argsort(perm_d).astype(jnp.int32)
    inv_s = jnp.argsort(perm_s).astype(jnp.int32)
    e_out = (jnp.take(outu_ss, inv_s[:E], axis=0)
             + jnp.take(outv_sd, inv_d[:E], axis=0)
             + b_edge)

    return h_f32[:N], e_out


# --------------------------------------------------------------------------- #
# Pure-JAX f32 reference mirroring the PyTorch/DGL semantics (mean aggregation)
# --------------------------------------------------------------------------- #
def _reference(src, dst, nfeats, efeats, w_apply, b_apply, w_edge, b_edge):
    N = nfeats.shape[0]
    edim = efeats.shape[1]
    msg_sum = jnp.zeros((N, edim), jnp.float32).at[dst].add(efeats)
    deg = jnp.zeros((N,), jnp.float32).at[dst].add(1.0)
    h_neigh = msg_sum / jnp.maximum(deg, 1.0)[:, None]
    h = jax.nn.relu(jnp.concatenate([nfeats, h_neigh], axis=1) @ w_apply + b_apply)
    e = jnp.concatenate([h[src], h[dst]], axis=1) @ w_edge + b_edge
    return h, e


if __name__ == "__main__":
    # SAGE(ndim_in=32, ndim_out=128, edim=32, relu, 'mean'); sizes chosen so that
    # both kernels run multi-tile grids with tile-skipping at small scale.
    N, E = 300, 700
    ndim_in, edim, ndim_out, edge_out = 32, 32, 128, 256

    key = jax.random.PRNGKey(0)
    k_src, k_dst, k_nf, k_ef, k_wa, k_ba, k_we, k_be = jax.random.split(key, 8)

    src = jax.random.randint(k_src, (E,), 0, N, dtype=jnp.int32)
    dst = jax.random.randint(k_dst, (E,), 0, N, dtype=jnp.int32)
    nfeats = jax.random.normal(k_nf, (N, ndim_in), jnp.float32)
    efeats = jax.random.normal(k_ef, (E, edim), jnp.float32)

    # W_apply: xavier_uniform with relu gain (as in reset_parameters); stored (in, out).
    gain = math.sqrt(2.0)
    fan_in_a, fan_out_a = ndim_in + edim, ndim_out
    lim_a = gain * math.sqrt(6.0 / (fan_in_a + fan_out_a))
    w_apply = jax.random.uniform(k_wa, (fan_in_a, fan_out_a), jnp.float32, -lim_a, lim_a)
    b_apply = jax.random.uniform(k_ba, (1, ndim_out), jnp.float32,
                                 -1.0 / math.sqrt(fan_in_a), 1.0 / math.sqrt(fan_in_a))
    # W_edge: Linear(256, 256), PyTorch-default-style uniform init; stored (in, out).
    lim_e = 1.0 / math.sqrt(2.0 * ndim_out)
    w_edge = jax.random.uniform(k_we, (2 * ndim_out, edge_out), jnp.float32, -lim_e, lim_e)
    b_edge = jax.random.uniform(k_be, (1, edge_out), jnp.float32, -lim_e, lim_e)

    h, e = sage_forward(src, dst, nfeats, efeats, w_apply, b_apply, w_edge, b_edge)
    jax.block_until_ready((h, e))

    h_ref, e_ref = _reference(src, dst, nfeats, efeats, w_apply, b_apply, w_edge, b_edge)
    assert h.shape == (N, ndim_out) and e.shape == (E, edge_out)
    # bf16 MXU operands (one-hot masks x bf16 efeats / bf16 h@W_edge tables) with f32
    # accumulation: agreement with the pure-f32 reference is at the ~1e-2 level.
    assert jnp.allclose(h, h_ref, rtol=5e-2, atol=5e-2), float(jnp.max(jnp.abs(h - h_ref)))
    assert jnp.allclose(e, e_ref, rtol=5e-2, atol=5e-2), float(jnp.max(jnp.abs(e - e_ref)))

    print("KERNEL_OK")
</pallas_src>

<mosaic_0001>
module attributes {stable_mosaic.version = 11 : i64} {
  func.func @_node_kernel(%arg0: i32, %arg1: i32, %arg2: memref<4xi32, #tpu.memory_space<smem>>, %arg3: memref<2xi32, #tpu.memory_space<smem>>, %arg4: memref<1x512xi32, #tpu.memory_space<vmem>>, %arg5: memref<512x128xbf16, #tpu.memory_space<vmem>>, %arg6: memref<256x32xf32, #tpu.memory_space<vmem>>, %arg7: memref<32x128xf32, #tpu.memory_space<vmem>>, %arg8: memref<128x128xf32, #tpu.memory_space<vmem>>, %arg9: memref<1x128xf32, #tpu.memory_space<vmem>>, %arg10: memref<128x256xf32, #tpu.memory_space<vmem>>, %arg11: memref<128x256xf32, #tpu.memory_space<vmem>>, %arg12: memref<256x128xf32, #tpu.memory_space<vmem>>, %arg13: memref<256x256xbf16, #tpu.memory_space<vmem>>, %arg14: memref<256x256xbf16, #tpu.memory_space<vmem>>, %arg15: memref<256x128xf32, #tpu.memory_space<vmem>>) attributes {dimension_semantics = [#tpu.dimension_semantics<parallel>, #tpu.dimension_semantics<arbitrary>], iteration_bounds = array<i64: 2, 2>, scalar_prefetch = 2 : i64, scratch_operands = 1 : i64, tpu.core_type = #tpu.core_type<tc>, window_params = [{transform_indices = @transform_0, window_bounds = array<i64: 1, 512>}, {transform_indices = @transform_1, window_bounds = array<i64: 512, 128>}, {transform_indices = @transform_2, window_bounds = array<i64: 256, 32>}, {pipeline_mode = #tpu.pipeline_mode<synchronous>, transform_indices = @transform_3, window_bounds = array<i64: 32, 128>}, {pipeline_mode = #tpu.pipeline_mode<synchronous>, transform_indices = @transform_4, window_bounds = array<i64: 128, 128>}, {pipeline_mode = #tpu.pipeline_mode<synchronous>, transform_indices = @transform_5, window_bounds = array<i64: 1, 128>}, {pipeline_mode = #tpu.pipeline_mode<synchronous>, transform_indices = @transform_6, window_bounds = array<i64: 128, 256>}, {pipeline_mode = #tpu.pipeline_mode<synchronous>, transform_indices = @transform_7, window_bounds = array<i64: 128, 256>}, {transform_indices = @transform_8, window_bounds = array<i64: 256, 128>}, {transform_indices = @transform_9, window_bounds = array<i64: 256, 256>}, {transform_indices = @transform_10, window_bounds = array<i64: 256, 256>}]} {
    %c0_i32 = arith.constant 0 : i32
    %0 = arith.cmpi eq, %arg1, %c0_i32 : i32
    %1 = arith.extui %0 : i1 to i32
    %c0_i32_0 = arith.constant 0 : i32
    %2 = arith.cmpi ne, %1, %c0_i32_0 : i32
    scf.if %2 {
      %cst = arith.constant 0.000000e+00 : f32
      %11 = vector.broadcast %cst : f32 to vector<256x128xf32>
      %c0 = arith.constant 0 : index
      %c0_3 = arith.constant 0 : index
      %12 = vector.load %arg15[%c0, %c0_3] : memref<256x128xf32, #tpu.memory_space<vmem>>, vector<256x128xf32>
      tpu.vector_store %arg15[%c0, %c0_3], %11 {strides = array<i32>} : memref<256x128xf32, #tpu.memory_space<vmem>>, vector<256x128xf32>,
    } else {
    }
    %3 = arith.index_cast %arg0 : i32 to index
    %4 = memref.load %arg3[%3] : memref<2xi32, #tpu.memory_space<smem>>
    %5 = arith.cmpi slt, %arg1, %4 : i32
    %6 = arith.extui %5 : i1 to i32
    %c0_i32_1 = arith.constant 0 : i32
    %7 = arith.cmpi ne, %6, %c0_i32_1 : i32
    scf.if %7 {
      %c256_i32 = arith.constant 256 : i32
      %11 = arith.muli %arg0, %c256_i32 : i32
      %12 = tpu.iota {dimensions = array<i32: 0>} : vector<256x512xi32>
      %c0 = arith.constant 0 : index
      %c0_3 = arith.constant 0 : index
      %13 = vector.load %arg4[%c0, %c0_3] : memref<1x512xi32, #tpu.memory_space<vmem>>, vector<1x512xi32>
      %14 = vector.broadcast %11 : i32 to vector<1x512xi32>
      %15 = arith.subi %13, %14 : vector<1x512xi32>
      %16 = vector.broadcast %15 : vector<1x512xi32> to vector<256x512xi32>
      %17 = arith.cmpi eq, %12, %16 : vector<256x512xi32>
      %18 = arith.extui %17 : vector<256x512xi1> to vector<256x512xi32>
      %19 = arith.sitofp %18 : vector<256x512xi32> to vector<256x512xf32>
      %20 = arith.truncf %19 : vector<256x512xf32> to vector<256x512xbf16>
      %c0_4 = arith.constant 0 : index
      %c0_5 = arith.constant 0 : index
      %21 = vector.load %arg15[%c0_4, %c0_5] : memref<256x128xf32, #tpu.memory_space<vmem>>, vector<256x128xf32>
      %c0_6 = arith.constant 0 : index
      %c0_7 = arith.constant 0 : index
      %22 = vector.load %arg5[%c0_6, %c0_7] : memref<512x128xbf16, #tpu.memory_space<vmem>>, vector<512x128xbf16>
      %cst = arith.constant dense<0.000000e+00> : vector<256x128xf32>
      %23 = tpu.matmul %20, %22, %cst {dimension_numbers = #tpu.dot_dimension_numbers<[1], [0], [0], [1], [0, 0, 1, 1], [], []>} : vector<256x512xbf16>, vector<512x128xbf16>, vector<256x128xf32> -> vector<256x128xf32>
      %24 = arith.addf %21, %23 : vector<256x128xf32>
      %c0_8 = arith.constant 0 : index
      %c0_9 = arith.constant 0 : index
      %25 = vector.load %arg15[%c0_8, %c0_9] : memref<256x128xf32, #tpu.memory_space<vmem>>, vector<256x128xf32>
      tpu.vector_store %arg15[%c0_8, %c0_9], %24 {strides = array<i32>} : memref<256x128xf32, #tpu.memory_space<vmem>>, vector<256x128xf32>,
    } else {
    }
    %c1_i32 = arith.constant 1 : i32
    %8 = arith.cmpi eq, %arg1, %c1_i32 : i32
    %9 = arith.extui %8 : i1 to i32
    %c0_i32_2 = arith.constant 0 : i32
    %10 = arith.cmpi ne, %9, %c0_i32_2 : i32
    scf.if %10 {
      %c0 = arith.constant 0 : index
      %c0_3 = arith.constant 0 : index
      %11 = vector.load %arg15[%c0, %c0_3] : memref<256x128xf32, #tpu.memory_space<vmem>>, vector<256x128xf32>
      %12 = vector.extract_strided_slice %11 {offsets = [0, 127], sizes = [256, 1], strides = [1, 1]} : vector<256x128xf32> to vector<256x1xf32>
      %cst = arith.constant 1.000000e+00 : f32
      %13 = vector.broadcast %cst : f32 to vector<256x1xf32>
      %14 = arith.maximumf %12, %13 : vector<256x1xf32>
      %15 = tpu.reciprocal %14 {approx = true} : vector<256x1xf32> -> vector<256x1xf32>
      %16 = vector.broadcast %15 : vector<256x1xf32> to vector<256x128xf32>
      %17 = arith.mulf %11, %16 : vector<256x128xf32>
      %c0_4 = arith.constant 0 : index
      %c0_5 = arith.constant 0 : index
      %18 = vector.load %arg6[%c0_4, %c0_5] : memref<256x32xf32, #tpu.memory_space<vmem>>, vector<256x32xf32>
      %c0_6 = arith.constant 0 : index
      %c0_7 = arith.constant 0 : index
      %19 = vector.load %arg7[%c0_6, %c0_7] : memref<32x128xf32, #tpu.memory_space<vmem>>, vector<32x128xf32>
      %cst_8 = arith.constant dense<0.000000e+00> : vector<256x128xf32>
      %20 = tpu.matmul %18, %19, %cst_8 {dimension_numbers = #tpu.dot_dimension_numbers<[1], [0], [0], [1], [0, 0, 1, 1], [], []>} : vector<256x32xf32>, vector<32x128xf32>, vector<256x128xf32> -> vector<256x128xf32>
      %c0_9 = arith.constant 0 : index
      %c0_10 = arith.constant 0 : index
      %21 = vector.load %arg8[%c0_9, %c0_10] : memref<128x128xf32, #tpu.memory_space<vmem>>, vector<128x128xf32>
      %cst_11 = arith.constant dense<0.000000e+00> : vector<256x128xf32>
      %22 = tpu.matmul %17, %21, %cst_11 {dimension_numbers = #tpu.dot_dimension_numbers<[1], [0], [0], [1], [0, 0, 1, 1], [], []>} : vector<256x128xf32>, vector<128x128xf32>, vector<256x128xf32> -> vector<256x128xf32>
      %23 = arith.addf %20, %22 : vector<256x128xf32>
      %c0_12 = arith.constant 0 : index
      %c0_13 = arith.constant 0 : index
      %24 = vector.load %arg9[%c0_12, %c0_13] : memref<1x128xf32, #tpu.memory_space<vmem>>, vector<1x128xf32>
      %25 = vector.broadcast %24 : vector<1x128xf32> to vector<256x128xf32>
      %26 = arith.addf %23, %25 : vector<256x128xf32>
      %cst_14 = arith.constant 0.000000e+00 : f32
      %27 = vector.broadcast %cst_14 : f32 to vector<256x128xf32>
      %28 = arith.maximumf %26, %27 : vector<256x128xf32>
      %c0_15 = arith.constant 0 : index
      %c0_16 = arith.constant 0 : index
      %29 = vector.load %arg12[%c0_15, %c0_16] : memref<256x128xf32, #tpu.memory_space<vmem>>, vector<256x128xf32>
      tpu.vector_store %arg12[%c0_15, %c0_16], %28 {strides = array<i32>} : memref<256x128xf32, #tpu.memory_space<vmem>>, vector<256x128xf32>,
      %c0_17 = arith.constant 0 : index
      %c0_18 = arith.constant 0 : index
      %30 = vector.load %arg10[%c0_17, %c0_18] : memref<128x256xf32, #tpu.memory_space<vmem>>, vector<128x256xf32>
      %cst_19 = arith.constant dense<0.000000e+00> : vector<256x256xf32>
      %31 = tpu.matmul %28, %30, %cst_19 {dimension_numbers = #tpu.dot_dimension_numbers<[1], [0], [0], [1], [0, 0, 1, 1], [], []>} : vector<256x128xf32>, vector<128x256xf32>, vector<256x256xf32> -> vector<256x256xf32>
      %32 = arith.truncf %31 : vector<256x256xf32> to vector<256x256xbf16>
      %c0_20 = arith.constant 0 : index
      %c0_21 = arith.constant 0 : index
      %33 = vector.load %arg13[%c0_20, %c0_21] : memref<256x256xbf16, #tpu.memory_space<vmem>>, vector<256x256xbf16>
      tpu.vector_store %arg13[%c0_20, %c0_21], %32 {strides = array<i32>} : memref<256x256xbf16, #tpu.memory_space<vmem>>, vector<256x256xbf16>,
      %c0_22 = arith.constant 0 : index
      %c0_23 = arith.constant 0 : index
      %34 = vector.load %arg11[%c0_22, %c0_23] : memref<128x256xf32, #tpu.memory_space<vmem>>, vector<128x256xf32>
      %cst_24 = arith.constant dense<0.000000e+00> : vector<256x256xf32>
      %35 = tpu.matmul %28, %34, %cst_24 {dimension_numbers = #tpu.dot_dimension_numbers<[1], [0], [0], [1], [0, 0, 1, 1], [], []>} : vector<256x128xf32>, vector<128x256xf32>, vector<256x256xf32> -> vector<256x256xf32>
      %36 = arith.truncf %35 : vector<256x256xf32> to vector<256x256xbf16>
      %c0_25 = arith.constant 0 : index
      %c0_26 = arith.constant 0 : index
      %37 = vector.load %arg14[%c0_25, %c0_26] : memref<256x256xbf16, #tpu.memory_space<vmem>>, vector<256x256xbf16>
      tpu.vector_store %arg14[%c0_25, %c0_26], %36 {strides = array<i32>} : memref<256x256xbf16, #tpu.memory_space<vmem>>, vector<256x256xbf16>,
    } else {
    }
    return
  }
  func.func @transform_0(%arg0: i32, %arg1: i32, %arg2: memref<4xi32, #tpu.memory_space<smem>>, %arg3: memref<2xi32, #tpu.memory_space<smem>>) -> (i32, i32) {
    %c2_i32 = arith.constant 2 : i32
    %0 = arith.muli %arg0, %c2_i32 : i32
    %1 = arith.addi %0, %arg1 : i32
    %2 = arith.index_cast %1 : i32 to index
    %3 = memref.load %arg2[%2] : memref<4xi32, #tpu.memory_space<smem>>
    %c0_i32 = arith.constant 0 : i32
    %c0_i32_0 = arith.constant 0 : i32
    return %c0_i32, %3 : i32, i32
  }
  func.func @transform_1(%arg0: i32, %arg1: i32, %arg2: memref<4xi32, #tpu.memory_space<smem>>, %arg3: memref<2xi32, #tpu.memory_space<smem>>) -> (i32, i32) {
    %c2_i32 = arith.constant 2 : i32
    %0 = arith.muli %arg0, %c2_i32 : i32
    %1 = arith.addi %0, %arg1 : i32
    %2 = arith.index_cast %1 : i32 to index
    %3 = memref.load %arg2[%2] : memref<4xi32, #tpu.memory_space<smem>>
    %c0_i32 = arith.constant 0 : i32
    %c0_i32_0 = arith.constant 0 : i32
    return %3, %c0_i32 : i32, i32
  }
  func.func @transform_2(%arg0: i32, %arg1: i32, %arg2: memref<4xi32, #tpu.memory_space<smem>>, %arg3: memref<2xi32, #tpu.memory_space<smem>>) -> (i32, i32) {
    %c0_i32 = arith.constant 0 : i32
    %c0_i32_0 = arith.constant 0 : i32
    return %arg0, %c0_i32 : i32, i32
  }
  func.func @transform_3(%arg0: i32, %arg1: i32, %arg2: memref<4xi32, #tpu.memory_space<smem>>, %arg3: memref<2xi32, #tpu.memory_space<smem>>) -> (i32, i32) {
    %c0_i32 = arith.constant 0 : i32
    %c0_i32_0 = arith.constant 0 : i32
    %c0_i32_1 = arith.constant 0 : i32
    return %c0_i32, %c0_i32_0 : i32, i32
  }
  func.func @transform_4(%arg0: i32, %arg1: i32, %arg2: memref<4xi32, #tpu.memory_space<smem>>, %arg3: memref<2xi32, #tpu.memory_space<smem>>) -> (i32, i32) {
    %c0_i32 = arith.constant 0 : i32
    %c0_i32_0 = arith.constant 0 : i32
    %c0_i32_1 = arith.constant 0 : i32
    return %c0_i32, %c0_i32_0 : i32, i32
  }
  func.func @transform_5(%arg0: i32, %arg1: i32, %arg2: memref<4xi32, #tpu.memory_space<smem>>, %arg3: memref<2xi32, #tpu.memory_space<smem>>) -> (i32, i32) {
    %c0_i32 = arith.constant 0 : i32
    %c0_i32_0 = arith.constant 0 : i32
    %c0_i32_1 = arith.constant 0 : i32
    return %c0_i32, %c0_i32_0 : i32, i32
  }
  func.func @transform_6(%arg0: i32, %arg1: i32, %arg2: memref<4xi32, #tpu.memory_space<smem>>, %arg3: memref<2xi32, #tpu.memory_space<smem>>) -> (i32, i32) {
    %c0_i32 = arith.constant 0 : i32
    %c0_i32_0 = arith.constant 0 : i32
    %c0_i32_1 = arith.constant 0 : i32
    return %c0_i32, %c0_i32_0 : i32, i32
  }
  func.func @transform_7(%arg0: i32, %arg1: i32, %arg2: memref<4xi32, #tpu.memory_space<smem>>, %arg3: memref<2xi32, #tpu.memory_space<smem>>) -> (i32, i32) {
    %c0_i32 = arith.constant 0 : i32
    %c0_i32_0 = arith.constant 0 : i32
    %c0_i32_1 = arith.constant 0 : i32
    return %c0_i32, %c0_i32_0 : i32, i32
  }
  func.func @transform_8(%arg0: i32, %arg1: i32, %arg2: memref<4xi32, #tpu.memory_space<smem>>, %arg3: memref<2xi32, #tpu.memory_space<smem>>) -> (i32, i32) {
    %c0_i32 = arith.constant 0 : i32
    %c0_i32_0 = arith.constant 0 : i32
    return %arg0, %c0_i32 : i32, i32
  }
  func.func @transform_9(%arg0: i32, %arg1: i32, %arg2: memref<4xi32, #tpu.memory_space<smem>>, %arg3: memref<2xi32, #tpu.memory_space<smem>>) -> (i32, i32) {
    %c0_i32 = arith.constant 0 : i32
    %c0_i32_0 = arith.constant 0 : i32
    return %arg0, %c0_i32 : i32, i32
  }
  func.func @transform_10(%arg0: i32, %arg1: i32, %arg2: memref<4xi32, #tpu.memory_space<smem>>, %arg3: memref<2xi32, #tpu.memory_space<smem>>) -> (i32, i32) {
    %c0_i32 = arith.constant 0 : i32
    %c0_i32_0 = arith.constant 0 : i32
    return %arg0, %c0_i32 : i32, i32
  }
}

</mosaic_0001>

<llo_original>
// kernel: tpu_custom_call.1
$region0: #{tpu_custom_call.1}
  #allocation0 [shape = 'u32[]', space=smem, size = 0x4, offset = 0x4, fixed_abs, tag = 'smem constant byte address 0x4 - core index']
  #allocation1 [shape = 'u32[144,128]{1,0:T(1,128)}', space=vmem, size = 0x12000, scoped, tag = 'internal scratch']
  #allocation2 [shape = 'f32[256,128]{1,0:T(8,128)}', space=vmem, size = 0x20000, scoped, tag = 'scratch operand']
  #allocation3 [shape = 's32[1]{0}', space=sflag, size = 0x4, scoped, tag = 'scoped memory for tpu_custom_call.1']
  #allocation4 [shape = 'u8[512]{0}', space=smem, size = 0x200, scoped, tag = 'prefetched SMEM operand 0']
  #allocation5 [shape = 'u8[512]{0}', space=smem, size = 0x200, scoped, tag = 'prefetched SMEM operand 1']
  %s0 = inlined_call_operand.vmem [shape: s32[4], index: 0, kind: input, shape index: {}]
  %s1 = inlined_call_operand.vmem [shape: s32[2], index: 1, kind: input, shape index: {}]
  %s2 = inlined_call_operand.vmem [shape: s32[1,1024], index: 2, kind: input, shape index: {}]
  %s3 = inlined_call_operand.vmem [shape: bf16[1024,128], index: 3, kind: input, shape index: {}]
  %s4 = inlined_call_operand.vmem [shape: f32[512,32], index: 4, kind: input, shape index: {}]
  %s5 = inlined_call_operand.hbm [shape: f32[32,128], index: 5, kind: input, shape index: {}]
  %s6 = inlined_call_operand.vmem [shape: f32[128,128], index: 6, kind: input, shape index: {}]
  %s7 = inlined_call_operand.vmem [shape: f32[1,128], index: 7, kind: input, shape index: {}]
  %s8 = inlined_call_operand.hbm [shape: f32[128,256], index: 8, kind: input, shape index: {}]
  %s9 = inlined_call_operand.hbm [shape: f32[128,256], index: 9, kind: input, shape index: {}]
  %s10 = inlined_call_operand.hbm [shape: f32[512,128], index: 10, kind: output, shape index: {0}]
  %s11 = inlined_call_operand.hbm [shape: bf16[512,256], index: 11, kind: output, shape index: {1}]
  %s12 = inlined_call_operand.hbm [shape: bf16[512,256], index: 12, kind: output, shape index: {2}]
  %13 = xla_tuple %s10, %s11, %s12
  %s14 = sld [smem:[#allocation0]]
  $region105: #{tpu_custom_call.1} parent=0
    _
  %s16 = ssub.s32 1, %s14
  %s17 = scalar_select 0, %s16, %s14
  %s18 = sshll.u32 %s0, 4
  %s19 = int_to_ptr.vmem [resolvable:$true] %s18
  %21 = dma.vmem_to_smem %s19, 16, [#allocation4], [#allocation3]
  %s22 = sshll.u32 %s1, 4
  %s23 = int_to_ptr.vmem [resolvable:$true] %s22
  %25 = dma.vmem_to_smem %s23, 16, [#allocation5], [#allocation3]
  %26 = dma.done [#allocation3], 32
  %27 = sfence
  $region1: #{tpu_custom_call.1} parent=0
    #allocation6 [shape = 'u8[16384]{0}', space=vmem, size = 0x4000, scoped, tag = 'input window, operand 5, single buffered']
    #allocation7 [shape = 's32[2]{0}', space=sflag, size = 0x8, scoped, tag = 'scoped memory for tpu_custom_call.1']
    #allocation8 [shape = 's32[2]{0}', space=sflag, size = 0x8, scoped, tag = 'scoped memory for tpu_custom_call.1']
    #allocation9 [shape = 'u8[131072]{0}', space=vmem, size = 0x20000, scoped, tag = 'input window, operand 8, single buffered']
    #allocation10 [shape = 's32[1]{0}', space=sflag, size = 0x4, scoped, tag = 'scoped memory for tpu_custom_call.1']
    #allocation11 [shape = 'u8[131072]{0}', space=vmem, size = 0x20000, scoped, tag = 'input window, operand 9, single buffered']
    #allocation12 [shape = 'u8[262144]{0}', space=vmem, size = 0x40000, scoped, tag = 'output window, operand 0']
    #allocation13 [shape = 'u8[262144]{0}', space=vmem, size = 0x40000, scoped, tag = 'output window, operand 1']
    #allocation14 [shape = 's32[2]{0}', space=sflag, size = 0x8, scoped, tag = 'scoped memory for tpu_custom_call.1']
    #allocation15 [shape = 'u8[262144]{0}', space=vmem, size = 0x40000, scoped, tag = 'output window, operand 2']
    %28 = vsyncpa [#allocation7], 0
    %29 = vsyncpa [#allocation10], 0
    %30 = vsyncpa [#allocation8], 0
    %s31 = scalar_lea.sflag [#allocation8], 1
    %32 = vsyncpa %s31, 0
    %33 = vsyncpa [#allocation14], 0
    %s34 = scalar_lea.sflag [#allocation14], 1
    %35 = vsyncpa %s34, 0
    loop: start=0, step=1, limit=6
    $region2: #{tpu_custom_call.1} parent=1 // loop_pre_header
      _
    $region3: #{tpu_custom_call.1} parent=1 // loop_header
      %s37 = sphi 0, %s41
      %p38 = scmp.ge.s32.totalorder %s37, 6
      %s44 = sphi 0, %s56
      %s45 = sphi 0, %s52
      %s46 = sphi 0, %s44
      %s47 = sphi 0, %s45
      %s48 = sphi 0, %s46
      %s49 = sphi 0, %s47
      %s65 = sphi 0, %s67
      %s68 = sphi 0, %s65
      %s69 = sphi 0, %s68
      %s85 = sphi 0, %s69
      %s97 = sphi 0, %s99
      %s100 = sphi 0, %s97
      %s101 = sphi 0, %s100
      %s117 = sphi 0, %s101
      %s123 = sphi 0, %s125
      %s126 = sphi 0, %s123
      %s127 = sphi 0, %s126
      %s143 = sphi 0, %s127
      %s147 = sphi 0, %s147
      %s149 = sphi 0, %s147
      %s150 = sphi 0, %s149
      %s164 = sphi 0, %s150
      %s168 = sphi 0, %s168
      %s170 = sphi 0, %s168
      %s171 = sphi 0, %s170
      %s185 = sphi 0, %s171
      %s189 = sphi 0, %s189
      %s191 = sphi 0, %s189
      %s192 = sphi 0, %s191
      %s206 = sphi 0, %s192
      %s210 = sphi 0, %s210
      %s212 = sphi 0, %s210
      %s213 = sphi 0, %s212
      %s227 = sphi 0, %s213
      %s231 = sphi 0, %s231
      %s233 = sphi 0, %s231
      %s234 = sphi 0, %s233
      %s248 = sphi 0, %s234
      %s254 = sphi 0, %s256
      %s257 = sphi 0, %s254
      %s258 = sphi 0, %s257
      %s274 = sphi 0, %s258
      %s280 = sphi 0, %s282
      %s283 = sphi 0, %s280
      %s284 = sphi 0, %s283
      %s300 = sphi 0, %s284
      %s306 = sphi 0, %s308
      %s309 = sphi 0, %s306
      %s310 = sphi 0, %s309
      %s326 = sphi 0, %s310
    $region4: #{tpu_custom_call.1} parent=1 // loop_header_branch
      %40 = sbr.rel (%p38) target = $region8
    $region5: #{tpu_custom_call.1} parent=1 // loop_body
      %s42 = ssub.s32 %s37, 1
      %s43 = ssub.s32 %s37, 2
      %s50 = sadd.s32 1, %s45
      %p51 = scmp.ge.s32.totalorder %s50, 2
      %s52 = scalar_select %p51, 0, %s50
      %s53 = sadd.s32 1, %s44
      %s54 = scalar_select %p51, %s53, %s44
      %p55 = scmp.ge.s32.totalorder %s54, 2
      %s56 = scalar_select %p55, 0, %s54
      %s57 = smul.u32 %s44, 2
      %s58 = sadd.s32 %s57, %s45
      %s59 = sld [smem:[#allocation4 + %s58]]
      %s60 = smul.u32 %s56, 2
      %s61 = sadd.s32 %s60, %s52
      %s62 = sld [smem:[#allocation4 + %s61]]
      %s63 = ssub.s32 %s59, %s62
      %p64 = scmp.eq.s32.totalorder %s63, 0
      %s66 = sadd.s32 %s65, 1
      %s67 = scalar_select %p64, %s65, %s66
      %p70 = pneg %p64
      %p71 = scmp.eq.s32.totalorder %s37, 3
      %p72 = por %p70, %p71
      %p73 = scmp.ne.s32.totalorder %s65, %s68
      %p74 = scmp.eq.s32.totalorder %s37, 0
      %p75 = por %p73, %p74
      %p76 = scmp.ne.s32.totalorder %s65, %s68
      %p77 = scmp.eq.s32.totalorder %s42, 3
      %p78 = por %p76, %p77
      %p79 = scmp.ne.s32.totalorder %s68, %s69
      %p80 = scmp.eq.s32.totalorder %s42, 0
      %p81 = por %p79, %p80
      %p82 = scmp.ne.s32.totalorder %s68, %s69
      %p83 = scmp.eq.s32.totalorder %s43, 3
      %p84 = por %p82, %p83
      %p86 = scmp.ne.s32.totalorder %s69, %s85
      %p87 = scmp.eq.s32.totalorder %s43, 0
      %p88 = por %p86, %p87
      %s89 = smul.u32 %s44, 2
      %s90 = sadd.s32 %s89, %s45
      %s91 = sld [smem:[#allocation4 + %s90]]
      %s92 = smul.u32 %s56, 2
      %s93 = sadd.s32 %s92, %s52
      %s94 = sld [smem:[#allocation4 + %s93]]
      %s95 = ssub.s32 %s91, %s94
      %p96 = scmp.eq.s32.totalorder %s95, 0
      %s98 = sadd.s32 %s97, 1
      %s99 = scalar_select %p96, %s97, %s98
      %p102 = pneg %p96
      %p103 = scmp.eq.s32.totalorder %s37, 3
      %p104 = por %p102, %p103
      %p105 = scmp.ne.s32.totalorder %s97, %s100
      %p106 = scmp.eq.s32.totalorder %s37, 0
      %p107 = por %p105, %p106
      %p108 = scmp.ne.s32.totalorder %s97, %s100
      %p109 = scmp.eq.s32.totalorder %s42, 3
      %p110 = por %p108, %p109
      %p111 = scmp.ne.s32.totalorder %s100, %s101
      %p112 = scmp.eq.s32.totalorder %s42, 0
      %p113 = por %p111, %p112
      %p114 = scmp.ne.s32.totalorder %s100, %s101
      %p115 = scmp.eq.s32.totalorder %s43, 3
      %p116 = por %p114, %p115
      %p118 = scmp.ne.s32.totalorder %s101, %s117
      %p119 = scmp.eq.s32.totalorder %s43, 0
      %p120 = por %p118, %p119
      %s121 = ssub.s32 %s44, %s56
      %p122 = scmp.eq.s32.totalorder %s121, 0
      %s124 = sadd.s32 %s123, 1
      %s125 = scalar_select %p122, %s123, %s124
      %p128 = pneg %p122
      %p129 = scmp.eq.s32.totalorder %s37, 3
      %p130 = por %p128, %p129
      %p131 = scmp.ne.s32.totalorder %s123, %s126
      %p132 = scmp.eq.s32.totalorder %s37, 0
      %p133 = por %p131, %p132
      %p134 = scmp.ne.s32.totalorder %s123, %s126
      %p135 = scmp.eq.s32.totalorder %s42, 3
      %p136 = por %p134, %p135
      %p137 = scmp.ne.s32.totalorder %s126, %s127
      %p138 = scmp.eq.s32.totalorder %s42, 0
      %p139 = por %p137, %p138
      %p140 = scmp.ne.s32.totalorder %s126, %s127
      %p141 = scmp.eq.s32.totalorder %s43, 3
      %p142 = por %p140, %p141
      %p144 = scmp.ne.s32.totalorder %s127, %s143
      %p145 = scmp.eq.s32.totalorder %s43, 0
      %p146 = por %p144, %p145
      %s148 = sadd.s32 %s147, 1
      %p151 = scmp.eq.s32.totalorder %s37, 3
      %p152 = scmp.ne.s32.totalorder %s147, %s149
      %p153 = scmp.eq.s32.totalorder %s37, 0
      %p154 = por %p152, %p153
      %p155 = scmp.ne.s32.totalorder %s147, %s149
      %p156 = scmp.eq.s32.totalorder %s42, 3
      %p157 = por %p155, %p156
      %p158 = scmp.ne.s32.totalorder %s149, %s150
      %p159 = scmp.eq.s32.totalorder %s42, 0
      %p160 = por %p158, %p159
      %p161 = scmp.ne.s32.totalorder %s149, %s150
      %p162 = scmp.eq.s32.totalorder %s43, 3
      %p163 = por %p161, %p162
      %p165 = scmp.ne.s32.totalorder %s150, %s164
      %p166 = scmp.eq.s32.totalorder %s43, 0
      %p167 = por %p165, %p166
      %s169 = sadd.s32 %s168, 1
      %p172 = scmp.eq.s32.totalorder %s37, 3
      %p173 = scmp.ne.s32.totalorder %s168, %s170
      %p174 = scmp.eq.s32.totalorder %s37, 0
      %p175 = por %p173, %p174
      %p176 = scmp.ne.s32.totalorder %s168, %s170
      %p177 = scmp.eq.s32.totalorder %s42, 3
      %p178 = por %p176, %p177
      %p179 = scmp.ne.s32.totalorder %s170, %s171
      %p180 = scmp.eq.s32.totalorder %s42, 0
      %p181 = por %p179, %p180
      %p182 = scmp.ne.s32.totalorder %s170, %s171
      %p183 = scmp.eq.s32.totalorder %s43, 3
      %p184 = por %p182, %p183
      %p186 = scmp.ne.s32.totalorder %s171, %s185
      %p187 = scmp.eq.s32.totalorder %s43, 0
      %p188 = por %p186, %p187
      %s190 = sadd.s32 %s189, 1
      %p193 = scmp.eq.s32.totalorder %s37, 3
      %p194 = scmp.ne.s32.totalorder %s189, %s191
      %p195 = scmp.eq.s32.totalorder %s37, 0
      %p196 = por %p194, %p195
      %p197 = scmp.ne.s32.totalorder %s189, %s191
      %p198 = scmp.eq.s32.totalorder %s42, 3
      %p199 = por %p197, %p198
      %p200 = scmp.ne.s32.totalorder %s191, %s192
      %p201 = scmp.eq.s32.totalorder %s42, 0
      %p202 = por %p200, %p201
      %p203 = scmp.ne.s32.totalorder %s191, %s192
      %p204 = scmp.eq.s32.totalorder %s43, 3
      %p205 = por %p203, %p204
      %p207 = scmp.ne.s32.totalorder %s192, %s206
      %p208 = scmp.eq.s32.totalorder %s43, 0
      %p209 = por %p207, %p208
      %s211 = sadd.s32 %s210, 1
      %p214 = scmp.eq.s32.totalorder %s37, 3
      %p215 = scmp.ne.s32.totalorder %s210, %s212
      %p216 = scmp.eq.s32.totalorder %s37, 0
      %p217 = por %p215, %p216
      %p218 = scmp.ne.s32.totalorder %s210, %s212
      %p219 = scmp.eq.s32.totalorder %s42, 3
      %p220 = por %p218, %p219
      %p221 = scmp.ne.s32.totalorder %s212, %s213
      %p222 = scmp.eq.s32.totalorder %s42, 0
      %p223 = por %p221, %p222
      %p224 = scmp.ne.s32.totalorder %s212, %s213
      %p225 = scmp.eq.s32.totalorder %s43, 3
      %p226 = por %p224, %p225
      %p228 = scmp.ne.s32.totalorder %s213, %s227
      %p229 = scmp.eq.s32.totalorder %s43, 0
      %p230 = por %p228, %p229
      %s232 = sadd.s32 %s231, 1
      %p235 = scmp.eq.s32.totalorder %s37, 3
      %p236 = scmp.ne.s32.totalorder %s231, %s233
      %p237 = scmp.eq.s32.totalorder %s37, 0
      %p238 = por %p236, %p237
      %p239 = scmp.ne.s32.totalorder %s231, %s233
      %p240 = scmp.eq.s32.totalorder %s42, 3
      %p241 = por %p239, %p240
      %p242 = scmp.ne.s32.totalorder %s233, %s234
      %p243 = scmp.eq.s32.totalorder %s42, 0
      %p244 = por %p242, %p243
      %p245 = scmp.ne.s32.totalorder %s233, %s234
      %p246 = scmp.eq.s32.totalorder %s43, 3
      %p247 = por %p245, %p246
      %p249 = scmp.ne.s32.totalorder %s234, %s248
      %p250 = scmp.eq.s32.totalorder %s43, 0
      %p251 = por %p249, %p250
      %s252 = ssub.s32 %s44, %s56
      %p253 = scmp.eq.s32.totalorder %s252, 0
      %s255 = sadd.s32 %s254, 1
      %s256 = scalar_select %p253, %s254, %s255
      %p259 = pneg %p253
      %p260 = scmp.eq.s32.totalorder %s37, 3
      %p261 = por %p259, %p260
      %p262 = scmp.ne.s32.totalorder %s254, %s257
      %p263 = scmp.eq.s32.totalorder %s37, 0
      %p264 = por %p262, %p263
      %p265 = scmp.ne.s32.totalorder %s254, %s257
      %p266 = scmp.eq.s32.totalorder %s42, 3
      %p267 = por %p265, %p266
      %p268 = scmp.ne.s32.totalorder %s257, %s258
      %p269 = scmp.eq.s32.totalorder %s42, 0
      %p270 = por %p268, %p269
      %p271 = scmp.ne.s32.totalorder %s257, %s258
      %p272 = scmp.eq.s32.totalorder %s43, 3
      %p273 = por %p271, %p272
      %p275 = scmp.ne.s32.totalorder %s258, %s274
      %p276 = scmp.eq.s32.totalorder %s43, 0
      %p277 = por %p275, %p276
      %s278 = ssub.s32 %s44, %s56
      %p279 = scmp.eq.s32.totalorder %s278, 0
      %s281 = sadd.s32 %s280, 1
      %s282 = scalar_select %p279, %s280, %s281
      %p285 = pneg %p279
      %p286 = scmp.eq.s32.totalorder %s37, 3
      %p287 = por %p285, %p286
      %p288 = scmp.ne.s32.totalorder %s280, %s283
      %p289 = scmp.eq.s32.totalorder %s37, 0
      %p290 = por %p288, %p289
      %p291 = scmp.ne.s32.totalorder %s280, %s283
      %p292 = scmp.eq.s32.totalorder %s42, 3
      %p293 = por %p291, %p292
      %p294 = scmp.ne.s32.totalorder %s283, %s284
      %p295 = scmp.eq.s32.totalorder %s42, 0
      %p296 = por %p294, %p295
      %p297 = scmp.ne.s32.totalorder %s283, %s284
      %p298 = scmp.eq.s32.totalorder %s43, 3
      %p299 = por %p297, %p298
      %p301 = scmp.ne.s32.totalorder %s284, %s300
      %p302 = scmp.eq.s32.totalorder %s43, 0
      %p303 = por %p301, %p302
      %s304 = ssub.s32 %s44, %s56
      %p305 = scmp.eq.s32.totalorder %s304, 0
      %s307 = sadd.s32 %s306, 1
      %s308 = scalar_select %p305, %s306, %s307
      %p311 = pneg %p305
      %p312 = scmp.eq.s32.totalorder %s37, 3
      %p313 = por %p311, %p312
      %p314 = scmp.ne.s32.totalorder %s306, %s309
      %p315 = scmp.eq.s32.totalorder %s37, 0
      %p316 = por %p314, %p315
      %p317 = scmp.ne.s32.totalorder %s306, %s309
      %p318 = scmp.eq.s32.totalorder %s42, 3
      %p319 = por %p317, %p318
      %p320 = scmp.ne.s32.totalorder %s309, %s310
      %p321 = scmp.eq.s32.totalorder %s42, 0
      %p322 = por %p320, %p321
      %p323 = scmp.ne.s32.totalorder %s309, %s310
      %p324 = scmp.eq.s32.totalorder %s43, 3
      %p325 = por %p323, %p324
      %p327 = scmp.ne.s32.totalorder %s310, %s326
      %p328 = scmp.eq.s32.totalorder %s43, 0
      %p329 = por %p327, %p328
      %p330 = scmp.le.s32.totalorder 1, %s37
      %p331 = scmp.lt.s32.totalorder %s37, 5
      %p332 = pnand %p330, %p331
      %p333 = pneg %p332
      // Predicated region
      $region9: #{tpu_custom_call.1} parent=5 // pred_check
        _
      $region10: #{tpu_custom_call.1} parent=5 // pred_check_branch
        %335 = sbr.rel (%p332) target = $region12
      $region11: #{tpu_custom_call.1} parent=5 // pred_region
        %s336 = ssub.s32 %s37, 1
        // Predicated region
        $region13: #{tpu_custom_call.1} parent=11 // pred_check
          %p337 = pneg %p160
        $region14: #{tpu_custom_call.1} parent=11 // pred_check_branch
          %339 = sbr.rel (%p337) target = $region16
        $region15: #{tpu_custom_call.1} parent=11 // pred_region
          %s341 = ssub.s32 512, 512
          %342 = vsyncadd [#allocation7], %s341
          %s343 = sshll.u32 [#allocation6], 4
          %s344 = int_to_ptr.vmem [resolvable:$true] %s343
          %349 = dma.hbm_to_vmem [thread:$0]  %s5, 512, %s344, [#allocation7], 128, 128, 8
        $region16: #{tpu_custom_call.1} parent=11 // pred_fallthru
          _
        // Predicated region
        $region17: #{tpu_custom_call.1} parent=11 // pred_check
          %p350 = pneg %p181
        $region18: #{tpu_custom_call.1} parent=11 // pred_check_branch
          %352 = sbr.rel (%p350) target = $region20
        $region19: #{tpu_custom_call.1} parent=11 // pred_region
          _
        $region20: #{tpu_custom_call.1} parent=11 // pred_fallthru
          _
        // Predicated region
        $region21: #{tpu_custom_call.1} parent=11 // pred_check
          %p353 = pneg %p202
        $region22: #{tpu_custom_call.1} parent=11 // pred_check_branch
          %355 = sbr.rel (%p353) target = $region24
        $region23: #{tpu_custom_call.1} parent=11 // pred_region
          _
        $region24: #{tpu_custom_call.1} parent=11 // pred_fallthru
          _
        // Predicated region
        $region25: #{tpu_custom_call.1} parent=11 // pred_check
          %p356 = pneg %p223
        $region26: #{tpu_custom_call.1} parent=11 // pred_check_branch
          %358 = sbr.rel (%p356) target = $region28
        $region27: #{tpu_custom_call.1} parent=11 // pred_region
          %s360 = ssub.s32 4096, 4096
          %361 = vsyncadd [#allocation10], %s360
          %s362 = sshll.u32 [#allocation9], 4
          %s363 = int_to_ptr.vmem [resolvable:$true] %s362
          %368 = dma.hbm_to_vmem [thread:$0]  %s8, 4096, %s363, [#allocation10], 256, 256, 16
        $region28: #{tpu_custom_call.1} parent=11 // pred_fallthru
          _
        // Predicated region
        $region29: #{tpu_custom_call.1} parent=11 // pred_check
          %p369 = pneg %p244
        $region30: #{tpu_custom_call.1} parent=11 // pred_check_branch
          %371 = sbr.rel (%p369) target = $region32
        $region31: #{tpu_custom_call.1} parent=11 // pred_region
          %s373 = ssub.s32 4096, 4096
          %374 = vsyncadd [#allocation10], %s373
          %s375 = sshll.u32 [#allocation11], 4
          %s376 = int_to_ptr.vmem [resolvable:$true] %s375
          %381 = dma.hbm_to_vmem [thread:$0]  %s9, 4096, %s376, [#allocation10], 256, 256, 16
        $region32: #{tpu_custom_call.1} parent=11 // pred_fallthru
          _
      $region12: #{tpu_custom_call.1} parent=5 // pred_fallthru
        _
      %p382 = scmp.lt.s32.totalorder %s37, 4
      // Predicated region
      $region33: #{tpu_custom_call.1} parent=5 // pred_check
        %p383 = pneg %p382
      $region34: #{tpu_custom_call.1} parent=5 // pred_check_branch
        %385 = sbr.rel (%p383) target = $region36
      $region35: #{tpu_custom_call.1} parent=5 // pred_region
        // Predicated region
        $region37: #{tpu_custom_call.1} parent=35 // pred_check
          %p386 = pneg %p75
        $region38: #{tpu_custom_call.1} parent=35 // pred_check_branch
          %388 = sbr.rel (%p386) target = $region40
        $region39: #{tpu_custom_call.1} parent=35 // pred_region
          %s389 = smul.u32 %s44, 2
          %s390 = sadd.s32 %s389, %s45
          %s391 = sld [smem:[#allocation4 + %s390]]
          %s392 = smul.u32 4, %s391
          %p393 = scmp.lt.s32.totalorder %s392, 7
          %s394 = scalar_select %p393, %s392, 7
          %s395 = scalar_lea.vmem %s2, %s394
          %s396 = smul.u32 %s44, 2
          %s397 = sadd.s32 %s396, %s45
          %s398 = sld [smem:[#allocation4 + %s397]]
          %s399 = smul.u32 4, %s398
        $region40: #{tpu_custom_call.1} parent=35 // pred_fallthru
          _
        // Predicated region
        $region41: #{tpu_custom_call.1} parent=35 // pred_check
          %p400 = pneg %p107
        $region42: #{tpu_custom_call.1} parent=35 // pred_check_branch
          %402 = sbr.rel (%p400) target = $region44
        $region43: #{tpu_custom_call.1} parent=35 // pred_region
          %s403 = smul.u32 %s44, 2
          %s404 = sadd.s32 %s403, %s45
          %s405 = sld [smem:[#allocation4 + %s404]]
          %s406 = smul.u32 64, %s405
          %p407 = scmp.lt.s32.totalorder %s406, 127
          %s408 = scalar_select %p407, %s406, 127
          %s409 = smul.addr %s408, 4
          %s410 = scalar_lea.vmem %s3, %s409
          %s411 = smul.u32 %s44, 2
          %s412 = sadd.s32 %s411, %s45
          %s413 = sld [smem:[#allocation4 + %s412]]
          %s414 = smul.u32 64, %s413
        $region44: #{tpu_custom_call.1} parent=35 // pred_fallthru
          _
        // Predicated region
        $region45: #{tpu_custom_call.1} parent=35 // pred_check
          %p415 = pneg %p133
        $region46: #{tpu_custom_call.1} parent=35 // pred_check_branch
          %417 = sbr.rel (%p415) target = $region48
        $region47: #{tpu_custom_call.1} parent=35 // pred_region
          %s418 = smul.u32 32, %s44
          %p419 = scmp.lt.s32.totalorder %s418, 63
          %s420 = scalar_select %p419, %s418, 63
          %s421 = smul.addr %s420, 8
          %s422 = scalar_lea.vmem %s4, %s421
          %s423 = smul.u32 32, %s44
        $region48: #{tpu_custom_call.1} parent=35 // pred_fallthru
          _
      $region36: #{tpu_custom_call.1} parent=5 // pred_fallthru
        _
      %p424 = scmp.le.s32.totalorder 1, %s37
      %p425 = scmp.lt.s32.totalorder %s37, 5
      %p426 = pnand %p424, %p425
      %p427 = pneg %p426
      // Predicated region
      $region49: #{tpu_custom_call.1} parent=5 // pred_check
        _
      $region50: #{tpu_custom_call.1} parent=5 // pred_check_branch
        %429 = sbr.rel (%p426) target = $region52
      $region51: #{tpu_custom_call.1} parent=5 // pred_region
        %s430 = ssub.s32 %s37, 1
        // Predicated region
        $region53: #{tpu_custom_call.1} parent=51 // pred_check
          %p431 = pneg %p160
        $region54: #{tpu_custom_call.1} parent=51 // pred_check_branch
          %433 = sbr.rel (%p431) target = $region56
        $region55: #{tpu_custom_call.1} parent=51 // pred_region
          %434 = dma.done [#allocation7], 512
        $region56: #{tpu_custom_call.1} parent=51 // pred_fallthru
          _
        // Predicated region
        $region57: #{tpu_custom_call.1} parent=51 // pred_check
          %p435 = pneg %p223
        $region58: #{tpu_custom_call.1} parent=51 // pred_check_branch
          %437 = sbr.rel (%p435) target = $region60
        $region59: #{tpu_custom_call.1} parent=51 // pred_region
          %438 = dma.done [#allocation10], 4096
        $region60: #{tpu_custom_call.1} parent=51 // pred_fallthru
          _
        // Predicated region
        $region61: #{tpu_custom_call.1} parent=51 // pred_check
          %p439 = pneg %p244
        $region62: #{tpu_custom_call.1} parent=51 // pred_check_branch
          %441 = sbr.rel (%p439) target = $region64
        $region63: #{tpu_custom_call.1} parent=51 // pred_region
          %442 = dma.done [#allocation10], 4096
        $region64: #{tpu_custom_call.1} parent=51 // pred_fallthru
          _
        %s443 = smul.u32 %s46, 2
        %s444 = sadd.s32 %s443, %s47
        %s445 = sld [smem:[#allocation4 + %s444]]
        %s446 = smul.u32 4, %s445
        %p447 = scmp.lt.s32.totalorder %s446, 7
        %s448 = scalar_select %p447, %s446, 7
        %s449 = scalar_lea.vmem %s2, %s448
        %p450 = pneg %p81
        %p451 = pneg %p78
        %s452 = smul.u32 %s46, 2
        %s453 = sadd.s32 %s452, %s47
        %s454 = sld [smem:[#allocation4 + %s453]]
        %s455 = smul.u32 64, %s454
        %p456 = scmp.lt.s32.totalorder %s455, 127
        %s457 = scalar_select %p456, %s455, 127
        %s458 = smul.addr %s457, 4
        %s459 = scalar_lea.vmem %s3, %s458
        %p460 = pneg %p113
        %p461 = pneg %p110
        %s462 = smul.u32 32, %s46
        %p463 = scmp.lt.s32.totalorder %s462, 63
        %s464 = scalar_select %p463, %s462, 63
        %s465 = smul.addr %s464, 8
        %s466 = scalar_lea.vmem %s4, %s465
        %p467 = pneg %p139
        %p468 = pneg %p136
        %p469 = pneg %p160
        %p470 = pneg %p157
        %p471 = pneg %p181
        %p472 = pneg %p178
        %p473 = pneg %p202
        %p474 = pneg %p199
        %p475 = pneg %p223
        %p476 = pneg %p220
        %p477 = pneg %p244
        %p478 = pneg %p241
        %p479 = pneg %p270
        %p480 = pneg %p267
        %s481 = sand.u32 %s257, 1
        %s482 = scalar_lea.sflag [#allocation8], %s481
        %s483 = sand.u32 %s257, 1
        %s484 = smul.addr %s483, 256
        %s485 = scalar_lea.vmem [#allocation12], %s484
        %p486 = pneg %p296
        %p487 = pneg %p293
        %s488 = sand.u32 %s42, 1
        %s489 = scalar_lea.sflag [#allocation14], %s488
        %s490 = sand.u32 %s283, 1
        %s491 = smul.addr %s490, 256
        %s492 = scalar_lea.vmem [#allocation13], %s491
        %p493 = pneg %p322
        %p494 = pneg %p319
        %s495 = sand.u32 %s42, 1
        %s496 = scalar_lea.sflag [#allocation14], %s495
        %s497 = sand.u32 %s309, 1
        %s498 = smul.addr %s497, 256
        %s499 = scalar_lea.vmem [#allocation15], %s498
        %s500 = smul.u32 %s46, 2
        %s501 = sadd.s32 %s500, %s47
        %s502 = sld [smem:[#allocation4 + %s501]]
        %s503 = smul.u32 4, %s502
        %p504 = scmp.lt.s32.totalorder %s503, 7
        %s505 = scalar_select %p504, %s503, 7
        %s506 = scalar_lea.vmem %s2, %s505
        %s507 = smul.u32 %s46, 2
        %s508 = sadd.s32 %s507, %s47
        %s509 = sld [smem:[#allocation4 + %s508]]
        %s510 = smul.u32 4, %s509
        %s511 = smul.u32 %s46, 2
        %s512 = sadd.s32 %s511, %s47
        %s513 = sld [smem:[#allocation4 + %s512]]
        %s514 = smul.u32 64, %s513
        %p515 = scmp.lt.s32.totalorder %s514, 127
        %s516 = scalar_select %p515, %s514, 127
        %s517 = smul.addr %s516, 4
        %s518 = scalar_lea.vmem %s3, %s517
        %s519 = smul.u32 %s46, 2
        %s520 = sadd.s32 %s519, %s47
        %s521 = sld [smem:[#allocation4 + %s520]]
        %s522 = smul.u32 64, %s521
        %s523 = smul.u32 32, %s46
        %p524 = scmp.lt.s32.totalorder %s523, 63
        %s525 = scalar_select %p524, %s523, 63
        %s526 = smul.addr %s525, 8
        %s527 = scalar_lea.vmem %s4, %s526
        %s528 = smul.u32 32, %s46
        %s529 = smul.u32 32, %s46
        %s530 = smul.u32 32, %s46
        %s531 = smul.u32 32, %s46
        %p533 = scmp.eq.s32.totalorder %s47, 0
        // Predicated region
        $region65: #{tpu_custom_call.1} parent=51 // pred_check
          %p534 = pneg %p533
        $region66: #{tpu_custom_call.1} parent=51 // pred_check_branch
          %536 = sbr.rel (%p534) target = $region68
        $region67: #{tpu_custom_call.1} parent=51 // pred_region
          %537 = vst [vmem:[#allocation2] sm:$0xff] 0.0
          %538 = vst [vmem:[#allocation2 + $0x8] sm:$0xff] 0.0
          %539 = vst [vmem:[#allocation2 + $0x10] sm:$0xff] 0.0
          %540 = vst [vmem:[#allocation2 + $0x18] sm:$0xff] 0.0
          %541 = vst [vmem:[#allocation2 + $0x20] sm:$0xff] 0.0
          %542 = vst [vmem:[#allocation2 + $0x28] sm:$0xff] 0.0
          %543 = vst [vmem:[#allocation2 + $0x30] sm:$0xff] 0.0
          %544 = vst [vmem:[#allocation2 + $0x38] sm:$0xff] 0.0
          %545 = vst [vmem:[#allocation2 + $0x40] sm:$0xff] 0.0
          %546 = vst [vmem:[#allocation2 + $0x48] sm:$0xff] 0.0
          %547 = vst [vmem:[#allocation2 + $0x50] sm:$0xff] 0.0
          %548 = vst [vmem:[#allocation2 + $0x58] sm:$0xff] 0.0
          %549 = vst [vmem:[#allocation2 + $0x60] sm:$0xff] 0.0
          %550 = vst [vmem:[#allocation2 + $0x68] sm:$0xff] 0.0
          %551 = vst [vmem:[#allocation2 + $0x70] sm:$0xff] 0.0
          %552 = vst [vmem:[#allocation2 + $0x78] sm:$0xff] 0.0
          %553 = vst [vmem:[#allocation2 + $0x80] sm:$0xff] 0.0
          %554 = vst [vmem:[#allocation2 + $0x88] sm:$0xff] 0.0
          %555 = vst [vmem:[#allocation2 + $0x90] sm:$0xff] 0.0
          %556 = vst [vmem:[#allocation2 + $0x98] sm:$0xff] 0.0
          %557 = vst [vmem:[#allocation2 + $0xa0] sm:$0xff] 0.0
          %558 = vst [vmem:[#allocation2 + $0xa8] sm:$0xff] 0.0
          %559 = vst [vmem:[#allocation2 + $0xb0] sm:$0xff] 0.0
          %560 = vst [vmem:[#allocation2 + $0xb8] sm:$0xff] 0.0
          %561 = vst [vmem:[#allocation2 + $0xc0] sm:$0xff] 0.0
          %562 = vst [vmem:[#allocation2 + $0xc8] sm:$0xff] 0.0
          %563 = vst [vmem:[#allocation2 + $0xd0] sm:$0xff] 0.0
          %564 = vst [vmem:[#allocation2 + $0xd8] sm:$0xff] 0.0
          %565 = vst [vmem:[#allocation2 + $0xe0] sm:$0xff] 0.0
          %566 = vst [vmem:[#allocation2 + $0xe8] sm:$0xff] 0.0
          %567 = vst [vmem:[#allocation2 + $0xf0] sm:$0xff] 0.0
          %568 = vst [vmem:[#allocation2 + $0xf8] sm:$0xff] 0.0
        $region68: #{tpu_custom_call.1} parent=51 // pred_fallthru
          _
        %s569 = sld [smem:[#allocation5 + %s46]]
        %p570 = scmp.lt.s32.totalorder %s47, %s569
        // Predicated region
        $region69: #{tpu_custom_call.1} parent=51 // pred_check
          %p571 = pneg %p570
        $region70: #{tpu_custom_call.1} parent=51 // pred_check_branch
          %573 = sbr.rel (%p571) target = $region72
        $region71: #{tpu_custom_call.1} parent=51 // pred_region
          %s574 = smul.u32 %s46, 256
          %v575 = vlaneseq
          %v576 = vshrl.u32 %v575, 7
          %v577 = vadd.s32 %v576, 8
          %v578 = vadd.s32 %v576, 16
          %v579 = vadd.s32 %v576, 24
          %v580 = vadd.s32 %v576, 32
          %v581 = vadd.s32 %v576, 40
          %v582 = vadd.s32 %v576, 48
          %v583 = vadd.s32 %v576, 56
          %v584 = vadd.s32 %v576, 64
          %v585 = vadd.s32 %v576, 72
          %v586 = vadd.s32 %v576, 80
          %v587 = vadd.s32 %v576, 88
          %v588 = vadd.s32 %v576, 96
          %v589 = vadd.s32 %v576, 104
          %v590 = vadd.s32 %v576, 112
          %v591 = vadd.s32 %v576, 120
          %v592 = vadd.s32 %v576, 128
          %v593 = vadd.s32 %v576, 136
          %v594 = vadd.s32 %v576, 144
          %v595 = vadd.s32 %v576, 152
          %v596 = vadd.s32 %v576, 160
          %v597 = vadd.s32 %v576, 168
          %v598 = vadd.s32 %v576, 176
          %v599 = vadd.s32 %v576, 184
          %v600 = vadd.s32 %v576, 192
          %v601 = vadd.s32 %v576, 200
          %v602 = vadd.s32 %v576, 208
          %v603 = vadd.s32 %v576, 216
          %v604 = vadd.s32 %v576, 224
          %v605 = vadd.s32 %v576, 232
          %v606 = vadd.s32 %v576, 240
          %v607 = vadd.s32 %v576, 248
          %v608 = vld [vmem:[%s506] sm:$0xf]
          %v609 = vstv %s574
          %v610 = vsub.s32 %v608, %v609
          %v611 = vlaneseq
          %v612 = vshrl.u32 %v611, 7
          %v613 = vsub.s32 0, %v612
          %v614 = vrot.slane %v610, %v613
          %v615 = vlaneseq
          %v616 = vshrl.u32 %v615, 7
          %v617 = vsub.s32 1, %v616
          %v618 = vrot.slane %v610, %v617
          %v619 = vlaneseq
          %v620 = vshrl.u32 %v619, 7
          %v621 = vsub.s32 2, %v620
          %v622 = vrot.slane %v610, %v621
          %v623 = vlaneseq
          %v624 = vshrl.u32 %v623, 7
          %v625 = vsub.s32 3, %v624
          %v626 = vrot.slane %v610, %v625
          %vm627 = vcmp.eq.s32.totalorder %v576, %v614
          %vm628 = vcmp.eq.s32.totalorder %v576, %v618
          %vm629 = vcmp.eq.s32.totalorder %v576, %v622
          %vm630 = vcmp.eq.s32.totalorder %v576, %v626
          %vm631 = vcmp.eq.s32.totalorder %v577, %v614
          %vm632 = vcmp.eq.s32.totalorder %v577, %v618
          %vm633 = vcmp.eq.s32.totalorder %v577, %v622
          %vm634 = vcmp.eq.s32.totalorder %v577, %v626
          %vm635 = vcmp.eq.s32.totalorder %v578, %v614
          %vm636 = vcmp.eq.s32.totalorder %v578, %v618
          %vm637 = vcmp.eq.s32.totalorder %v578, %v622
          %vm638 = vcmp.eq.s32.totalorder %v578, %v626
          %vm639 = vcmp.eq.s32.totalorder %v579, %v614
          %vm640 = vcmp.eq.s32.totalorder %v579, %v618
          %vm641 = vcmp.eq.s32.totalorder %v579, %v622
          %vm642 = vcmp.eq.s32.totalorder %v579, %v626
          %vm643 = vcmp.eq.s32.totalorder %v580, %v614
          %vm644 = vcmp.eq.s32.totalorder %v580, %v618
          %vm645 = vcmp.eq.s32.totalorder %v580, %v622
          %vm646 = vcmp.eq.s32.totalorder %v580, %v626
          %vm647 = vcmp.eq.s32.totalorder %v581, %v614
          %vm648 = vcmp.eq.s32.totalorder %v581, %v618
          %vm649 = vcmp.eq.s32.totalorder %v581, %v622
          %vm650 = vcmp.eq.s32.totalorder %v581, %v626
          %vm651 = vcmp.eq.s32.totalorder %v582, %v614
          %vm652 = vcmp.eq.s32.totalorder %v582, %v618
          %vm653 = vcmp.eq.s32.totalorder %v582, %v622
          %vm654 = vcmp.eq.s32.totalorder %v582, %v626
          %vm655 = vcmp.eq.s32.totalorder %v583, %v614
          %vm656 = vcmp.eq.s32.totalorder %v583, %v618
          %vm657 = vcmp.eq.s32.totalorder %v583, %v622
          %vm658 = vcmp.eq.s32.totalorder %v583, %v626
          %vm659 = vcmp.eq.s32.totalorder %v584, %v614
          %vm660 = vcmp.eq.s32.totalorder %v584, %v618
          %vm661 = vcmp.eq.s32.totalorder %v584, %v622
          %vm662 = vcmp.eq.s32.totalorder %v584, %v626
          %vm663 = vcmp.eq.s32.totalorder %v585, %v614
          %vm664 = vcmp.eq.s32.totalorder %v585, %v618
          %vm665 = vcmp.eq.s32.totalorder %v585, %v622
          %vm666 = vcmp.eq.s32.totalorder %v585, %v626
          %vm667 = vcmp.eq.s32.totalorder %v586, %v614
          %vm668 = vcmp.eq.s32.totalorder %v586, %v618
          %vm669 = vcmp.eq.s32.totalorder %v586, %v622
          %vm670 = vcmp.eq.s32.totalorder %v586, %v626
          %vm671 = vcmp.eq.s32.totalorder %v587, %v614
          %vm672 = vcmp.eq.s32.totalorder %v587, %v618
          %vm673 = vcmp.eq.s32.totalorder %v587, %v622
          %vm674 = vcmp.eq.s32.totalorder %v587, %v626
          %vm675 = vcmp.eq.s32.totalorder %v588, %v614
          %vm676 = vcmp.eq.s32.totalorder %v588, %v618
          %vm677 = vcmp.eq.s32.totalorder %v588, %v622
          %vm678 = vcmp.eq.s32.totalorder %v588, %v626
          %vm679 = vcmp.eq.s32.totalorder %v589, %v614
          %vm680 = vcmp.eq.s32.totalorder %v589, %v618
          %vm681 = vcmp.eq.s32.totalorder %v589, %v622
          %vm682 = vcmp.eq.s32.totalorder %v589, %v626
          %vm683 = vcmp.eq.s32.totalorder %v590, %v614
          %vm684 = vcmp.eq.s32.totalorder %v590, %v618
          %vm685 = vcmp.eq.s32.totalorder %v590, %v622
          %vm686 = vcmp.eq.s32.totalorder %v590, %v626
          %vm687 = vcmp.eq.s32.totalorder %v591, %v614
          %vm688 = vcmp.eq.s32.totalorder %v591, %v618
          %vm689 = vcmp.eq.s32.totalorder %v591, %v622
          %vm690 = vcmp.eq.s32.totalorder %v591, %v626
          %vm691 = vcmp.eq.s32.totalorder %v592, %v614
          %vm692 = vcmp.eq.s32.totalorder %v592, %v618
          %vm693 = vcmp.eq.s32.totalorder %v592, %v622
          %vm694 = vcmp.eq.s32.totalorder %v592, %v626
          %vm695 = vcmp.eq.s32.totalorder %v593, %v614
          %vm696 = vcmp.eq.s32.totalorder %v593, %v618
          %vm697 = vcmp.eq.s32.totalorder %v593, %v622
          %vm698 = vcmp.eq.s32.totalorder %v593, %v626
          %vm699 = vcmp.eq.s32.totalorder %v594, %v614
          %vm700 = vcmp.eq.s32.totalorder %v594, %v618
          %vm701 = vcmp.eq.s32.totalorder %v594, %v622
          %vm702 = vcmp.eq.s32.totalorder %v594, %v626
          %vm703 = vcmp.eq.s32.totalorder %v595, %v614
          %vm704 = vcmp.eq.s32.totalorder %v595, %v618
          %vm705 = vcmp.eq.s32.totalorder %v595, %v622
          %vm706 = vcmp.eq.s32.totalorder %v595, %v626
          %vm707 = vcmp.eq.s32.totalorder %v596, %v614
          %vm708 = vcmp.eq.s32.totalorder %v596, %v618
          %vm709 = vcmp.eq.s32.totalorder %v596, %v622
          %vm710 = vcmp.eq.s32.totalorder %v596, %v626
          %vm711 = vcmp.eq.s32.totalorder %v597, %v614
          %vm712 = vcmp.eq.s32.totalorder %v597, %v618
          %vm713 = vcmp.eq.s32.totalorder %v597, %v622
          %vm714 = vcmp.eq.s32.totalorder %v597, %v626
          %vm715 = vcmp.eq.s32.totalorder %v598, %v614
          %vm716 = vcmp.eq.s32.totalorder %v598, %v618
          %vm717 = vcmp.eq.s32.totalorder %v598, %v622
          %vm718 = vcmp.eq.s32.totalorder %v598, %v626
          %vm719 = vcmp.eq.s32.totalorder %v599, %v614
          %vm720 = vcmp.eq.s32.totalorder %v599, %v618
          %vm721 = vcmp.eq.s32.totalorder %v599, %v622
          %vm722 = vcmp.eq.s32.totalorder %v599, %v626
          %vm723 = vcmp.eq.s32.totalorder %v600, %v614
          %vm724 = vcmp.eq.s32.totalorder %v600, %v618
          %vm725 = vcmp.eq.s32.totalorder %v600, %v622
          %vm726 = vcmp.eq.s32.totalorder %v600, %v626
          %vm727 = vcmp.eq.s32.totalorder %v601, %v614
          %vm728 = vcmp.eq.s32.totalorder %v601, %v618
          %vm729 = vcmp.eq.s32.totalorder %v601, %v622
          %vm730 = vcmp.eq.s32.totalorder %v601, %v626
          %vm731 = vcmp.eq.s32.totalorder %v602, %v614
          %vm732 = vcmp.eq.s32.totalorder %v602, %v618
          %vm733 = vcmp.eq.s32.totalorder %v602, %v622
          %vm734 = vcmp.eq.s32.totalorder %v602, %v626
          %vm735 = vcmp.eq.s32.totalorder %v603, %v614
          %vm736 = vcmp.eq.s32.totalorder %v603, %v618
          %vm737 = vcmp.eq.s32.totalorder %v603, %v622
          %vm738 = vcmp.eq.s32.totalorder %v603, %v626
          %vm739 = vcmp.eq.s32.totalorder %v604, %v614
          %vm740 = vcmp.eq.s32.totalorder %v604, %v618
          %vm741 = vcmp.eq.s32.totalorder %v604, %v622
          %vm742 = vcmp.eq.s32.totalorder %v604, %v626
          %vm743 = vcmp.eq.s32.totalorder %v605, %v614
          %vm744 = vcmp.eq.s32.totalorder %v605, %v618
          %vm745 = vcmp.eq.s32.totalorder %v605, %v622
          %vm746 = vcmp.eq.s32.totalorder %v605, %v626
          %vm747 = vcmp.eq.s32.totalorder %v606, %v614
          %vm748 = vcmp.eq.s32.totalorder %v606, %v618
          %vm749 = vcmp.eq.s32.totalorder %v606, %v622
          %vm750 = vcmp.eq.s32.totalorder %v606, %v626
          %vm751 = vcmp.eq.s32.totalorder %v607, %v614
          %vm752 = vcmp.eq.s32.totalorder %v607, %v618
          %vm753 = vcmp.eq.s32.totalorder %v607, %v622
          %vm754 = vcmp.eq.s32.totalorder %v607, %v626
          %v755 = vsel %vm627, 1, 0
          %v756 = vsel %vm628, 1, 0
          %v757 = vsel %vm629, 1, 0
          %v758 = vsel %vm630, 1, 0
          %v759 = vsel %vm631, 1, 0
          %v760 = vsel %vm632, 1, 0
          %v761 = vsel %vm633, 1, 0
          %v762 = vsel %vm634, 1, 0
          %v763 = vsel %vm635, 1, 0
          %v764 = vsel %vm636, 1, 0
          %v765 = vsel %vm637, 1, 0
          %v766 = vsel %vm638, 1, 0
          %v767 = vsel %vm639, 1, 0
          %v768 = vsel %vm640, 1, 0
          %v769 = vsel %vm641, 1, 0
          %v770 = vsel %vm642, 1, 0
          %v771 = vsel %vm643, 1, 0
          %v772 = vsel %vm644, 1, 0
          %v773 = vsel %vm645, 1, 0
          %v774 = vsel %vm646, 1, 0
          %v775 = vsel %vm647, 1, 0
          %v776 = vsel %vm648, 1, 0
          %v777 = vsel %vm649, 1, 0
          %v778 = vsel %vm650, 1, 0
          %v779 = vsel %vm651, 1, 0
          %v780 = vsel %vm652, 1, 0
          %v781 = vsel %vm653, 1, 0
          %v782 = vsel %vm654, 1, 0
          %v783 = vsel %vm655, 1, 0
          %v784 = vsel %vm656, 1, 0
          %v785 = vsel %vm657, 1, 0
          %v786 = vsel %vm658, 1, 0
          %v787 = vsel %vm659, 1, 0
          %v788 = vsel %vm660, 1, 0
          %v789 = vsel %vm661, 1, 0
          %v790 = vsel %vm662, 1, 0
          %v791 = vsel %vm663, 1, 0
          %v792 = vsel %vm664, 1, 0
          %v793 = vsel %vm665, 1, 0
          %v794 = vsel %vm666, 1, 0
          %v795 = vsel %vm667, 1, 0
          %v796 = vsel %vm668, 1, 0
          %v797 = vsel %vm669, 1, 0
          %v798 = vsel %vm670, 1, 0
          %v799 = vsel %vm671, 1, 0
          %v800 = vsel %vm672, 1, 0
          %v801 = vsel %vm673, 1, 0
          %v802 = vsel %vm674, 1, 0
          %v803 = vsel %vm675, 1, 0
          %v804 = vsel %vm676, 1, 0
          %v805 = vsel %vm677, 1, 0
          %v806 = vsel %vm678, 1, 0
          %v807 = vsel %vm679, 1, 0
          %v808 = vsel %vm680, 1, 0
          %v809 = vsel %vm681, 1, 0
          %v810 = vsel %vm682, 1, 0
          %v811 = vsel %vm683, 1, 0
          %v812 = vsel %vm684, 1, 0
          %v813 = vsel %vm685, 1, 0
          %v814 = vsel %vm686, 1, 0
          %v815 = vsel %vm687, 1, 0
          %v816 = vsel %vm688, 1, 0
          %v817 = vsel %vm689, 1, 0
          %v818 = vsel %vm690, 1, 0
          %v819 = vsel %vm691, 1, 0
          %v820 = vsel %vm692, 1, 0
          %v821 = vsel %vm693, 1, 0
          %v822 = vsel %vm694, 1, 0
          %v823 = vsel %vm695, 1, 0
          %v824 = vsel %vm696, 1, 0
          %v825 = vsel %vm697, 1, 0
          %v826 = vsel %vm698, 1, 0
          %v827 = vsel %vm699, 1, 0
          %v828 = vsel %vm700, 1, 0
          %v829 = vsel %vm701, 1, 0
          %v830 = vsel %vm702, 1, 0
          %v831 = vsel %vm703, 1, 0
          %v832 = vsel %vm704, 1, 0
          %v833 = vsel %vm705, 1, 0
          %v834 = vsel %vm706, 1, 0
          %v835 = vsel %vm707, 1, 0
          %v836 = vsel %vm708, 1, 0
          %v837 = vsel %vm709, 1, 0
          %v838 = vsel %vm710, 1, 0
          %v839 = vsel %vm711, 1, 0
          %v840 = vsel %vm712, 1, 0
          %v841 = vsel %vm713, 1, 0
          %v842 = vsel %vm714, 1, 0
          %v843 = vsel %vm715, 1, 0
          %v844 = vsel %vm716, 1, 0
          %v845 = vsel %vm717, 1, 0
          %v846 = vsel %vm718, 1, 0
          %v847 = vsel %vm719, 1, 0
          %v848 = vsel %vm720, 1, 0
          %v849 = vsel %vm721, 1, 0
          %v850 = vsel %vm722, 1, 0
          %v851 = vsel %vm723, 1, 0
          %v852 = vsel %vm724, 1, 0
          %v853 = vsel %vm725, 1, 0
          %v854 = vsel %vm726, 1, 0
          %v855 = vsel %vm727, 1, 0
          %v856 = vsel %vm728, 1, 0
          %v857 = vsel %vm729, 1, 0
          %v858 = vsel %vm730, 1, 0
          %v859 = vsel %vm731, 1, 0
          %v860 = vsel %vm732, 1, 0
          %v861 = vsel %vm733, 1, 0
          %v862 = vsel %vm734, 1, 0
          %v863 = vsel %vm735, 1, 0
          %v864 = vsel %vm736, 1, 0
          %v865 = vsel %vm737, 1, 0
          %v866 = vsel %vm738, 1, 0
          %v867 = vsel %vm739, 1, 0
          %v868 = vsel %vm740, 1, 0
          %v869 = vsel %vm741, 1, 0
          %v870 = vsel %vm742, 1, 0
          %v871 = vsel %vm743, 1, 0
          %v872 = vsel %vm744, 1, 0
          %v873 = vsel %vm745, 1, 0
          %v874 = vsel %vm746, 1, 0
          %v875 = vsel %vm747, 1, 0
          %v876 = vsel %vm748, 1, 0
          %v877 = vsel %vm749, 1, 0
          %v878 = vsel %vm750, 1, 0
          %v879 = vsel %vm751, 1, 0
          %v880 = vsel %vm752, 1, 0
          %v881 = vsel %vm753, 1, 0
          %v882 = vsel %vm754, 1, 0
          %v883 = vcvt.s32.f32 %v755
          %v884 = vcvt.s32.f32 %v756
          %v885 = vcvt.s32.f32 %v757
          %v886 = vcvt.s32.f32 %v758
          %v887 = vcvt.s32.f32 %v759
          %v888 = vcvt.s32.f32 %v760
          %v889 = vcvt.s32.f32 %v761
          %v890 = vcvt.s32.f32 %v762
          %v891 = vcvt.s32.f32 %v763
          %v892 = vcvt.s32.f32 %v764
          %v893 = vcvt.s32.f32 %v765
          %v894 = vcvt.s32.f32 %v766
          %v895 = vcvt.s32.f32 %v767
          %v896 = vcvt.s32.f32 %v768
          %v897 = vcvt.s32.f32 %v769
          %v898 = vcvt.s32.f32 %v770
          %v899 = vcvt.s32.f32 %v771
          %v900 = vcvt.s32.f32 %v772
          %v901 = vcvt.s32.f32 %v773
          %v902 = vcvt.s32.f32 %v774
          %v903 = vcvt.s32.f32 %v775
          %v904 = vcvt.s32.f32 %v776
          %v905 = vcvt.s32.f32 %v777
          %v906 = vcvt.s32.f32 %v778
          %v907 = vcvt.s32.f32 %v779
          %v908 = vcvt.s32.f32 %v780
          %v909 = vcvt.s32.f32 %v781
          %v910 = vcvt.s32.f32 %v782
          %v911 = vcvt.s32.f32 %v783
          %v912 = vcvt.s32.f32 %v784
          %v913 = vcvt.s32.f32 %v785
          %v914 = vcvt.s32.f32 %v786
          %v915 = vcvt.s32.f32 %v787
          %v916 = vcvt.s32.f32 %v788
          %v917 = vcvt.s32.f32 %v789
          %v918 = vcvt.s32.f32 %v790
          %v919 = vcvt.s32.f32 %v791
          %v920 = vcvt.s32.f32 %v792
          %v921 = vcvt.s32.f32 %v793
          %v922 = vcvt.s32.f32 %v794
          %v923 = vcvt.s32.f32 %v795
          %v924 = vcvt.s32.f32 %v796
          %v925 = vcvt.s32.f32 %v797
          %v926 = vcvt.s32.f32 %v798
          %v927 = vcvt.s32.f32 %v799
          %v928 = vcvt.s32.f32 %v800
          %v929 = vcvt.s32.f32 %v801
          %v930 = vcvt.s32.f32 %v802
          %v931 = vcvt.s32.f32 %v803
          %v932 = vcvt.s32.f32 %v804
          %v933 = vcvt.s32.f32 %v805
          %v934 = vcvt.s32.f32 %v806
          %v935 = vcvt.s32.f32 %v807
          %v936 = vcvt.s32.f32 %v808
          %v937 = vcvt.s32.f32 %v809
          %v938 = vcvt.s32.f32 %v810
          %v939 = vcvt.s32.f32 %v811
          %v940 = vcvt.s32.f32 %v812
          %v941 = vcvt.s32.f32 %v813
          %v942 = vcvt.s32.f32 %v814
          %v943 = vcvt.s32.f32 %v815
          %v944 = vcvt.s32.f32 %v816
          %v945 = vcvt.s32.f32 %v817
          %v946 = vcvt.s32.f32 %v818
          %v947 = vcvt.s32.f32 %v819
          %v948 = vcvt.s32.f32 %v820
          %v949 = vcvt.s32.f32 %v821
          %v950 = vcvt.s32.f32 %v822
          %v951 = vcvt.s32.f32 %v823
          %v952 = vcvt.s32.f32 %v824
          %v953 = vcvt.s32.f32 %v825
          %v954 = vcvt.s32.f32 %v826
          %v955 = vcvt.s32.f32 %v827
          %v956 = vcvt.s32.f32 %v828
          %v957 = vcvt.s32.f32 %v829
          %v958 = vcvt.s32.f32 %v830
          %v959 = vcvt.s32.f32 %v831
          %v960 = vcvt.s32.f32 %v832
          %v961 = vcvt.s32.f32 %v833
          %v962 = vcvt.s32.f32 %v834
          %v963 = vcvt.s32.f32 %v835
          %v964 = vcvt.s32.f32 %v836
          %v965 = vcvt.s32.f32 %v837
          %v966 = vcvt.s32.f32 %v838
          %v967 = vcvt.s32.f32 %v839
          %v968 = vcvt.s32.f32 %v840
          %v969 = vcvt.s32.f32 %v841
          %v970 = vcvt.s32.f32 %v842
          %v971 = vcvt.s32.f32 %v843
          %v972 = vcvt.s32.f32 %v844
          %v973 = vcvt.s32.f32 %v845
          %v974 = vcvt.s32.f32 %v846
          %v975 = vcvt.s32.f32 %v847
          %v976 = vcvt.s32.f32 %v848
          %v977 = vcvt.s32.f32 %v849
          %v978 = vcvt.s32.f32 %v850
          %v979 = vcvt.s32.f32 %v851
          %v980 = vcvt.s32.f32 %v852
          %v981 = vcvt.s32.f32 %v853
          %v982 = vcvt.s32.f32 %v854
          %v983 = vcvt.s32.f32 %v855
          %v984 = vcvt.s32.f32 %v856
          %v985 = vcvt.s32.f32 %v857
          %v986 = vcvt.s32.f32 %v858
          %v987 = vcvt.s32.f32 %v859
          %v988 = vcvt.s32.f32 %v860
          %v989 = vcvt.s32.f32 %v861
          %v990 = vcvt.s32.f32 %v862
          %v991 = vcvt.s32.f32 %v863
          %v992 = vcvt.s32.f32 %v864
          %v993 = vcvt.s32.f32 %v865
          %v994 = vcvt.s32.f32 %v866
          %v995 = vcvt.s32.f32 %v867
          %v996 = vcvt.s32.f32 %v868
          %v997 = vcvt.s32.f32 %v869
          %v998 = vcvt.s32.f32 %v870
          %v999 = vcvt.s32.f32 %v871
          %v1000 = vcvt.s32.f32 %v872
          %v1001 = vcvt.s32.f32 %v873
          %v1002 = vcvt.s32.f32 %v874
          %v1003 = vcvt.s32.f32 %v875
          %v1004 = vcvt.s32.f32 %v876
          %v1005 = vcvt.s32.f32 %v877
          %v1006 = vcvt.s32.f32 %v878
          %v1007 = vcvt.s32.f32 %v879
          %v1008 = vcvt.s32.f32 %v880
          %v1009 = vcvt.s32.f32 %v881
          %v1010 = vcvt.s32.f32 %v882
          %v1011 = vpack.c.bf16 %v887, %v883
          %v1012 = vpack.c.bf16 %v888, %v884
          %v1013 = vpack.c.bf16 %v889, %v885
          %v1014 = vpack.c.bf16 %v890, %v886
          %v1015 = vpack.c.bf16 %v895, %v891
          %v1016 = vpack.c.bf16 %v896, %v892
          %v1017 = vpack.c.bf16 %v897, %v893
          %v1018 = vpack.c.bf16 %v898, %v894
          %v1019 = vpack.c.bf16 %v903, %v899
          %v1020 = vpack.c.bf16 %v904, %v900
          %v1021 = vpack.c.bf16 %v905, %v901
          %v1022 = vpack.c.bf16 %v906, %v902
          %v1023 = vpack.c.bf16 %v911, %v907
          %v1024 = vpack.c.bf16 %v912, %v908
          %v1025 = vpack.c.bf16 %v913, %v909
          %v1026 = vpack.c.bf16 %v914, %v910
          %v1027 = vpack.c.bf16 %v919, %v915
          %v1028 = vpack.c.bf16 %v920, %v916
          %v1029 = vpack.c.bf16 %v921, %v917
          %v1030 = vpack.c.bf16 %v922, %v918
          %v1031 = vpack.c.bf16 %v927, %v923
          %v1032 = vpack.c.bf16 %v928, %v924
          %v1033 = vpack.c.bf16 %v929, %v925
          %v1034 = vpack.c.bf16 %v930, %v926
          %v1035 = vpack.c.bf16 %v935, %v931
          %v1036 = vpack.c.bf16 %v936, %v932
          %v1037 = vpack.c.bf16 %v937, %v933
          %v1038 = vpack.c.bf16 %v938, %v934
          %v1039 = vpack.c.bf16 %v943, %v939
          %v1040 = vpack.c.bf16 %v944, %v940
          %v1041 = vpack.c.bf16 %v945, %v941
          %v1042 = vpack.c.bf16 %v946, %v942
          %v1043 = vpack.c.bf16 %v951, %v947
          %v1044 = vpack.c.bf16 %v952, %v948
          %v1045 = vpack.c.bf16 %v953, %v949
          %v1046 = vpack.c.bf16 %v954, %v950
          %v1047 = vpack.c.bf16 %v959, %v955
          %v1048 = vpack.c.bf16 %v960, %v956
          %v1049 = vpack.c.bf16 %v961, %v957
          %v1050 = vpack.c.bf16 %v962, %v958
          %v1051 = vpack.c.bf16 %v967, %v963
          %v1052 = vpack.c.bf16 %v968, %v964
          %v1053 = vpack.c.bf16 %v969, %v965
          %v1054 = vpack.c.bf16 %v970, %v966
          %v1055 = vpack.c.bf16 %v975, %v971
          %v1056 = vpack.c.bf16 %v976, %v972
          %v1057 = vpack.c.bf16 %v977, %v973
          %v1058 = vpack.c.bf16 %v978, %v974
          %v1059 = vpack.c.bf16 %v983, %v979
          %v1060 = vpack.c.bf16 %v984, %v980
          %v1061 = vpack.c.bf16 %v985, %v981
          %v1062 = vpack.c.bf16 %v986, %v982
          %v1063 = vpack.c.bf16 %v991, %v987
          %v1064 = vpack.c.bf16 %v992, %v988
          %v1065 = vpack.c.bf16 %v993, %v989
          %v1066 = vpack.c.bf16 %v994, %v990
          %v1067 = vpack.c.bf16 %v999, %v995
          %v1068 = vpack.c.bf16 %v1000, %v996
          %v1069 = vpack.c.bf16 %v1001, %v997
          %v1070 = vpack.c.bf16 %v1002, %v998
          %v1071 = vpack.c.bf16 %v1007, %v1003
          %v1072 = vpack.c.bf16 %v1008, %v1004
          %v1073 = vpack.c.bf16 %v1009, %v1005
          %v1074 = vpack.c.bf16 %v1010, %v1006
          %v1075 = vld [vmem:[#allocation2] sm:$0xff]
          %v1076 = vld [vmem:[#allocation2 + $0x8] sm:$0xff]
          %v1077 = vld [vmem:[#allocation2 + $0x10] sm:$0xff]
          %v1078 = vld [vmem:[#allocation2 + $0x18] sm:$0xff]
          %v1079 = vld [vmem:[#allocation2 + $0x20] sm:$0xff]
          %v1080 = vld [vmem:[#allocation2 + $0x28] sm:$0xff]
          %v1081 = vld [vmem:[#allocation2 + $0x30] sm:$0xff]
          %v1082 = vld [vmem:[#allocation2 + $0x38] sm:$0xff]
          %v1083 = vld [vmem:[#allocation2 + $0x40] sm:$0xff]
          %v1084 = vld [vmem:[#allocation2 + $0x48] sm:$0xff]
          %v1085 = vld [vmem:[#allocation2 + $0x50] sm:$0xff]
          %v1086 = vld [vmem:[#allocation2 + $0x58] sm:$0xff]
          %v1087 = vld [vmem:[#allocation2 + $0x60] sm:$0xff]
          %v1088 = vld [vmem:[#allocation2 + $0x68] sm:$0xff]
          %v1089 = vld [vmem:[#allocation2 + $0x70] sm:$0xff]
          %v1090 = vld [vmem:[#allocation2 + $0x78] sm:$0xff]
          %v1091 = vld [vmem:[#allocation2 + $0x80] sm:$0xff]
          %v1092 = vld [vmem:[#allocation2 + $0x88] sm:$0xff]
          %v1093 = vld [vmem:[#allocation2 + $0x90] sm:$0xff]
          %v1094 = vld [vmem:[#allocation2 + $0x98] sm:$0xff]
          %v1095 = vld [vmem:[#allocation2 + $0xa0] sm:$0xff]
          %v1096 = vld [vmem:[#allocation2 + $0xa8] sm:$0xff]
          %v1097 = vld [vmem:[#allocation2 + $0xb0] sm:$0xff]
          %v1098 = vld [vmem:[#allocation2 + $0xb8] sm:$0xff]
          %v1099 = vld [vmem:[#allocation2 + $0xc0] sm:$0xff]
          %v1100 = vld [vmem:[#allocation2 + $0xc8] sm:$0xff]
          %v1101 = vld [vmem:[#allocation2 + $0xd0] sm:$0xff]
          %v1102 = vld [vmem:[#allocation2 + $0xd8] sm:$0xff]
          %v1103 = vld [vmem:[#allocation2 + $0xe0] sm:$0xff]
          %v1104 = vld [vmem:[#allocation2 + $0xe8] sm:$0xff]
          %v1105 = vld [vmem:[#allocation2 + $0xf0] sm:$0xff]
          %v1106 = vld [vmem:[#allocation2 + $0xf8] sm:$0xff]
          %v1107 = vld [vmem:[%s518] sm:$0xf]
          %v1108 = vld [vmem:[%s518 + $0x4] sm:$0xf]
          %v1109 = vld [vmem:[%s518 + $0x8] sm:$0xf]
          %v1110 = vld [vmem:[%s518 + $0xc] sm:$0xf]
          %v1111 = vld [vmem:[%s518 + $0x10] sm:$0xf]
          %v1112 = vld [vmem:[%s518 + $0x14] sm:$0xf]
          %v1113 = vld [vmem:[%s518 + $0x18] sm:$0xf]
          %v1114 = vld [vmem:[%s518 + $0x1c] sm:$0xf]
          %v1115 = vld [vmem:[%s518 + $0x20] sm:$0xf]
          %v1116 = vld [vmem:[%s518 + $0x24] sm:$0xf]
          %v1117 = vld [vmem:[%s518 + $0x28] sm:$0xf]
          %v1118 = vld [vmem:[%s518 + $0x2c] sm:$0xf]
          %v1119 = vld [vmem:[%s518 + $0x30] sm:$0xf]
          %v1120 = vld [vmem:[%s518 + $0x34] sm:$0xf]
          %v1121 = vld [vmem:[%s518 + $0x38] sm:$0xf]
          %v1122 = vld [vmem:[%s518 + $0x3c] sm:$0xf]
          %v1123 = vld [vmem:[%s518 + $0x40] sm:$0xf]
          %v1124 = vld [vmem:[%s518 + $0x44] sm:$0xf]
          %v1125 = vld [vmem:[%s518 + $0x48] sm:$0xf]
          %v1126 = vld [vmem:[%s518 + $0x4c] sm:$0xf]
          %v1127 = vld [vmem:[%s518 + $0x50] sm:$0xf]
          %v1128 = vld [vmem:[%s518 + $0x54] sm:$0xf]
          %v1129 = vld [vmem:[%s518 + $0x58] sm:$0xf]
          %v1130 = vld [vmem:[%s518 + $0x5c] sm:$0xf]
          %v1131 = vld [vmem:[%s518 + $0x60] sm:$0xf]
          %v1132 = vld [vmem:[%s518 + $0x64] sm:$0xf]
          %v1133 = vld [vmem:[%s518 + $0x68] sm:$0xf]
          %v1134 = vld [vmem:[%s518 + $0x6c] sm:$0xf]
          %v1135 = vld [vmem:[%s518 + $0x70] sm:$0xf]
          %v1136 = vld [vmem:[%s518 + $0x74] sm:$0xf]
          %v1137 = vld [vmem:[%s518 + $0x78] sm:$0xf]
          %v1138 = vld [vmem:[%s518 + $0x7c] sm:$0xf]
          %v1139 = vld [vmem:[%s518 + $0x80] sm:$0xf]
          %v1140 = vld [vmem:[%s518 + $0x84] sm:$0xf]
          %v1141 = vld [vmem:[%s518 + $0x88] sm:$0xf]
          %v1142 = vld [vmem:[%s518 + $0x8c] sm:$0xf]
          %v1143 = vld [vmem:[%s518 + $0x90] sm:$0xf]
          %v1144 = vld [vmem:[%s518 + $0x94] sm:$0xf]
          %v1145 = vld [vmem:[%s518 + $0x98] sm:$0xf]
          %v1146 = vld [vmem:[%s518 + $0x9c] sm:$0xf]
          %v1147 = vld [vmem:[%s518 + $0xa0] sm:$0xf]
          %v1148 = vld [vmem:[%s518 + $0xa4] sm:$0xf]
          %v1149 = vld [vmem:[%s518 + $0xa8] sm:$0xf]
          %v1150 = vld [vmem:[%s518 + $0xac] sm:$0xf]
          %v1151 = vld [vmem:[%s518 + $0xb0] sm:$0xf]
          %v1152 = vld [vmem:[%s518 + $0xb4] sm:$0xf]
          %v1153 = vld [vmem:[%s518 + $0xb8] sm:$0xf]
          %v1154 = vld [vmem:[%s518 + $0xbc] sm:$0xf]
          %v1155 = vld [vmem:[%s518 + $0xc0] sm:$0xf]
          %v1156 = vld [vmem:[%s518 + $0xc4] sm:$0xf]
          %v1157 = vld [vmem:[%s518 + $0xc8] sm:$0xf]
          %v1158 = vld [vmem:[%s518 + $0xcc] sm:$0xf]
          %v1159 = vld [vmem:[%s518 + $0xd0] sm:$0xf]
          %v1160 = vld [vmem:[%s518 + $0xd4] sm:$0xf]
          %v1161 = vld [vmem:[%s518 + $0xd8] sm:$0xf]
          %v1162 = vld [vmem:[%s518 + $0xdc] sm:$0xf]
          %v1163 = vld [vmem:[%s518 + $0xe0] sm:$0xf]
          %v1164 = vld [vmem:[%s518 + $0xe4] sm:$0xf]
          %v1165 = vld [vmem:[%s518 + $0xe8] sm:$0xf]
          %v1166 = vld [vmem:[%s518 + $0xec] sm:$0xf]
          %v1167 = vld [vmem:[%s518 + $0xf0] sm:$0xf]
          %v1168 = vld [vmem:[%s518 + $0xf4] sm:$0xf]
          %v1169 = vld [vmem:[%s518 + $0xf8] sm:$0xf]
          %v1170 = vld [vmem:[%s518 + $0xfc] sm:$0xf]
          %v1235 = vunpack.c.l.b16 %v1107
          %v1236 = vunpack.c.l.b16 %v1108
          %v1237 = vunpack.c.l.b16 %v1109
          %v1238 = vunpack.c.l.b16 %v1110
          %v1239 = vunpack.c.l.b16 %v1111
          %v1240 = vunpack.c.l.b16 %v1112
          %v1241 = vunpack.c.l.b16 %v1113
          %v1242 = vunpack.c.l.b16 %v1114
          %v1243 = vunpack.c.l.b16 %v1115
          %v1244 = vunpack.c.l.b16 %v1116
          %v1245 = vunpack.c.l.b16 %v1117
          %v1246 = vunpack.c.l.b16 %v1118
          %v1247 = vunpack.c.l.b16 %v1119
          %v1248 = vunpack.c.l.b16 %v1120
          %v1249 = vunpack.c.l.b16 %v1121
          %v1250 = vunpack.c.l.b16 %v1122
          %v1251 = vunpack.c.l.b16 %v1123
          %v1252 = vunpack.c.l.b16 %v1124
          %v1253 = vunpack.c.l.b16 %v1125
          %v1254 = vunpack.c.l.b16 %v1126
          %v1255 = vunpack.c.l.b16 %v1127
          %v1256 = vunpack.c.l.b16 %v1128
          %v1257 = vunpack.c.l.b16 %v1129
          %v1258 = vunpack.c.l.b16 %v1130
          %v1259 = vunpack.c.l.b16 %v1131
          %v1260 = vunpack.c.l.b16 %v1132
          %v1261 = vunpack.c.l.b16 %v1133
          %v1262 = vunpack.c.l.b16 %v1134
          %v1263 = vunpack.c.l.b16 %v1135
          %v1264 = vunpack.c.l.b16 %v1136
          %v1265 = vunpack.c.l.b16 %v1137
          %v1266 = vunpack.c.l.b16 %v1138
          %v1267 = vunpack.c.l.b16 %v1139
          %v1268 = vunpack.c.l.b16 %v1140
          %v1269 = vunpack.c.l.b16 %v1141
          %v1270 = vunpack.c.l.b16 %v1142
          %v1271 = vunpack.c.l.b16 %v1143
          %v1272 = vunpack.c.l.b16 %v1144
          %v1273 = vunpack.c.l.b16 %v1145
          %v1274 = vunpack.c.l.b16 %v1146
          %v1275 = vunpack.c.l.b16 %v1147
          %v1276 = vunpack.c.l.b16 %v1148
          %v1277 = vunpack.c.l.b16 %v1149
          %v1278 = vunpack.c.l.b16 %v1150
          %v1279 = vunpack.c.l.b16 %v1151
          %v1280 = vunpack.c.l.b16 %v1152
          %v1281 = vunpack.c.l.b16 %v1153
          %v1282 = vunpack.c.l.b16 %v1154
          %v1283 = vunpack.c.l.b16 %v1155
          %v1284 = vunpack.c.l.b16 %v1156
          %v1285 = vunpack.c.l.b16 %v1157
          %v1286 = vunpack.c.l.b16 %v1158
          %v1287 = vunpack.c.l.b16 %v1159
          %v1288 = vunpack.c.l.b16 %v1160
          %v1289 = vunpack.c.l.b16 %v1161
          %v1290 = vunpack.c.l.b16 %v1162
          %v1291 = vunpack.c.l.b16 %v1163
          %v1292 = vunpack.c.l.b16 %v1164
          %v1293 = vunpack.c.l.b16 %v1165
          %v1294 = vunpack.c.l.b16 %v1166
          %v1295 = vunpack.c.l.b16 %v1167
          %v1296 = vunpack.c.l.b16 %v1168
          %v1297 = vunpack.c.l.b16 %v1169
          %v1298 = vunpack.c.l.b16 %v1170
          %v1299 = vpack.c.b16 %v1236, %v1235
          %v1300 = vpack.c.b16 %v1238, %v1237
          %v1301 = vpack.c.b16 %v1240, %v1239
          %v1302 = vpack.c.b16 %v1242, %v1241
          %v1303 = vpack.c.b16 %v1244, %v1243
          %v1304 = vpack.c.b16 %v1246, %v1245
          %v1305 = vpack.c.b16 %v1248, %v1247
          %v1306 = vpack.c.b16 %v1250, %v1249
          %v1307 = vpack.c.b16 %v1252, %v1251
          %v1308 = vpack.c.b16 %v1254, %v1253
          %v1309 = vpack.c.b16 %v1256, %v1255
          %v1310 = vpack.c.b16 %v1258, %v1257
          %v1311 = vpack.c.b16 %v1260, %v1259
          %v1312 = vpack.c.b16 %v1262, %v1261
          %v1313 = vpack.c.b16 %v1264, %v1263
          %v1314 = vpack.c.b16 %v1266, %v1265
          %v1315 = vpack.c.b16 %v1268, %v1267
          %v1316 = vpack.c.b16 %v1270, %v1269
          %v1317 = vpack.c.b16 %v1272, %v1271
          %v1318 = vpack.c.b16 %v1274, %v1273
          %v1319 = vpack.c.b16 %v1276, %v1275
          %v1320 = vpack.c.b16 %v1278, %v1277
          %v1321 = vpack.c.b16 %v1280, %v1279
          %v1322 = vpack.c.b16 %v1282, %v1281
          %v1323 = vpack.c.b16 %v1284, %v1283
          %v1324 = vpack.c.b16 %v1286, %v1285
          %v1325 = vpack.c.b16 %v1288, %v1287
          %v1326 = vpack.c.b16 %v1290, %v1289
          %v1327 = vpack.c.b16 %v1292, %v1291
          %v1328 = vpack.c.b16 %v1294, %v1293
          %v1329 = vpack.c.b16 %v1296, %v1295
          %v1330 = vpack.c.b16 %v1298, %v1297
          %1363 = vmatprep.subr.bf16.mxu0 0
          %1364 = vmatpush1.bf16.msra.mxu0 %v1299
          %1365 = vmatprep.subr.bf16.mxu0 0
          %1366 = vmatpush1.bf16.msra.mxu0 %v1300
          %1367 = vmatprep.subr.bf16.mxu0 0
          %1368 = vmatpush1.bf16.msra.mxu0 %v1301
          %1369 = vmatprep.subr.bf16.mxu0 0
          %1370 = vmatpush1.bf16.msra.mxu0 %v1302
          %1371 = vmatprep.subr.bf16.mxu0 0
          %1372 = vmatpush1.bf16.msra.mxu0 %v1303
          %1373 = vmatprep.subr.bf16.mxu0 0
          %1374 = vmatpush1.bf16.msra.mxu0 %v1304
          %1375 = vmatprep.subr.bf16.mxu0 0
          %1376 = vmatpush1.bf16.msra.mxu0 %v1305
          %1377 = vmatprep.subr.bf16.mxu0 0
          %1378 = vmatpush1.bf16.msra.mxu0 %v1306
          %1379 = vmatprep.subr.bf16.mxu0 0
          %1380 = vmatpush1.bf16.msra.mxu0 %v1307
          %1381 = vmatprep.subr.bf16.mxu0 0
          %1382 = vmatpush1.bf16.msra.mxu0 %v1308
          %1383 = vmatprep.subr.bf16.mxu0 0
          %1384 = vmatpush1.bf16.msra.mxu0 %v1309
          %1385 = vmatprep.subr.bf16.mxu0 0
          %1386 = vmatpush1.bf16.msra.mxu0 %v1310
          %1387 = vmatprep.subr.bf16.mxu0 0
          %1388 = vmatpush1.bf16.msra.mxu0 %v1311
          %1389 = vmatprep.subr.bf16.mxu0 0
          %1390 = vmatpush1.bf16.msra.mxu0 %v1312
          %1391 = vmatprep.subr.bf16.mxu0 0
          %1392 = vmatpush1.bf16.msra.mxu0 %v1313
          %1393 = vmatprep.subr.bf16.mxu0 0
          %1394 = vmatpush1.bf16.msra.mxu0 %v1314
          %1395 = vmatprep.mubr.bf16.mxu0 %v1012
          %1396 = vmatmul.mubr.bf16.gmra.mrb[0].mxu0 %v1011
          %v1397 = vpop.f32.mrb[0].mxu0
          %v1398 = vadd.f32 0.0, %v1397
          %v1399 = vpop.f32.mrb[0].mxu0
          %v1400 = vpop.f32.mrb[0].mxu0
          %v1401 = vadd.f32 0.0, %v1400
          %v1402 = vpop.f32.mrb[0].mxu0
          %1403 = vmatprep.mubr.bf16.mxu0 %v1016
          %1404 = vmatmul.mubr.bf16.gmra.mrb[0].mxu0 %v1015
          %v1405 = vpop.f32.mrb[0].mxu0
          %v1406 = vadd.f32 0.0, %v1405
          %v1407 = vpop.f32.mrb[0].mxu0
          %v1408 = vpop.f32.mrb[0].mxu0
          %v1409 = vadd.f32 0.0, %v1408
          %v1410 = vpop.f32.mrb[0].mxu0
          %1411 = vmatprep.mubr.bf16.mxu0 %v1020
          %1412 = vmatmul.mubr.bf16.gmra.mrb[0].mxu0 %v1019
          %v1413 = vpop.f32.mrb[0].mxu0
          %v1414 = vadd.f32 0.0, %v1413
          %v1415 = vpop.f32.mrb[0].mxu0
          %v1416 = vpop.f32.mrb[0].mxu0
          %v1417 = vadd.f32 0.0, %v1416
          %v1418 = vpop.f32.mrb[0].mxu0
          %1419 = vmatprep.mubr.bf16.mxu0 %v1024
          %1420 = vmatmul.mubr.bf16.gmra.mrb[0].mxu0 %v1023
          %v1421 = vpop.f32.mrb[0].mxu0
          %v1422 = vadd.f32 0.0, %v1421
          %v1423 = vpop.f32.mrb[0].mxu0
          %v1424 = vpop.f32.mrb[0].mxu0
          %v1425 = vadd.f32 0.0, %v1424
          %v1426 = vpop.f32.mrb[0].mxu0
          %1427 = vmatprep.mubr.bf16.mxu0 %v1028
          %1428 = vmatmul.mubr.bf16.gmra.mrb[0].mxu0 %v1027
          %v1429 = vpop.f32.mrb[0].mxu0
          %v1430 = vadd.f32 0.0, %v1429
          %v1431 = vpop.f32.mrb[0].mxu0
          %v1432 = vpop.f32.mrb[0].mxu0
          %v1433 = vadd.f32 0.0, %v1432
          %v1434 = vpop.f32.mrb[0].mxu0
          %1435 = vmatprep.mubr.bf16.mxu0 %v1032
          %1436 = vmatmul.mubr.bf16.gmra.mrb[0].mxu0 %v1031
          %v1437 = vpop.f32.mrb[0].mxu0
          %v1438 = vadd.f32 0.0, %v1437
          %v1439 = vpop.f32.mrb[0].mxu0
          %v1440 = vpop.f32.mrb[0].mxu0
          %v1441 = vadd.f32 0.0, %v1440
          %v1442 = vpop.f32.mrb[0].mxu0
          %1443 = vmatprep.mubr.bf16.mxu0 %v1036
          %1444 = vmatmul.mubr.bf16.gmra.mrb[0].mxu0 %v1035
          %v1445 = vpop.f32.mrb[0].mxu0
          %v1446 = vadd.f32 0.0, %v1445
          %v1447 = vpop.f32.mrb[0].mxu0
          %v1448 = vpop.f32.mrb[0].mxu0
          %v1449 = vadd.f32 0.0, %v1448
          %v1450 = vpop.f32.mrb[0].mxu0
          %1451 = vmatprep.mubr.bf16.mxu0 %v1040
          %1452 = vmatmul.mubr.bf16.gmra.mrb[0].mxu0 %v1039
          %v1453 = vpop.f32.mrb[0].mxu0
          %v1454 = vadd.f32 0.0, %v1453
          %v1455 = vpop.f32.mrb[0].mxu0
          %v1456 = vpop.f32.mrb[0].mxu0
          %v1457 = vadd.f32 0.0, %v1456
          %v1458 = vpop.f32.mrb[0].mxu0
          %1459 = vmatprep.mubr.bf16.mxu0 %v1044
          %1460 = vmatmul.mubr.bf16.gmra.mrb[0].mxu0 %v1043
          %v1461 = vpop.f32.mrb[0].mxu0
          %v1462 = vadd.f32 0.0, %v1461
          %v1463 = vpop.f32.mrb[0].mxu0
          %v1464 = vpop.f32.mrb[0].mxu0
          %v1465 = vadd.f32 0.0, %v1464
          %v1466 = vpop.f32.mrb[0].mxu0
          %1467 = vmatprep.mubr.bf16.mxu0 %v1048
          %1468 = vmatmul.mubr.bf16.gmra.mrb[0].mxu0 %v1047
          %v1469 = vpop.f32.mrb[0].mxu0
          %v1470 = vadd.f32 0.0, %v1469
          %v1471 = vpop.f32.mrb[0].mxu0
          %v1472 = vpop.f32.mrb[0].mxu0
          %v1473 = vadd.f32 0.0, %v1472
          %v1474 = vpop.f32.mrb[0].mxu0
          %1475 = vmatprep.mubr.bf16.mxu0 %v1052
          %1476 = vmatmul.mubr.bf16.gmra.mrb[0].mxu0 %v1051
          %v1477 = vpop.f32.mrb[0].mxu0
          %v1478 = vadd.f32 0.0, %v1477
          %v1479 = vpop.f32.mrb[0].mxu0
          %v1480 = vpop.f32.mrb[0].mxu0
          %v1481 = vadd.f32 0.0, %v1480
          %v1482 = vpop.f32.mrb[0].mxu0
          %1483 = vmatprep.mubr.bf16.mxu0 %v1056
          %1484 = vmatmul.mubr.bf16.gmra.mrb[0].mxu0 %v1055
          %v1485 = vpop.f32.mrb[0].mxu0
          %v1486 = vadd.f32 0.0, %v1485
          %v1487 = vpop.f32.mrb[0].mxu0
          %v1488 = vpop.f32.mrb[0].mxu0
          %v1489 = vadd.f32 0.0, %v1488
          %v1490 = vpop.f32.mrb[0].mxu0
          %1491 = vmatprep.mubr.bf16.mxu0 %v1060
          %1492 = vmatmul.mubr.bf16.gmra.mrb[0].mxu0 %v1059
          %v1493 = vpop.f32.mrb[0].mxu0
          %v1494 = vadd.f32 0.0, %v1493
          %v1495 = vpop.f32.mrb[0].mxu0
          %v1496 = vpop.f32.mrb[0].mxu0
          %v1497 = vadd.f32 0.0, %v1496
          %v1498 = vpop.f32.mrb[0].mxu0
          %1499 = vmatprep.mubr.bf16.mxu0 %v1064
          %1500 = vmatmul.mubr.bf16.gmra.mrb[0].mxu0 %v1063
          %v1501 = vpop.f32.mrb[0].mxu0
          %v1502 = vadd.f32 0.0, %v1501
          %v1503 = vpop.f32.mrb[0].mxu0
          %v1504 = vpop.f32.mrb[0].mxu0
          %v1505 = vadd.f32 0.0, %v1504
          %v1506 = vpop.f32.mrb[0].mxu0
          %1507 = vmatprep.mubr.bf16.mxu0 %v1068
          %1508 = vmatmul.mubr.bf16.gmra.mrb[0].mxu0 %v1067
          %v1509 = vpop.f32.mrb[0].mxu0
          %v1510 = vadd.f32 0.0, %v1509
          %v1511 = vpop.f32.mrb[0].mxu0
          %v1512 = vpop.f32.mrb[0].mxu0
          %v1513 = vadd.f32 0.0, %v1512
          %v1514 = vpop.f32.mrb[0].mxu0
          %1515 = vmatprep.mubr.bf16.mxu0 %v1072
          %1516 = vmatmul.mubr.bf16.gmra.mrb[0].mxu0 %v1071
          %v1517 = vpop.f32.mrb[0].mxu0
          %v1518 = vadd.f32 0.0, %v1517
          %v1519 = vpop.f32.mrb[0].mxu0
          %v1520 = vpop.f32.mrb[0].mxu0
          %v1521 = vadd.f32 0.0, %v1520
          %v1522 = vpop.f32.mrb[0].mxu0
          %1523 = vdwg.mxu0
          %1524 = vmatprep.subr.bf16.mxu0 0
          %1525 = vmatpush1.bf16.msra.mxu0 %v1315
          %1526 = vmatprep.subr.bf16.mxu0 0
          %1527 = vmatpush1.bf16.msra.mxu0 %v1316
          %1528 = vmatprep.subr.bf16.mxu0 0
          %1529 = vmatpush1.bf16.msra.mxu0 %v1317
          %1530 = vmatprep.subr.bf16.mxu0 0
          %1531 = vmatpush1.bf16.msra.mxu0 %v1318
          %1532 = vmatprep.subr.bf16.mxu0 0
          %1533 = vmatpush1.bf16.msra.mxu0 %v1319
          %1534 = vmatprep.subr.bf16.mxu0 0
          %1535 = vmatpush1.bf16.msra.mxu0 %v1320
          %1536 = vmatprep.subr.bf16.mxu0 0
          %1537 = vmatpush1.bf16.msra.mxu0 %v1321
          %1538 = vmatprep.subr.bf16.mxu0 0
          %1539 = vmatpush1.bf16.msra.mxu0 %v1322
          %1540 = vmatprep.subr.bf16.mxu0 0
          %1541 = vmatpush1.bf16.msra.mxu0 %v1323
          %1542 = vmatprep.subr.bf16.mxu0 0
          %1543 = vmatpush1.bf16.msra.mxu0 %v1324
          %1544 = vmatprep.subr.bf16.mxu0 0
          %1545 = vmatpush1.bf16.msra.mxu0 %v1325
          %1546 = vmatprep.subr.bf16.mxu0 0
          %1547 = vmatpush1.bf16.msra.mxu0 %v1326
          %1548 = vmatprep.subr.bf16.mxu0 0
          %1549 = vmatpush1.bf16.msra.mxu0 %v1327
          %1550 = vmatprep.subr.bf16.mxu0 0
          %1551 = vmatpush1.bf16.msra.mxu0 %v1328
          %1552 = vmatprep.subr.bf16.mxu0 0
          %1553 = vmatpush1.bf16.msra.mxu0 %v1329
          %1554 = vmatprep.subr.bf16.mxu0 0
          %1555 = vmatpush1.bf16.msra.mxu0 %v1330
          %1556 = vmatprep.mubr.bf16.mxu0 %v1014
          %1557 = vmatmul.mubr.bf16.gmra.mrb[0].mxu0 %v1013
          %v1558 = vpop.f32.mrb[0].mxu0
          %v1559 = vadd.f32 %v1398, %v1558
          %v1560 = vpop.f32.mrb[0].mxu0
          %v1561 = vpop.f32.mrb[0].mxu0
          %v1562 = vadd.f32 %v1401, %v1561
          %v1563 = vpop.f32.mrb[0].mxu0
          %1564 = vmatprep.mubr.bf16.mxu0 %v1018
          %1565 = vmatmul.mubr.bf16.gmra.mrb[0].mxu0 %v1017
          %v1566 = vpop.f32.mrb[0].mxu0
          %v1567 = vadd.f32 %v1406, %v1566
          %v1568 = vpop.f32.mrb[0].mxu0
          %v1569 = vpop.f32.mrb[0].mxu0
          %v1570 = vadd.f32 %v1409, %v1569
          %v1571 = vpop.f32.mrb[0].mxu0
          %1572 = vmatprep.mubr.bf16.mxu0 %v1022
          %1573 = vmatmul.mubr.bf16.gmra.mrb[0].mxu0 %v1021
          %v1574 = vpop.f32.mrb[0].mxu0
          %v1575 = vadd.f32 %v1414, %v1574
          %v1576 = vpop.f32.mrb[0].mxu0
          %v1577 = vpop.f32.mrb[0].mxu0
          %v1578 = vadd.f32 %v1417, %v1577
          %v1579 = vpop.f32.mrb[0].mxu0
          %1580 = vmatprep.mubr.bf16.mxu0 %v1026
          %1581 = vmatmul.mubr.bf16.gmra.mrb[0].mxu0 %v1025
          %v1582 = vpop.f32.mrb[0].mxu0
          %v1583 = vadd.f32 %v1422, %v1582
          %v1584 = vpop.f32.mrb[0].mxu0
          %v1585 = vpop.f32.mrb[0].mxu0
          %v1586 = vadd.f32 %v1425, %v1585
          %v1587 = vpop.f32.mrb[0].mxu0
          %1588 = vmatprep.mubr.bf16.mxu0 %v1030
          %1589 = vmatmul.mubr.bf16.gmra.mrb[0].mxu0 %v1029
          %v1590 = vpop.f32.mrb[0].mxu0
          %v1591 = vadd.f32 %v1430, %v1590
          %v1592 = vpop.f32.mrb[0].mxu0
          %v1593 = vpop.f32.mrb[0].mxu0
          %v1594 = vadd.f32 %v1433, %v1593
          %v1595 = vpop.f32.mrb[0].mxu0
          %1596 = vmatprep.mubr.bf16.mxu0 %v1034
          %1597 = vmatmul.mubr.bf16.gmra.mrb[0].mxu0 %v1033
          %v1598 = vpop.f32.mrb[0].mxu0
          %v1599 = vadd.f32 %v1438, %v1598
          %v1600 = vpop.f32.mrb[0].mxu0
          %v1601 = vpop.f32.mrb[0].mxu0
          %v1602 = vadd.f32 %v1441, %v1601
          %v1603 = vpop.f32.mrb[0].mxu0
          %1604 = vmatprep.mubr.bf16.mxu0 %v1038
          %1605 = vmatmul.mubr.bf16.gmra.mrb[0].mxu0 %v1037
          %v1606 = vpop.f32.mrb[0].mxu0
          %v1607 = vadd.f32 %v1446, %v1606
          %v1608 = vpop.f32.mrb[0].mxu0
          %v1609 = vpop.f32.mrb[0].mxu0
          %v1610 = vadd.f32 %v1449, %v1609
          %v1611 = vpop.f32.mrb[0].mxu0
          %1612 = vmatprep.mubr.bf16.mxu0 %v1042
          %1613 = vmatmul.mubr.bf16.gmra.mrb[0].mxu0 %v1041
          %v1614 = vpop.f32.mrb[0].mxu0
          %v1615 = vadd.f32 %v1454, %v1614
          %v1616 = vpop.f32.mrb[0].mxu0
          %v1617 = vpop.f32.mrb[0].mxu0
          %v1618 = vadd.f32 %v1457, %v1617
          %v1619 = vpop.f32.mrb[0].mxu0
          %1620 = vmatprep.mubr.bf16.mxu0 %v1046
          %1621 = vmatmul.mubr.bf16.gmra.mrb[0].mxu0 %v1045
          %v1622 = vpop.f32.mrb[0].mxu0
          %v1623 = vadd.f32 %v1462, %v1622
          %v1624 = vpop.f32.mrb[0].mxu0
          %v1625 = vpop.f32.mrb[0].mxu0
          %v1626 = vadd.f32 %v1465, %v1625
          %v1627 = vpop.f32.mrb[0].mxu0
          %1628 = vmatprep.mubr.bf16.mxu0 %v1050
          %1629 = vmatmul.mubr.bf16.gmra.mrb[0].mxu0 %v1049
          %v1630 = vpop.f32.mrb[0].mxu0
          %v1631 = vadd.f32 %v1470, %v1630
          %v1632 = vpop.f32.mrb[0].mxu0
          %v1633 = vpop.f32.mrb[0].mxu0
          %v1634 = vadd.f32 %v1473, %v1633
          %v1635 = vpop.f32.mrb[0].mxu0
          %1636 = vmatprep.mubr.bf16.mxu0 %v1054
          %1637 = vmatmul.mubr.bf16.gmra.mrb[0].mxu0 %v1053
          %v1638 = vpop.f32.mrb[0].mxu0
          %v1639 = vadd.f32 %v1478, %v1638
          %v1640 = vpop.f32.mrb[0].mxu0
          %v1641 = vpop.f32.mrb[0].mxu0
          %v1642 = vadd.f32 %v1481, %v1641
          %v1643 = vpop.f32.mrb[0].mxu0
          %1644 = vmatprep.mubr.bf16.mxu0 %v1058
          %1645 = vmatmul.mubr.bf16.gmra.mrb[0].mxu0 %v1057
          %v1646 = vpop.f32.mrb[0].mxu0
          %v1647 = vadd.f32 %v1486, %v1646
          %v1648 = vpop.f32.mrb[0].mxu0
          %v1649 = vpop.f32.mrb[0].mxu0
          %v1650 = vadd.f32 %v1489, %v1649
          %v1651 = vpop.f32.mrb[0].mxu0
          %1652 = vmatprep.mubr.bf16.mxu0 %v1062
          %1653 = vmatmul.mubr.bf16.gmra.mrb[0].mxu0 %v1061
          %v1654 = vpop.f32.mrb[0].mxu0
          %v1655 = vadd.f32 %v1494, %v1654
          %v1656 = vpop.f32.mrb[0].mxu0
          %v1657 = vpop.f32.mrb[0].mxu0
          %v1658 = vadd.f32 %v1497, %v1657
          %v1659 = vpop.f32.mrb[0].mxu0
          %1660 = vmatprep.mubr.bf16.mxu0 %v1066
          %1661 = vmatmul.mubr.bf16.gmra.mrb[0].mxu0 %v1065
          %v1662 = vpop.f32.mrb[0].mxu0
          %v1663 = vadd.f32 %v1502, %v1662
          %v1664 = vpop.f32.mrb[0].mxu0
          %v1665 = vpop.f32.mrb[0].mxu0
          %v1666 = vadd.f32 %v1505, %v1665
          %v1667 = vpop.f32.mrb[0].mxu0
          %1668 = vmatprep.mubr.bf16.mxu0 %v1070
          %1669 = vmatmul.mubr.bf16.gmra.mrb[0].mxu0 %v1069
          %v1670 = vpop.f32.mrb[0].mxu0
          %v1671 = vadd.f32 %v1510, %v1670
          %v1672 = vpop.f32.mrb[0].mxu0
          %v1673 = vpop.f32.mrb[0].mxu0
          %v1674 = vadd.f32 %v1513, %v1673
          %v1675 = vpop.f32.mrb[0].mxu0
          %1676 = vmatprep.mubr.bf16.mxu0 %v1074
          %1677 = vmatmul.mubr.bf16.gmra.mrb[0].mxu0 %v1073
          %v1678 = vpop.f32.mrb[0].mxu0
          %v1679 = vadd.f32 %v1518, %v1678
          %v1680 = vpop.f32.mrb[0].mxu0
          %v1681 = vpop.f32.mrb[0].mxu0
          %v1682 = vadd.f32 %v1521, %v1681
          %v1683 = vpop.f32.mrb[0].mxu0
          %1684 = vdwg.mxu0
          %v1685 = vadd.f32 %v1075, %v1559
          %v1686 = vadd.f32 %v1076, %v1562
          %v1687 = vadd.f32 %v1077, %v1567
          %v1688 = vadd.f32 %v1078, %v1570
          %v1689 = vadd.f32 %v1079, %v1575
          %v1690 = vadd.f32 %v1080, %v1578
          %v1691 = vadd.f32 %v1081, %v1583
          %v1692 = vadd.f32 %v1082, %v1586
          %v1693 = vadd.f32 %v1083, %v1591
          %v1694 = vadd.f32 %v1084, %v1594
          %v1695 = vadd.f32 %v1085, %v1599
          %v1696 = vadd.f32 %v1086, %v1602
          %v1697 = vadd.f32 %v1087, %v1607
          %v1698 = vadd.f32 %v1088, %v1610
          %v1699 = vadd.f32 %v1089, %v1615
          %v1700 = vadd.f32 %v1090, %v1618
          %v1701 = vadd.f32 %v1091, %v1623
          %v1702 = vadd.f32 %v1092, %v1626
          %v1703 = vadd.f32 %v1093, %v1631
          %v1704 = vadd.f32 %v1094, %v1634
          %v1705 = vadd.f32 %v1095, %v1639
          %v1706 = vadd.f32 %v1096, %v1642
          %v1707 = vadd.f32 %v1097, %v1647
          %v1708 = vadd.f32 %v1098, %v1650
          %v1709 = vadd.f32 %v1099, %v1655
          %v1710 = vadd.f32 %v1100, %v1658
          %v1711 = vadd.f32 %v1101, %v1663
          %v1712 = vadd.f32 %v1102, %v1666
          %v1713 = vadd.f32 %v1103, %v1671
          %v1714 = vadd.f32 %v1104, %v1674
          %v1715 = vadd.f32 %v1105, %v1679
          %v1716 = vadd.f32 %v1106, %v1682
          %1717 = vst [vmem:[#allocation2] sm:$0xff] %v1685
          %1718 = vst [vmem:[#allocation2 + $0x8] sm:$0xff] %v1686
          %1719 = vst [vmem:[#allocation2 + $0x10] sm:$0xff] %v1687
          %1720 = vst [vmem:[#allocation2 + $0x18] sm:$0xff] %v1688
          %1721 = vst [vmem:[#allocation2 + $0x20] sm:$0xff] %v1689
          %1722 = vst [vmem:[#allocation2 + $0x28] sm:$0xff] %v1690
          %1723 = vst [vmem:[#allocation2 + $0x30] sm:$0xff] %v1691
          %1724 = vst [vmem:[#allocation2 + $0x38] sm:$0xff] %v1692
          %1725 = vst [vmem:[#allocation2 + $0x40] sm:$0xff] %v1693
          %1726 = vst [vmem:[#allocation2 + $0x48] sm:$0xff] %v1694
          %1727 = vst [vmem:[#allocation2 + $0x50] sm:$0xff] %v1695
          %1728 = vst [vmem:[#allocation2 + $0x58] sm:$0xff] %v1696
          %1729 = vst [vmem:[#allocation2 + $0x60] sm:$0xff] %v1697
          %1730 = vst [vmem:[#allocation2 + $0x68] sm:$0xff] %v1698
          %1731 = vst [vmem:[#allocation2 + $0x70] sm:$0xff] %v1699
          %1732 = vst [vmem:[#allocation2 + $0x78] sm:$0xff] %v1700
          %1733 = vst [vmem:[#allocation2 + $0x80] sm:$0xff] %v1701
          %1734 = vst [vmem:[#allocation2 + $0x88] sm:$0xff] %v1702
          %1735 = vst [vmem:[#allocation2 + $0x90] sm:$0xff] %v1703
          %1736 = vst [vmem:[#allocation2 + $0x98] sm:$0xff] %v1704
          %1737 = vst [vmem:[#allocation2 + $0xa0] sm:$0xff] %v1705
          %1738 = vst [vmem:[#allocation2 + $0xa8] sm:$0xff] %v1706
          %1739 = vst [vmem:[#allocation2 + $0xb0] sm:$0xff] %v1707
          %1740 = vst [vmem:[#allocation2 + $0xb8] sm:$0xff] %v1708
          %1741 = vst [vmem:[#allocation2 + $0xc0] sm:$0xff] %v1709
          %1742 = vst [vmem:[#allocation2 + $0xc8] sm:$0xff] %v1710
          %1743 = vst [vmem:[#allocation2 + $0xd0] sm:$0xff] %v1711
          %1744 = vst [vmem:[#allocation2 + $0xd8] sm:$0xff] %v1712
          %1745 = vst [vmem:[#allocation2 + $0xe0] sm:$0xff] %v1713
          %1746 = vst [vmem:[#allocation2 + $0xe8] sm:$0xff] %v1714
          %1747 = vst [vmem:[#allocation2 + $0xf0] sm:$0xff] %v1715
          %1748 = vst [vmem:[#allocation2 + $0xf8] sm:$0xff] %v1716
        $region72: #{tpu_custom_call.1} parent=51 // pred_fallthru
          _
        %p1749 = scmp.eq.s32.totalorder %s47, 1
        // Predicated region
        $region73: #{tpu_custom_call.1} parent=51 // pred_check
          %p1750 = pneg %p1749
        $region74: #{tpu_custom_call.1} parent=51 // pred_check_branch
          %1752 = sbr.rel (%p1750) target = $region76
        $region75: #{tpu_custom_call.1} parent=51 // pred_region
          %v1753 = vld [vmem:[#allocation2] sm:$0xff]
          %v1754 = vld [vmem:[#allocation2 + $0x8] sm:$0xff]
          %v1755 = vld [vmem:[#allocation2 + $0x10] sm:$0xff]
          %v1756 = vld [vmem:[#allocation2 + $0x18] sm:$0xff]
          %v1757 = vld [vmem:[#allocation2 + $0x20] sm:$0xff]
          %v1758 = vld [vmem:[#allocation2 + $0x28] sm:$0xff]
          %v1759 = vld [vmem:[#allocation2 + $0x30] sm:$0xff]
          %v1760 = vld [vmem:[#allocation2 + $0x38] sm:$0xff]
          %v1761 = vld [vmem:[#allocation2 + $0x40] sm:$0xff]
          %v1762 = vld [vmem:[#allocation2 + $0x48] sm:$0xff]
          %v1763 = vld [vmem:[#allocation2 + $0x50] sm:$0xff]
          %v1764 = vld [vmem:[#allocation2 + $0x58] sm:$0xff]
          %v1765 = vld [vmem:[#allocation2 + $0x60] sm:$0xff]
          %v1766 = vld [vmem:[#allocation2 + $0x68] sm:$0xff]
          %v1767 = vld [vmem:[#allocation2 + $0x70] sm:$0xff]
          %v1768 = vld [vmem:[#allocation2 + $0x78] sm:$0xff]
          %v1769 = vld [vmem:[#allocation2 + $0x80] sm:$0xff]
          %v1770 = vld [vmem:[#allocation2 + $0x88] sm:$0xff]
          %v1771 = vld [vmem:[#allocation2 + $0x90] sm:$0xff]
          %v1772 = vld [vmem:[#allocation2 + $0x98] sm:$0xff]
          %v1773 = vld [vmem:[#allocation2 + $0xa0] sm:$0xff]
          %v1774 = vld [vmem:[#allocation2 + $0xa8] sm:$0xff]
          %v1775 = vld [vmem:[#allocation2 + $0xb0] sm:$0xff]
          %v1776 = vld [vmem:[#allocation2 + $0xb8] sm:$0xff]
          %v1777 = vld [vmem:[#allocation2 + $0xc0] sm:$0xff]
          %v1778 = vld [vmem:[#allocation2 + $0xc8] sm:$0xff]
          %v1779 = vld [vmem:[#allocation2 + $0xd0] sm:$0xff]
          %v1780 = vld [vmem:[#allocation2 + $0xd8] sm:$0xff]
          %v1781 = vld [vmem:[#allocation2 + $0xe0] sm:$0xff]
          %v1782 = vld [vmem:[#allocation2 + $0xe8] sm:$0xff]
          %v1783 = vld [vmem:[#allocation2 + $0xf0] sm:$0xff]
          %v1784 = vld [vmem:[#allocation2 + $0xf8] sm:$0xff]
          %v1785 = vmax.f32 %v1753, 1.0
          %v1786 = vmax.f32 %v1754, 1.0
          %v1787 = vmax.f32 %v1755, 1.0
          %v1788 = vmax.f32 %v1756, 1.0
          %v1789 = vmax.f32 %v1757, 1.0
          %v1790 = vmax.f32 %v1758, 1.0
          %v1791 = vmax.f32 %v1759, 1.0
          %v1792 = vmax.f32 %v1760, 1.0
          %v1793 = vmax.f32 %v1761, 1.0
          %v1794 = vmax.f32 %v1762, 1.0
          %v1795 = vmax.f32 %v1763, 1.0
          %v1796 = vmax.f32 %v1764, 1.0
          %v1797 = vmax.f32 %v1765, 1.0
          %v1798 = vmax.f32 %v1766, 1.0
          %v1799 = vmax.f32 %v1767, 1.0
          %v1800 = vmax.f32 %v1768, 1.0
          %v1801 = vmax.f32 %v1769, 1.0
          %v1802 = vmax.f32 %v1770, 1.0
          %v1803 = vmax.f32 %v1771, 1.0
          %v1804 = vmax.f32 %v1772, 1.0
          %v1805 = vmax.f32 %v1773, 1.0
          %v1806 = vmax.f32 %v1774, 1.0
          %v1807 = vmax.f32 %v1775, 1.0
          %v1808 = vmax.f32 %v1776, 1.0
          %v1809 = vmax.f32 %v1777, 1.0
          %v1810 = vmax.f32 %v1778, 1.0
          %v1811 = vmax.f32 %v1779, 1.0
          %v1812 = vmax.f32 %v1780, 1.0
          %v1813 = vmax.f32 %v1781, 1.0
          %v1814 = vmax.f32 %v1782, 1.0
          %v1815 = vmax.f32 %v1783, 1.0
          %v1816 = vmax.f32 %v1784, 1.0
          %v1817 = vrcp.pop %v1785
          %v1818 = vrcp.pop %v1786
          %v1819 = vrcp.pop %v1787
          %v1820 = vrcp.pop %v1788
          %v1821 = vrcp.pop %v1789
          %v1822 = vrcp.pop %v1790
          %v1823 = vrcp.pop %v1791
          %v1824 = vrcp.pop %v1792
          %v1825 = vrcp.pop %v1793
          %v1826 = vrcp.pop %v1794
          %v1827 = vrcp.pop %v1795
          %v1828 = vrcp.pop %v1796
          %v1829 = vrcp.pop %v1797
          %v1830 = vrcp.pop %v1798
          %v1831 = vrcp.pop %v1799
          %v1832 = vrcp.pop %v1800
          %v1833 = vrcp.pop %v1801
          %v1834 = vrcp.pop %v1802
          %v1835 = vrcp.pop %v1803
          %v1836 = vrcp.pop %v1804
          %v1837 = vrcp.pop %v1805
          %v1838 = vrcp.pop %v1806
          %v1839 = vrcp.pop %v1807
          %v1840 = vrcp.pop %v1808
          %v1841 = vrcp.pop %v1809
          %v1842 = vrcp.pop %v1810
          %v1843 = vrcp.pop %v1811
          %v1844 = vrcp.pop %v1812
          %v1845 = vrcp.pop %v1813
          %v1846 = vrcp.pop %v1814
          %v1847 = vrcp.pop %v1815
          %v1848 = vrcp.pop %v1816
          %1850 = vset.pattern.permute.xlu0 127
          %1851 = vperm.xlu0 %1850, %v1817
          %v1852 = vpop.permute.xlu0 %1851
          %1855 = vset.pattern.permute.xlu0 127
          %1856 = vperm.xlu0 %1855, %v1818
          %v1857 = vpop.permute.xlu0 %1856
          %1860 = vset.pattern.permute.xlu0 127
          %1861 = vperm.xlu0 %1860, %v1819
          %v1862 = vpop.permute.xlu0 %1861
          %1865 = vset.pattern.permute.xlu0 127
          %1866 = vperm.xlu0 %1865, %v1820
          %v1867 = vpop.permute.xlu0 %1866
          %1870 = vset.pattern.permute.xlu0 127
          %1871 = vperm.xlu0 %1870, %v1821
          %v1872 = vpop.permute.xlu0 %1871
          %1875 = vset.pattern.permute.xlu0 127
          %1876 = vperm.xlu0 %1875, %v1822
          %v1877 = vpop.permute.xlu0 %1876
          %1880 = vset.pattern.permute.xlu0 127
          %1881 = vperm.xlu0 %1880, %v1823
          %v1882 = vpop.permute.xlu0 %1881
          %1885 = vset.pattern.permute.xlu0 127
          %1886 = vperm.xlu0 %1885, %v1824
          %v1887 = vpop.permute.xlu0 %1886
          %1890 = vset.pattern.permute.xlu0 127
          %1891 = vperm.xlu0 %1890, %v1825
          %v1892 = vpop.permute.xlu0 %1891
          %1895 = vset.pattern.permute.xlu0 127
          %1896 = vperm.xlu0 %1895, %v1826
          %v1897 = vpop.permute.xlu0 %1896
          %1900 = vset.pattern.permute.xlu0 127
          %1901 = vperm.xlu0 %1900, %v1827
          %v1902 = vpop.permute.xlu0 %1901
          %1905 = vset.pattern.permute.xlu0 127
          %1906 = vperm.xlu0 %1905, %v1828
          %v1907 = vpop.permute.xlu0 %1906
          %1910 = vset.pattern.permute.xlu0 127
          %1911 = vperm.xlu0 %1910, %v1829
          %v1912 = vpop.permute.xlu0 %1911
          %1915 = vset.pattern.permute.xlu0 127
          %1916 = vperm.xlu0 %1915, %v1830
          %v1917 = vpop.permute.xlu0 %1916
          %1920 = vset.pattern.permute.xlu0 127
          %1921 = vperm.xlu0 %1920, %v1831
          %v1922 = vpop.permute.xlu0 %1921
          %1925 = vset.pattern.permute.xlu0 127
          %1926 = vperm.xlu0 %1925, %v1832
          %v1927 = vpop.permute.xlu0 %1926
          %1930 = vset.pattern.permute.xlu0 127
          %1931 = vperm.xlu0 %1930, %v1833
          %v1932 = vpop.permute.xlu0 %1931
          %1935 = vset.pattern.permute.xlu0 127
          %1936 = vperm.xlu0 %1935, %v1834
          %v1937 = vpop.permute.xlu0 %1936
          %1940 = vset.pattern.permute.xlu0 127
          %1941 = vperm.xlu0 %1940, %v1835
          %v1942 = vpop.permute.xlu0 %1941
          %1945 = vset.pattern.permute.xlu0 127
          %1946 = vperm.xlu0 %1945, %v1836
          %v1947 = vpop.permute.xlu0 %1946
          %1950 = vset.pattern.permute.xlu0 127
          %1951 = vperm.xlu0 %1950, %v1837
          %v1952 = vpop.permute.xlu0 %1951
          %1955 = vset.pattern.permute.xlu0 127
          %1956 = vperm.xlu0 %1955, %v1838
          %v1957 = vpop.permute.xlu0 %1956
          %1960 = vset.pattern.permute.xlu0 127
          %1961 = vperm.xlu0 %1960, %v1839
          %v1962 = vpop.permute.xlu0 %1961
          %1965 = vset.pattern.permute.xlu0 127
          %1966 = vperm.xlu0 %1965, %v1840
          %v1967 = vpop.permute.xlu0 %1966
          %1970 = vset.pattern.permute.xlu0 127
          %1971 = vperm.xlu0 %1970, %v1841
          %v1972 = vpop.permute.xlu0 %1971
          %1975 = vset.pattern.permute.xlu0 127
          %1976 = vperm.xlu0 %1975, %v1842
          %v1977 = vpop.permute.xlu0 %1976
          %1980 = vset.pattern.permute.xlu0 127
          %1981 = vperm.xlu0 %1980, %v1843
          %v1982 = vpop.permute.xlu0 %1981
          %1985 = vset.pattern.permute.xlu0 127
          %1986 = vperm.xlu0 %1985, %v1844
          %v1987 = vpop.permute.xlu0 %1986
          %1990 = vset.pattern.permute.xlu0 127
          %1991 = vperm.xlu0 %1990, %v1845
          %v1992 = vpop.permute.xlu0 %1991
          %1995 = vset.pattern.permute.xlu0 127
          %1996 = vperm.xlu0 %1995, %v1846
          %v1997 = vpop.permute.xlu0 %1996
          %2000 = vset.pattern.permute.xlu0 127
          %2001 = vperm.xlu0 %2000, %v1847
          %v2002 = vpop.permute.xlu0 %2001
          %2005 = vset.pattern.permute.xlu0 127
          %2006 = vperm.xlu0 %2005, %v1848
          %v2007 = vpop.permute.xlu0 %2006
          %v2009 = vmul.f32 %v1753, %v1852
          %v2010 = vmul.f32 %v1754, %v1857
          %v2011 = vmul.f32 %v1755, %v1862
          %v2012 = vmul.f32 %v1756, %v1867
          %v2013 = vmul.f32 %v1757, %v1872
          %v2014 = vmul.f32 %v1758, %v1877
          %v2015 = vmul.f32 %v1759, %v1882
          %v2016 = vmul.f32 %v1760, %v1887
          %v2017 = vmul.f32 %v1761, %v1892
          %v2018 = vmul.f32 %v1762, %v1897
          %v2019 = vmul.f32 %v1763, %v1902
          %v2020 = vmul.f32 %v1764, %v1907
          %v2021 = vmul.f32 %v1765, %v1912
          %v2022 = vmul.f32 %v1766, %v1917
          %v2023 = vmul.f32 %v1767, %v1922
          %v2024 = vmul.f32 %v1768, %v1927
          %v2025 = vmul.f32 %v1769, %v1932
          %v2026 = vmul.f32 %v1770, %v1937
          %v2027 = vmul.f32 %v1771, %v1942
          %v2028 = vmul.f32 %v1772, %v1947
          %v2029 = vmul.f32 %v1773, %v1952
          %v2030 = vmul.f32 %v1774, %v1957
          %v2031 = vmul.f32 %v1775, %v1962
          %v2032 = vmul.f32 %v1776, %v1967
          %v2033 = vmul.f32 %v1777, %v1972
          %v2034 = vmul.f32 %v1778, %v1977
          %v2035 = vmul.f32 %v1779, %v1982
          %v2036 = vmul.f32 %v1780, %v1987
          %v2037 = vmul.f32 %v1781, %v1992
          %v2038 = vmul.f32 %v1782, %v1997
          %v2039 = vmul.f32 %v1783, %v2002
          %v2040 = vmul.f32 %v1784, %v2007
          %v2041 = vld [vmem:[%s527] sm:$0xff]
          %v2042 = vld [vmem:[%s527 + $0x8] sm:$0xff]
          %v2043 = vld [vmem:[%s527 + $0x10] sm:$0xff]
          %v2044 = vld [vmem:[%s527 + $0x18] sm:$0xff]
          %v2045 = vld [vmem:[%s527 + $0x20] sm:$0xff]
          %v2046 = vld [vmem:[%s527 + $0x28] sm:$0xff]
          %v2047 = vld [vmem:[%s527 + $0x30] sm:$0xff]
          %v2048 = vld [vmem:[%s527 + $0x38] sm:$0xff]
          %v2049 = vld [vmem:[%s527 + $0x40] sm:$0xff]
          %v2050 = vld [vmem:[%s527 + $0x48] sm:$0xff]
          %v2051 = vld [vmem:[%s527 + $0x50] sm:$0xff]
          %v2052 = vld [vmem:[%s527 + $0x58] sm:$0xff]
          %v2053 = vld [vmem:[%s527 + $0x60] sm:$0xff]
          %v2054 = vld [vmem:[%s527 + $0x68] sm:$0xff]
          %v2055 = vld [vmem:[%s527 + $0x70] sm:$0xff]
          %v2056 = vld [vmem:[%s527 + $0x78] sm:$0xff]
          %v2057 = vld [vmem:[%s527 + $0x80] sm:$0xff]
          %v2058 = vld [vmem:[%s527 + $0x88] sm:$0xff]
          %v2059 = vld [vmem:[%s527 + $0x90] sm:$0xff]
          %v2060 = vld [vmem:[%s527 + $0x98] sm:$0xff]
          %v2061 = vld [vmem:[%s527 + $0xa0] sm:$0xff]
          %v2062 = vld [vmem:[%s527 + $0xa8] sm:$0xff]
          %v2063 = vld [vmem:[%s527 + $0xb0] sm:$0xff]
          %v2064 = vld [vmem:[%s527 + $0xb8] sm:$0xff]
          %v2065 = vld [vmem:[%s527 + $0xc0] sm:$0xff]
          %v2066 = vld [vmem:[%s527 + $0xc8] sm:$0xff]
          %v2067 = vld [vmem:[%s527 + $0xd0] sm:$0xff]
          %v2068 = vld [vmem:[%s527 + $0xd8] sm:$0xff]
          %v2069 = vld [vmem:[%s527 + $0xe0] sm:$0xff]
          %v2070 = vld [vmem:[%s527 + $0xe8] sm:$0xff]
          %v2071 = vld [vmem:[%s527 + $0xf0] sm:$0xff]
          %v2072 = vld [vmem:[%s527 + $0xf8] sm:$0xff]
          %v2073 = vld [vmem:[#allocation6] sm:$0xff]
          %v2074 = vld [vmem:[#allocation6 + $0x8] sm:$0xff]
          %v2075 = vld [vmem:[#allocation6 + $0x10] sm:$0xff]
          %v2076 = vld [vmem:[#allocation6 + $0x18] sm:$0xff]
          %v2077 = vld [vmem:[%s6] sm:$0xff]
          %v2078 = vld [vmem:[%s6 + $0x8] sm:$0xff]
          %v2079 = vld [vmem:[%s6 + $0x10] sm:$0xff]
          %v2080 = vld [vmem:[%s6 + $0x18] sm:$0xff]
          %v2081 = vld [vmem:[%s6 + $0x20] sm:$0xff]
          %v2082 = vld [vmem:[%s6 + $0x28] sm:$0xff]
          %v2083 = vld [vmem:[%s6 + $0x30] sm:$0xff]
          %v2084 = vld [vmem:[%s6 + $0x38] sm:$0xff]
          %v2085 = vld [vmem:[%s6 + $0x40] sm:$0xff]
          %v2086 = vld [vmem:[%s6 + $0x48] sm:$0xff]
          %v2087 = vld [vmem:[%s6 + $0x50] sm:$0xff]
          %v2088 = vld [vmem:[%s6 + $0x58] sm:$0xff]
          %v2089 = vld [vmem:[%s6 + $0x60] sm:$0xff]
          %v2090 = vld [vmem:[%s6 + $0x68] sm:$0xff]
          %v2091 = vld [vmem:[%s6 + $0x70] sm:$0xff]
          %v2092 = vld [vmem:[%s6 + $0x78] sm:$0xff]
          %2093 = vmatprep.subr.mxu0 0.0
          %2094 = vmatpush1.msra.mxu0 %v2077
          %2095 = vmatprep.subr.mxu0 0.0
          %2096 = vmatpush1.msra.mxu0 %v2078
          %2097 = vmatprep.subr.mxu0 0.0
          %2098 = vmatpush1.msra.mxu0 %v2079
          %2099 = vmatprep.subr.mxu0 0.0
          %2100 = vmatpush1.msra.mxu0 %v2080
          %2101 = vmatprep.subr.mxu0 0.0
          %2102 = vmatpush1.msra.mxu0 %v2081
          %2103 = vmatprep.subr.mxu0 0.0
          %2104 = vmatpush1.msra.mxu0 %v2082
          %2105 = vmatprep.subr.mxu0 0.0
          %2106 = vmatpush1.msra.mxu0 %v2083
          %2107 = vmatprep.subr.mxu0 0.0
          %2108 = vmatpush1.msra.mxu0 %v2084
          %2109 = vmatprep.subr.mxu0 0.0
          %2110 = vmatpush1.msra.mxu0 %v2085
          %2111 = vmatprep.subr.mxu0 0.0
          %2112 = vmatpush1.msra.mxu0 %v2086
          %2113 = vmatprep.subr.mxu0 0.0
          %2114 = vmatpush1.msra.mxu0 %v2087
          %2115 = vmatprep.subr.mxu0 0.0
          %2116 = vmatpush1.msra.mxu0 %v2088
          %2117 = vmatprep.subr.mxu0 0.0
          %2118 = vmatpush1.msra.mxu0 %v2089
          %2119 = vmatprep.subr.mxu0 0.0
          %2120 = vmatpush1.msra.mxu0 %v2090
          %2121 = vmatprep.subr.mxu0 0.0
          %2122 = vmatpush1.msra.mxu0 %v2091
          %2123 = vmatprep.subr.mxu0 0.0
          %2124 = vmatpush1.msra.mxu0 %v2092
          %2125 = vmatprep.subr.mxu0 0.0
          %2126 = vmatpush1.msra.mxu0 0.0
          %2127 = vmatprep.subr.mxu0 0.0
          %2128 = vmatpush1.msra.mxu0 0.0
          %2129 = vmatprep.subr.mxu0 0.0
          %2130 = vmatpush1.msra.mxu0 0.0
          %2131 = vmatprep.subr.mxu0 0.0
          %2132 = vmatpush1.msra.mxu0 0.0
          %2133 = vmatprep.subr.mxu0 0.0
          %2134 = vmatpush1.msra.mxu0 0.0
          %2135 = vmatprep.subr.mxu0 0.0
          %2136 = vmatpush1.msra.mxu0 0.0
          %2137 = vmatprep.subr.mxu0 0.0
          %2138 = vmatpush1.msra.mxu0 0.0
          %2139 = vmatprep.subr.mxu0 0.0
          %2140 = vmatpush1.msra.mxu0 0.0
          %2141 = vmatprep.subr.mxu0 0.0
          %2142 = vmatpush1.msra.mxu0 0.0
          %2143 = vmatprep.subr.mxu0 0.0
          %2144 = vmatpush1.msra.mxu0 0.0
          %2145 = vmatprep.subr.mxu0 0.0
          %2146 = vmatpush1.msra.mxu0 0.0
          %2147 = vmatprep.subr.mxu0 0.0
          %2148 = vmatpush1.msra.mxu0 0.0
          %2149 = vmatprep.subr.mxu0 0.0
          %2150 = vmatpush1.msra.mxu0 0.0
          %2151 = vmatprep.subr.mxu0 0.0
          %2152 = vmatpush1.msra.mxu0 0.0
          %2153 = vmatprep.subr.mxu0 0.0
          %2154 = vmatpush1.msra.mxu0 0.0
          %2155 = vmatprep.subr.mxu0 0.0
          %2156 = vmatpush1.msra.mxu0 0.0
          %2157 = vmatprep.mubr.f32.mxu0 0.0
          %2158 = vmatmul.mubr.f32.gmra.mrb[0].mxu0 %v2009
          %v2159 = vpop.f32.mrb[0].mxu0
          %v2160 = vadd.f32 0.0, %v2159
          %v2161 = vpop.f32.mrb[0].mxu0
          %2162 = vmatprep.mubr.f32.mxu0 0.0
          %2163 = vmatmul.mubr.f32.gmra.mrb[0].mxu0 %v2010
          %v2164 = vpop.f32.mrb[0].mxu0
          %v2165 = vadd.f32 0.0, %v2164
          %v2166 = vpop.f32.mrb[0].mxu0
          %2167 = vmatprep.mubr.f32.mxu0 0.0
          %2168 = vmatmul.mubr.f32.gmra.mrb[0].mxu0 %v2011
          %v2169 = vpop.f32.mrb[0].mxu0
          %v2170 = vadd.f32 0.0, %v2169
          %v2171 = vpop.f32.mrb[0].mxu0
          %2172 = vmatprep.mubr.f32.mxu0 0.0
          %2173 = vmatmul.mubr.f32.gmra.mrb[0].mxu0 %v2012
          %v2174 = vpop.f32.mrb[0].mxu0
          %v2175 = vadd.f32 0.0, %v2174
          %v2176 = vpop.f32.mrb[0].mxu0
          %2177 = vmatprep.mubr.f32.mxu0 0.0
          %2178 = vmatmul.mubr.f32.gmra.mrb[0].mxu0 %v2013
          %v2179 = vpop.f32.mrb[0].mxu0
          %v2180 = vadd.f32 0.0, %v2179
          %v2181 = vpop.f32.mrb[0].mxu0
          %2182 = vmatprep.mubr.f32.mxu0 0.0
          %2183 = vmatmul.mubr.f32.gmra.mrb[0].mxu0 %v2014
          %v2184 = vpop.f32.mrb[0].mxu0
          %v2185 = vadd.f32 0.0, %v2184
          %v2186 = vpop.f32.mrb[0].mxu0
          %2187 = vmatprep.mubr.f32.mxu0 0.0
          %2188 = vmatmul.mubr.f32.gmra.mrb[0].mxu0 %v2015
          %v2189 = vpop.f32.mrb[0].mxu0
          %v2190 = vadd.f32 0.0, %v2189
          %v2191 = vpop.f32.mrb[0].mxu0
          %2192 = vmatprep.mubr.f32.mxu0 0.0
          %2193 = vmatmul.mubr.f32.gmra.mrb[0].mxu0 %v2016
          %v2194 = vpop.f32.mrb[0].mxu0
          %v2195 = vadd.f32 0.0, %v2194
          %v2196 = vpop.f32.mrb[0].mxu0
          %2197 = vmatprep.mubr.f32.mxu0 0.0
          %2198 = vmatmul.mubr.f32.gmra.mrb[0].mxu0 %v2017
          %v2199 = vpop.f32.mrb[0].mxu0
          %v2200 = vadd.f32 0.0, %v2199
          %v2201 = vpop.f32.mrb[0].mxu0
          %2202 = vmatprep.mubr.f32.mxu0 0.0
          %2203 = vmatmul.mubr.f32.gmra.mrb[0].mxu0 %v2018
          %v2204 = vpop.f32.mrb[0].mxu0
          %v2205 = vadd.f32 0.0, %v2204
          %v2206 = vpop.f32.mrb[0].mxu0
          %2207 = vmatprep.mubr.f32.mxu0 0.0
          %2208 = vmatmul.mubr.f32.gmra.mrb[0].mxu0 %v2019
          %v2209 = vpop.f32.mrb[0].mxu0
          %v2210 = vadd.f32 0.0, %v2209
          %v2211 = vpop.f32.mrb[0].mxu0
          %2212 = vmatprep.mubr.f32.mxu0 0.0
          %2213 = vmatmul.mubr.f32.gmra.mrb[0].mxu0 %v2020
          %v2214 = vpop.f32.mrb[0].mxu0
          %v2215 = vadd.f32 0.0, %v2214
          %v2216 = vpop.f32.mrb[0].mxu0
          %2217 = vmatprep.mubr.f32.mxu0 0.0
          %2218 = vmatmul.mubr.f32.gmra.mrb[0].mxu0 %v2021
          %v2219 = vpop.f32.mrb[0].mxu0
          %v2220 = vadd.f32 0.0, %v2219
          %v2221 = vpop.f32.mrb[0].mxu0
          %2222 = vmatprep.mubr.f32.mxu0 0.0
          %2223 = vmatmul.mubr.f32.gmra.mrb[0].mxu0 %v2022
          %v2224 = vpop.f32.mrb[0].mxu0
          %v2225 = vadd.f32 0.0, %v2224
          %v2226 = vpop.f32.mrb[0].mxu0
          %2227 = vmatprep.mubr.f32.mxu0 0.0
          %2228 = vmatmul.mubr.f32.gmra.mrb[0].mxu0 %v2023
          %v2229 = vpop.f32.mrb[0].mxu0
          %v2230 = vadd.f32 0.0, %v2229
          %v2231 = vpop.f32.mrb[0].mxu0
          %2232 = vmatprep.mubr.f32.mxu0 0.0
          %2233 = vmatmul.mubr.f32.gmra.mrb[0].mxu0 %v2024
          %v2234 = vpop.f32.mrb[0].mxu0
          %v2235 = vadd.f32 0.0, %v2234
          %v2236 = vpop.f32.mrb[0].mxu0
          %2237 = vmatprep.mubr.f32.mxu0 0.0
          %2238 = vmatmul.mubr.f32.gmra.mrb[0].mxu0 %v2025
          %v2239 = vpop.f32.mrb[0].mxu0
          %v2240 = vadd.f32 0.0, %v2239
          %v2241 = vpop.f32.mrb[0].mxu0
          %2242 = vmatprep.mubr.f32.mxu0 0.0
          %2243 = vmatmul.mubr.f32.gmra.mrb[0].mxu0 %v2026
          %v2244 = vpop.f32.mrb[0].mxu0
          %v2245 = vadd.f32 0.0, %v2244
          %v2246 = vpop.f32.mrb[0].mxu0
          %2247 = vmatprep.mubr.f32.mxu0 0.0
          %2248 = vmatmul.mubr.f32.gmra.mrb[0].mxu0 %v2027
          %v2249 = vpop.f32.mrb[0].mxu0
          %v2250 = vadd.f32 0.0, %v2249
          %v2251 = vpop.f32.mrb[0].mxu0
          %2252 = vmatprep.mubr.f32.mxu0 0.0
          %2253 = vmatmul.mubr.f32.gmra.mrb[0].mxu0 %v2028
          %v2254 = vpop.f32.mrb[0].mxu0
          %v2255 = vadd.f32 0.0, %v2254
          %v2256 = vpop.f32.mrb[0].mxu0
          %2257 = vmatprep.mubr.f32.mxu0 0.0
          %2258 = vmatmul.mubr.f32.gmra.mrb[0].mxu0 %v2029
          %v2259 = vpop.f32.mrb[0].mxu0
          %v2260 = vadd.f32 0.0, %v2259
          %v2261 = vpop.f32.mrb[0].mxu0
          %2262 = vmatprep.mubr.f32.mxu0 0.0
          %2263 = vmatmul.mubr.f32.gmra.mrb[0].mxu0 %v2030
          %v2264 = vpop.f32.mrb[0].mxu0
          %v2265 = vadd.f32 0.0, %v2264
          %v2266 = vpop.f32.mrb[0].mxu0
          %2267 = vmatprep.mubr.f32.mxu0 0.0
          %2268 = vmatmul.mubr.f32.gmra.mrb[0].mxu0 %v2031
          %v2269 = vpop.f32.mrb[0].mxu0
          %v2270 = vadd.f32 0.0, %v2269
          %v2271 = vpop.f32.mrb[0].mxu0
          %2272 = vmatprep.mubr.f32.mxu0 0.0
          %2273 = vmatmul.mubr.f32.gmra.mrb[0].mxu0 %v2032
          %v2274 = vpop.f32.mrb[0].mxu0
          %v2275 = vadd.f32 0.0, %v2274
          %v2276 = vpop.f32.mrb[0].mxu0
          %2277 = vmatprep.mubr.f32.mxu0 0.0
          %2278 = vmatmul.mubr.f32.gmra.mrb[0].mxu0 %v2033
          %v2279 = vpop.f32.mrb[0].mxu0
          %v2280 = vadd.f32 0.0, %v2279
          %v2281 = vpop.f32.mrb[0].mxu0
          %2282 = vmatprep.mubr.f32.mxu0 0.0
          %2283 = vmatmul.mubr.f32.gmra.mrb[0].mxu0 %v2034
          %v2284 = vpop.f32.mrb[0].mxu0
          %v2285 = vadd.f32 0.0, %v2284
          %v2286 = vpop.f32.mrb[0].mxu0
          %2287 = vmatprep.mubr.f32.mxu0 0.0
          %2288 = vmatmul.mubr.f32.gmra.mrb[0].mxu0 %v2035
          %v2289 = vpop.f32.mrb[0].mxu0
          %v2290 = vadd.f32 0.0, %v2289
          %v2291 = vpop.f32.mrb[0].mxu0
          %2292 = vmatprep.mubr.f32.mxu0 0.0
          %2293 = vmatmul.mubr.f32.gmra.mrb[0].mxu0 %v2036
          %v2294 = vpop.f32.mrb[0].mxu0
          %v2295 = vadd.f32 0.0, %v2294
          %v2296 = vpop.f32.mrb[0].mxu0
          %2297 = vmatprep.mubr.f32.mxu0 0.0
          %2298 = vmatmul.mubr.f32.gmra.mrb[0].mxu0 %v2037
          %v2299 = vpop.f32.mrb[0].mxu0
          %v2300 = vadd.f32 0.0, %v2299
          %v2301 = vpop.f32.mrb[0].mxu0
          %2302 = vmatprep.mubr.f32.mxu0 0.0
          %2303 = vmatmul.mubr.f32.gmra.mrb[0].mxu0 %v2038
          %v2304 = vpop.f32.mrb[0].mxu0
          %v2305 = vadd.f32 0.0, %v2304
          %v2306 = vpop.f32.mrb[0].mxu0
          %2307 = vmatprep.mubr.f32.mxu0 0.0
          %2308 = vmatmul.mubr.f32.gmra.mrb[0].mxu0 %v2039
          %v2309 = vpop.f32.mrb[0].mxu0
          %v2310 = vadd.f32 0.0, %v2309
          %v2311 = vpop.f32.mrb[0].mxu0
          %2312 = vmatprep.mubr.f32.mxu0 0.0
          %2313 = vmatmul.mubr.f32.gmra.mrb[0].mxu0 %v2040
          %v2314 = vpop.f32.mrb[0].mxu0
          %v2315 = vadd.f32 0.0, %v2314
          %v2316 = vpop.f32.mrb[0].mxu0
          %2317 = vdwg.mxu0
          %vm2318 = vcmask 261120
          %v2320 = vsel %vm2318, %v2041, 0
          %v2323 = vsel %vm2318, %v2042, 0
          %v2326 = vsel %vm2318, %v2043, 0
          %v2329 = vsel %vm2318, %v2044, 0
          %v2332 = vsel %vm2318, %v2045, 0
          %v2335 = vsel %vm2318, %v2046, 0
          %v2338 = vsel %vm2318, %v2047, 0
          %v2341 = vsel %vm2318, %v2048, 0
          %v2344 = vsel %vm2318, %v2049, 0
          %v2347 = vsel %vm2318, %v2050, 0
          %v2350 = vsel %vm2318, %v2051, 0
          %v2353 = vsel %vm2318, %v2052, 0
          %v2356 = vsel %vm2318, %v2053, 0
          %v2359 = vsel %vm2318, %v2054, 0
          %v2362 = vsel %vm2318, %v2055, 0
          %v2365 = vsel %vm2318, %v2056, 0
          %v2368 = vsel %vm2318, %v2057, 0
          %v2371 = vsel %vm2318, %v2058, 0
          %v2374 = vsel %vm2318, %v2059, 0
          %v2377 = vsel %vm2318, %v2060, 0
          %v2380 = vsel %vm2318, %v2061, 0
          %v2383 = vsel %vm2318, %v2062, 0
          %v2386 = vsel %vm2318, %v2063, 0
          %v2389 = vsel %vm2318, %v2064, 0
          %v2392 = vsel %vm2318, %v2065, 0
          %v2395 = vsel %vm2318, %v2066, 0
          %v2398 = vsel %vm2318, %v2067, 0
          %v2401 = vsel %vm2318, %v2068, 0
          %v2404 = vsel %vm2318, %v2069, 0
          %v2407 = vsel %vm2318, %v2070, 0
          %v2410 = vsel %vm2318, %v2071, 0
          %v2413 = vsel %vm2318, %v2072, 0
          %2415 = vmatprep.subr.mxu0 0.0
          %2416 = vmatpush1.msra.mxu0 %v2073
          %2417 = vmatprep.subr.mxu0 0.0
          %2418 = vmatpush1.msra.mxu0 %v2074
          %2419 = vmatprep.subr.mxu0 0.0
          %2420 = vmatpush1.msra.mxu0 %v2075
          %2421 = vmatprep.subr.mxu0 0.0
          %2422 = vmatpush1.msra.mxu0 %v2076
          %2423 = vmatprep.subr.mxu0 0.0
          %2424 = vmatpush1.msra.mxu0 0.0
          %2425 = vmatprep.subr.mxu0 0.0
          %2426 = vmatpush1.msra.mxu0 0.0
          %2427 = vmatprep.subr.mxu0 0.0
          %2428 = vmatpush1.msra.mxu0 0.0
          %2429 = vmatprep.subr.mxu0 0.0
          %2430 = vmatpush1.msra.mxu0 0.0
          %2431 = vmatprep.subr.mxu0 0.0
          %2432 = vmatpush1.msra.mxu0 0.0
          %2433 = vmatprep.subr.mxu0 0.0
          %2434 = vmatpush1.msra.mxu0 0.0
          %2435 = vmatprep.subr.mxu0 0.0
          %2436 = vmatpush1.msra.mxu0 0.0
          %2437 = vmatprep.subr.mxu0 0.0
          %2438 = vmatpush1.msra.mxu0 0.0
          %2439 = vmatprep.subr.mxu0 0.0
          %2440 = vmatpush1.msra.mxu0 0.0
          %2441 = vmatprep.subr.mxu0 0.0
          %2442 = vmatpush1.msra.mxu0 0.0
          %2443 = vmatprep.subr.mxu0 0.0
          %2444 = vmatpush1.msra.mxu0 0.0
          %2445 = vmatprep.subr.mxu0 0.0
          %2446 = vmatpush1.msra.mxu0 0.0
          %2447 = vmatprep.subr.mxu0 0.0
          %2448 = vmatpush1.msra.mxu0 0.0
          %2449 = vmatprep.subr.mxu0 0.0
          %2450 = vmatpush1.msra.mxu0 0.0
          %2451 = vmatprep.subr.mxu0 0.0
          %2452 = vmatpush1.msra.mxu0 0.0
          %2453 = vmatprep.subr.mxu0 0.0
          %2454 = vmatpush1.msra.mxu0 0.0
          %2455 = vmatprep.subr.mxu0 0.0
          %2456 = vmatpush1.msra.mxu0 0.0
          %2457 = vmatprep.subr.mxu0 0.0
          %2458 = vmatpush1.msra.mxu0 0.0
          %2459 = vmatprep.subr.mxu0 0.0
          %2460 = vmatpush1.msra.mxu0 0.0
          %2461 = vmatprep.subr.mxu0 0.0
          %2462 = vmatpush1.msra.mxu0 0.0
          %2463 = vmatprep.subr.mxu0 0.0
          %2464 = vmatpush1.msra.mxu0 0.0
          %2465 = vmatprep.subr.mxu0 0.0
          %2466 = vmatpush1.msra.mxu0 0.0
          %2467 = vmatprep.subr.mxu0 0.0
          %2468 = vmatpush1.msra.mxu0 0.0
          %2469 = vmatprep.subr.mxu0 0.0
          %2470 = vmatpush1.msra.mxu0 0.0
          %2471 = vmatprep.subr.mxu0 0.0
          %2472 = vmatpush1.msra.mxu0 0.0
          %2473 = vmatprep.subr.mxu0 0.0
          %2474 = vmatpush1.msra.mxu0 0.0
          %2475 = vmatprep.subr.mxu0 0.0
          %2476 = vmatpush1.msra.mxu0 0.0
          %2477 = vmatprep.subr.mxu0 0.0
          %2478 = vmatpush1.msra.mxu0 0.0
          %2479 = vmatprep.mubr.f32.mxu0 0.0
          %2480 = vmatmul.mubr.f32.gmra.mrb[0].mxu0 %v2320
          %v2481 = vpop.f32.mrb[0].mxu0
          %v2482 = vadd.f32 %v2160, %v2481
          %v2483 = vpop.f32.mrb[0].mxu0
          %2484 = vmatprep.mubr.f32.mxu0 0.0
          %2485 = vmatmul.mubr.f32.gmra.mrb[0].mxu0 %v2323
          %v2486 = vpop.f32.mrb[0].mxu0
          %v2487 = vadd.f32 %v2165, %v2486
          %v2488 = vpop.f32.mrb[0].mxu0
          %2489 = vmatprep.mubr.f32.mxu0 0.0
          %2490 = vmatmul.mubr.f32.gmra.mrb[0].mxu0 %v2326
          %v2491 = vpop.f32.mrb[0].mxu0
          %v2492 = vadd.f32 %v2170, %v2491
          %v2493 = vpop.f32.mrb[0].mxu0
          %2494 = vmatprep.mubr.f32.mxu0 0.0
          %2495 = vmatmul.mubr.f32.gmra.mrb[0].mxu0 %v2329
          %v2496 = vpop.f32.mrb[0].mxu0
          %v2497 = vadd.f32 %v2175, %v2496
          %v2498 = vpop.f32.mrb[0].mxu0
          %2499 = vmatprep.mubr.f32.mxu0 0.0
          %2500 = vmatmul.mubr.f32.gmra.mrb[0].mxu0 %v2332
          %v2501 = vpop.f32.mrb[0].mxu0
          %v2502 = vadd.f32 %v2180, %v2501
          %v2503 = vpop.f32.mrb[0].mxu0
          %2504 = vmatprep.mubr.f32.mxu0 0.0
          %2505 = vmatmul.mubr.f32.gmra.mrb[0].mxu0 %v2335
          %v2506 = vpop.f32.mrb[0].mxu0
          %v2507 = vadd.f32 %v2185, %v2506
          %v2508 = vpop.f32.mrb[0].mxu0
          %2509 = vmatprep.mubr.f32.mxu0 0.0
          %2510 = vmatmul.mubr.f32.gmra.mrb[0].mxu0 %v2338
          %v2511 = vpop.f32.mrb[0].mxu0
          %v2512 = vadd.f32 %v2190, %v2511
          %v2513 = vpop.f32.mrb[0].mxu0
          %2514 = vmatprep.mubr.f32.mxu0 0.0
          %2515 = vmatmul.mubr.f32.gmra.mrb[0].mxu0 %v2341
          %v2516 = vpop.f32.mrb[0].mxu0
          %v2517 = vadd.f32 %v2195, %v2516
          %v2518 = vpop.f32.mrb[0].mxu0
          %2519 = vmatprep.mubr.f32.mxu0 0.0
          %2520 = vmatmul.mubr.f32.gmra.mrb[0].mxu0 %v2344
          %v2521 = vpop.f32.mrb[0].mxu0
          %v2522 = vadd.f32 %v2200, %v2521
          %v2523 = vpop.f32.mrb[0].mxu0
          %2524 = vmatprep.mubr.f32.mxu0 0.0
          %2525 = vmatmul.mubr.f32.gmra.mrb[0].mxu0 %v2347
          %v2526 = vpop.f32.mrb[0].mxu0
          %v2527 = vadd.f32 %v2205, %v2526
          %v2528 = vpop.f32.mrb[0].mxu0
          %2529 = vmatprep.mubr.f32.mxu0 0.0
          %2530 = vmatmul.mubr.f32.gmra.mrb[0].mxu0 %v2350
          %v2531 = vpop.f32.mrb[0].mxu0
          %v2532 = vadd.f32 %v2210, %v2531
          %v2533 = vpop.f32.mrb[0].mxu0
          %2534 = vmatprep.mubr.f32.mxu0 0.0
          %2535 = vmatmul.mubr.f32.gmra.mrb[0].mxu0 %v2353
          %v2536 = vpop.f32.mrb[0].mxu0
          %v2537 = vadd.f32 %v2215, %v2536
          %v2538 = vpop.f32.mrb[0].mxu0
          %2539 = vmatprep.mubr.f32.mxu0 0.0
          %2540 = vmatmul.mubr.f32.gmra.mrb[0].mxu0 %v2356
          %v2541 = vpop.f32.mrb[0].mxu0
          %v2542 = vadd.f32 %v2220, %v2541
          %v2543 = vpop.f32.mrb[0].mxu0
          %2544 = vmatprep.mubr.f32.mxu0 0.0
          %2545 = vmatmul.mubr.f32.gmra.mrb[0].mxu0 %v2359
          %v2546 = vpop.f32.mrb[0].mxu0
          %v2547 = vadd.f32 %v2225, %v2546
          %v2548 = vpop.f32.mrb[0].mxu0
          %2549 = vmatprep.mubr.f32.mxu0 0.0
          %2550 = vmatmul.mubr.f32.gmra.mrb[0].mxu0 %v2362
          %v2551 = vpop.f32.mrb[0].mxu0
          %v2552 = vadd.f32 %v2230, %v2551
          %v2553 = vpop.f32.mrb[0].mxu0
          %2554 = vmatprep.mubr.f32.mxu0 0.0
          %2555 = vmatmul.mubr.f32.gmra.mrb[0].mxu0 %v2365
          %v2556 = vpop.f32.mrb[0].mxu0
          %v2557 = vadd.f32 %v2235, %v2556
          %v2558 = vpop.f32.mrb[0].mxu0
          %2559 = vmatprep.mubr.f32.mxu0 0.0
          %2560 = vmatmul.mubr.f32.gmra.mrb[0].mxu0 %v2368
          %v2561 = vpop.f32.mrb[0].mxu0
          %v2562 = vadd.f32 %v2240, %v2561
          %v2563 = vpop.f32.mrb[0].mxu0
          %2564 = vmatprep.mubr.f32.mxu0 0.0
          %2565 = vmatmul.mubr.f32.gmra.mrb[0].mxu0 %v2371
          %v2566 = vpop.f32.mrb[0].mxu0
          %v2567 = vadd.f32 %v2245, %v2566
          %v2568 = vpop.f32.mrb[0].mxu0
          %2569 = vmatprep.mubr.f32.mxu0 0.0
          %2570 = vmatmul.mubr.f32.gmra.mrb[0].mxu0 %v2374
          %v2571 = vpop.f32.mrb[0].mxu0
          %v2572 = vadd.f32 %v2250, %v2571
          %v2573 = vpop.f32.mrb[0].mxu0
          %2574 = vmatprep.mubr.f32.mxu0 0.0
          %2575 = vmatmul.mubr.f32.gmra.mrb[0].mxu0 %v2377
          %v2576 = vpop.f32.mrb[0].mxu0
          %v2577 = vadd.f32 %v2255, %v2576
          %v2578 = vpop.f32.mrb[0].mxu0
          %2579 = vmatprep.mubr.f32.mxu0 0.0
          %2580 = vmatmul.mubr.f32.gmra.mrb[0].mxu0 %v2380
          %v2581 = vpop.f32.mrb[0].mxu0
          %v2582 = vadd.f32 %v2260, %v2581
          %v2583 = vpop.f32.mrb[0].mxu0
          %2584 = vmatprep.mubr.f32.mxu0 0.0
          %2585 = vmatmul.mubr.f32.gmra.mrb[0].mxu0 %v2383
          %v2586 = vpop.f32.mrb[0].mxu0
          %v2587 = vadd.f32 %v2265, %v2586
          %v2588 = vpop.f32.mrb[0].mxu0
          %2589 = vmatprep.mubr.f32.mxu0 0.0
          %2590 = vmatmul.mubr.f32.gmra.mrb[0].mxu0 %v2386
          %v2591 = vpop.f32.mrb[0].mxu0
          %v2592 = vadd.f32 %v2270, %v2591
          %v2593 = vpop.f32.mrb[0].mxu0
          %2594 = vmatprep.mubr.f32.mxu0 0.0
          %2595 = vmatmul.mubr.f32.gmra.mrb[0].mxu0 %v2389
          %v2596 = vpop.f32.mrb[0].mxu0
          %v2597 = vadd.f32 %v2275, %v2596
          %v2598 = vpop.f32.mrb[0].mxu0
          %2599 = vmatprep.mubr.f32.mxu0 0.0
          %2600 = vmatmul.mubr.f32.gmra.mrb[0].mxu0 %v2392
          %v2601 = vpop.f32.mrb[0].mxu0
          %v2602 = vadd.f32 %v2280, %v2601
          %v2603 = vpop.f32.mrb[0].mxu0
          %2604 = vmatprep.mubr.f32.mxu0 0.0
          %2605 = vmatmul.mubr.f32.gmra.mrb[0].mxu0 %v2395
          %v2606 = vpop.f32.mrb[0].mxu0
          %v2607 = vadd.f32 %v2285, %v2606
          %v2608 = vpop.f32.mrb[0].mxu0
          %2609 = vmatprep.mubr.f32.mxu0 0.0
          %2610 = vmatmul.mubr.f32.gmra.mrb[0].mxu0 %v2398
          %v2611 = vpop.f32.mrb[0].mxu0
          %v2612 = vadd.f32 %v2290, %v2611
          %v2613 = vpop.f32.mrb[0].mxu0
          %2614 = vmatprep.mubr.f32.mxu0 0.0
          %2615 = vmatmul.mubr.f32.gmra.mrb[0].mxu0 %v2401
          %v2616 = vpop.f32.mrb[0].mxu0
          %v2617 = vadd.f32 %v2295, %v2616
          %v2618 = vpop.f32.mrb[0].mxu0
          %2619 = vmatprep.mubr.f32.mxu0 0.0
          %2620 = vmatmul.mubr.f32.gmra.mrb[0].mxu0 %v2404
          %v2621 = vpop.f32.mrb[0].mxu0
          %v2622 = vadd.f32 %v2300, %v2621
          %v2623 = vpop.f32.mrb[0].mxu0
          %2624 = vmatprep.mubr.f32.mxu0 0.0
          %2625 = vmatmul.mubr.f32.gmra.mrb[0].mxu0 %v2407
          %v2626 = vpop.f32.mrb[0].mxu0
          %v2627 = vadd.f32 %v2305, %v2626
          %v2628 = vpop.f32.mrb[0].mxu0
          %2629 = vmatprep.mubr.f32.mxu0 0.0
          %2630 = vmatmul.mubr.f32.gmra.mrb[0].mxu0 %v2410
          %v2631 = vpop.f32.mrb[0].mxu0
          %v2632 = vadd.f32 %v2310, %v2631
          %v2633 = vpop.f32.mrb[0].mxu0
          %2634 = vmatprep.mubr.f32.mxu0 0.0
          %2635 = vmatmul.mubr.f32.gmra.mrb[0].mxu0 %v2413
          %v2636 = vpop.f32.mrb[0].mxu0
          %v2637 = vadd.f32 %v2315, %v2636
          %v2638 = vpop.f32.mrb[0].mxu0
          %2639 = vdwg.mxu0
          %v2640 = vld [vmem:[%s7] sm:$0x1]
          %v2642 = vlaneseq
          %v2643 = vshrl.u32 %v2642, 7
          %v2644 = vsub.s32 0, %v2643
          %v2645 = vrot.slane %v2640, %v2644
          %v2647 = vadd.f32 %v2482, %v2645
          %v2648 = vadd.f32 %v2487, %v2645
          %v2649 = vadd.f32 %v2492, %v2645
          %v2650 = vadd.f32 %v2497, %v2645
          %v2651 = vadd.f32 %v2502, %v2645
          %v2652 = vadd.f32 %v2507, %v2645
          %v2653 = vadd.f32 %v2512, %v2645
          %v2654 = vadd.f32 %v2517, %v2645
          %v2655 = vadd.f32 %v2522, %v2645
          %v2656 = vadd.f32 %v2527, %v2645
          %v2657 = vadd.f32 %v2532, %v2645
          %v2658 = vadd.f32 %v2537, %v2645
          %v2659 = vadd.f32 %v2542, %v2645
          %v2660 = vadd.f32 %v2547, %v2645
          %v2661 = vadd.f32 %v2552, %v2645
          %v2662 = vadd.f32 %v2557, %v2645
          %v2663 = vadd.f32 %v2562, %v2645
          %v2664 = vadd.f32 %v2567, %v2645
          %v2665 = vadd.f32 %v2572, %v2645
          %v2666 = vadd.f32 %v2577, %v2645
          %v2667 = vadd.f32 %v2582, %v2645
          %v2668 = vadd.f32 %v2587, %v2645
          %v2669 = vadd.f32 %v2592, %v2645
          %v2670 = vadd.f32 %v2597, %v2645
          %v2671 = vadd.f32 %v2602, %v2645
          %v2672 = vadd.f32 %v2607, %v2645
          %v2673 = vadd.f32 %v2612, %v2645
          %v2674 = vadd.f32 %v2617, %v2645
          %v2675 = vadd.f32 %v2622, %v2645
          %v2676 = vadd.f32 %v2627, %v2645
          %v2677 = vadd.f32 %v2632, %v2645
          %v2678 = vadd.f32 %v2637, %v2645
          %v2679 = vmax.f32 %v2647, 0.0
          %v2680 = vmax.f32 %v2648, 0.0
          %v2681 = vmax.f32 %v2649, 0.0
          %v2682 = vmax.f32 %v2650, 0.0
          %v2683 = vmax.f32 %v2651, 0.0
          %v2684 = vmax.f32 %v2652, 0.0
          %v2685 = vmax.f32 %v2653, 0.0
          %v2686 = vmax.f32 %v2654, 0.0
          %v2687 = vmax.f32 %v2655, 0.0
          %v2688 = vmax.f32 %v2656, 0.0
          %v2689 = vmax.f32 %v2657, 0.0
          %v2690 = vmax.f32 %v2658, 0.0
          %v2691 = vmax.f32 %v2659, 0.0
          %v2692 = vmax.f32 %v2660, 0.0
          %v2693 = vmax.f32 %v2661, 0.0
          %v2694 = vmax.f32 %v2662, 0.0
          %v2695 = vmax.f32 %v2663, 0.0
          %v2696 = vmax.f32 %v2664, 0.0
          %v2697 = vmax.f32 %v2665, 0.0
          %v2698 = vmax.f32 %v2666, 0.0
          %v2699 = vmax.f32 %v2667, 0.0
          %v2700 = vmax.f32 %v2668, 0.0
          %v2701 = vmax.f32 %v2669, 0.0
          %v2702 = vmax.f32 %v2670, 0.0
          %v2703 = vmax.f32 %v2671, 0.0
          %v2704 = vmax.f32 %v2672, 0.0
          %v2705 = vmax.f32 %v2673, 0.0
          %v2706 = vmax.f32 %v2674, 0.0
          %v2707 = vmax.f32 %v2675, 0.0
          %v2708 = vmax.f32 %v2676, 0.0
          %v2709 = vmax.f32 %v2677, 0.0
          %v2710 = vmax.f32 %v2678, 0.0
          %2711 = vst [vmem:[%s485] sm:$0xff] %v2679
          %2712 = vst [vmem:[%s485 + $0x8] sm:$0xff] %v2680
          %2713 = vst [vmem:[%s485 + $0x10] sm:$0xff] %v2681
          %2714 = vst [vmem:[%s485 + $0x18] sm:$0xff] %v2682
          %2715 = vst [vmem:[%s485 + $0x20] sm:$0xff] %v2683
          %2716 = vst [vmem:[%s485 + $0x28] sm:$0xff] %v2684
          %2717 = vst [vmem:[%s485 + $0x30] sm:$0xff] %v2685
          %2718 = vst [vmem:[%s485 + $0x38] sm:$0xff] %v2686
          %2719 = vst [vmem:[%s485 + $0x40] sm:$0xff] %v2687
          %2720 = vst [vmem:[%s485 + $0x48] sm:$0xff] %v2688
          %2721 = vst [vmem:[%s485 + $0x50] sm:$0xff] %v2689
          %2722 = vst [vmem:[%s485 + $0x58] sm:$0xff] %v2690
          %2723 = vst [vmem:[%s485 + $0x60] sm:$0xff] %v2691
          %2724 = vst [vmem:[%s485 + $0x68] sm:$0xff] %v2692
          %2725 = vst [vmem:[%s485 + $0x70] sm:$0xff] %v2693
          %2726 = vst [vmem:[%s485 + $0x78] sm:$0xff] %v2694
          %2727 = vst [vmem:[%s485 + $0x80] sm:$0xff] %v2695
          %2728 = vst [vmem:[%s485 + $0x88] sm:$0xff] %v2696
          %2729 = vst [vmem:[%s485 + $0x90] sm:$0xff] %v2697
          %2730 = vst [vmem:[%s485 + $0x98] sm:$0xff] %v2698
          %2731 = vst [vmem:[%s485 + $0xa0] sm:$0xff] %v2699
          %2732 = vst [vmem:[%s485 + $0xa8] sm:$0xff] %v2700
          %2733 = vst [vmem:[%s485 + $0xb0] sm:$0xff] %v2701
          %2734 = vst [vmem:[%s485 + $0xb8] sm:$0xff] %v2702
          %2735 = vst [vmem:[%s485 + $0xc0] sm:$0xff] %v2703
          %2736 = vst [vmem:[%s485 + $0xc8] sm:$0xff] %v2704
          %2737 = vst [vmem:[%s485 + $0xd0] sm:$0xff] %v2705
          %2738 = vst [vmem:[%s485 + $0xd8] sm:$0xff] %v2706
          %2739 = vst [vmem:[%s485 + $0xe0] sm:$0xff] %v2707
          %2740 = vst [vmem:[%s485 + $0xe8] sm:$0xff] %v2708
          %2741 = vst [vmem:[%s485 + $0xf0] sm:$0xff] %v2709
          %2742 = vst [vmem:[%s485 + $0xf8] sm:$0xff] %v2710
          %v2743 = vld [vmem:[#allocation9] sm:$0xff]
          %v2744 = vld [vmem:[#allocation9 + $0x8] sm:$0xff]
          %v2745 = vld [vmem:[#allocation9 + $0x10] sm:$0xff]
          %v2746 = vld [vmem:[#allocation9 + $0x18] sm:$0xff]
          %v2747 = vld [vmem:[#allocation9 + $0x20] sm:$0xff]
          %v2748 = vld [vmem:[#allocation9 + $0x28] sm:$0xff]
          %v2749 = vld [vmem:[#allocation9 + $0x30] sm:$0xff]
          %v2750 = vld [vmem:[#allocation9 + $0x38] sm:$0xff]
          %v2751 = vld [vmem:[#allocation9 + $0x40] sm:$0xff]
          %v2752 = vld [vmem:[#allocation9 + $0x48] sm:$0xff]
          %v2753 = vld [vmem:[#allocation9 + $0x50] sm:$0xff]
          %v2754 = vld [vmem:[#allocation9 + $0x58] sm:$0xff]
          %v2755 = vld [vmem:[#allocation9 + $0x60] sm:$0xff]
          %v2756 = vld [vmem:[#allocation9 + $0x68] sm:$0xff]
          %v2757 = vld [vmem:[#allocation9 + $0x70] sm:$0xff]
          %v2758 = vld [vmem:[#allocation9 + $0x78] sm:$0xff]
          %v2759 = vld [vmem:[#allocation9 + $0x80] sm:$0xff]
          %v2760 = vld [vmem:[#allocation9 + $0x88] sm:$0xff]
          %v2761 = vld [vmem:[#allocation9 + $0x90] sm:$0xff]
          %v2762 = vld [vmem:[#allocation9 + $0x98] sm:$0xff]
          %v2763 = vld [vmem:[#allocation9 + $0xa0] sm:$0xff]
          %v2764 = vld [vmem:[#allocation9 + $0xa8] sm:$0xff]
          %v2765 = vld [vmem:[#allocation9 + $0xb0] sm:$0xff]
          %v2766 = vld [vmem:[#allocation9 + $0xb8] sm:$0xff]
          %v2767 = vld [vmem:[#allocation9 + $0xc0] sm:$0xff]
          %v2768 = vld [vmem:[#allocation9 + $0xc8] sm:$0xff]
          %v2769 = vld [vmem:[#allocation9 + $0xd0] sm:$0xff]
          %v2770 = vld [vmem:[#allocation9 + $0xd8] sm:$0xff]
          %v2771 = vld [vmem:[#allocation9 + $0xe0] sm:$0xff]
          %v2772 = vld [vmem:[#allocation9 + $0xe8] sm:$0xff]
          %v2773 = vld [vmem:[#allocation9 + $0xf0] sm:$0xff]
          %v2774 = vld [vmem:[#allocation9 + $0xf8] sm:$0xff]
          %2775 = vmatprep.subr.mxu0 %v2744
          %2776 = vmatpush1.msra.mxu0 %v2743
          %2777 = vmatprep.subr.mxu0 %v2746
          %2778 = vmatpush1.msra.mxu0 %v2745
          %2779 = vmatprep.subr.mxu0 %v2748
          %2780 = vmatpush1.msra.mxu0 %v2747
          %2781 = vmatprep.subr.mxu0 %v2750
          %2782 = vmatpush1.msra.mxu0 %v2749
          %2783 = vmatprep.subr.mxu0 %v2752
          %2784 = vmatpush1.msra.mxu0 %v2751
          %2785 = vmatprep.subr.mxu0 %v2754
          %2786 = vmatpush1.msra.mxu0 %v2753
          %2787 = vmatprep.subr.mxu0 %v2756
          %2788 = vmatpush1.msra.mxu0 %v2755
          %2789 = vmatprep.subr.mxu0 %v2758
          %2790 = vmatpush1.msra.mxu0 %v2757
          %2791 = vmatprep.subr.mxu0 %v2760
          %2792 = vmatpush1.msra.mxu0 %v2759
          %2793 = vmatprep.subr.mxu0 %v2762
          %2794 = vmatpush1.msra.mxu0 %v2761
          %2795 = vmatprep.subr.mxu0 %v2764
          %2796 = vmatpush1.msra.mxu0 %v2763
          %2797 = vmatprep.subr.mxu0 %v2766
          %2798 = vmatpush1.msra.mxu0 %v2765
          %2799 = vmatprep.subr.mxu0 %v2768
          %2800 = vmatpush1.msra.mxu0 %v2767
          %2801 = vmatprep.subr.mxu0 %v2770
          %2802 = vmatpush1.msra.mxu0 %v2769
          %2803 = vmatprep.subr.mxu0 %v2772
          %2804 = vmatpush1.msra.mxu0 %v2771
          %2805 = vmatprep.subr.mxu0 %v2774
          %2806 = vmatpush1.msra.mxu0 %v2773
          %2807 = vmatprep.subr.mxu0 0.0
          %2808 = vmatpush1.msra.mxu0 0.0
          %2809 = vmatprep.subr.mxu0 0.0
          %2810 = vmatpush1.msra.mxu0 0.0
          %2811 = vmatprep.subr.mxu0 0.0
          %2812 = vmatpush1.msra.mxu0 0.0
          %2813 = vmatprep.subr.mxu0 0.0
          %2814 = vmatpush1.msra.mxu0 0.0
          %2815 = vmatprep.subr.mxu0 0.0
          %2816 = vmatpush1.msra.mxu0 0.0
          %2817 = vmatprep.subr.mxu0 0.0
          %2818 = vmatpush1.msra.mxu0 0.0
          %2819 = vmatprep.subr.mxu0 0.0
          %2820 = vmatpush1.msra.mxu0 0.0
          %2821 = vmatprep.subr.mxu0 0.0
          %2822 = vmatpush1.msra.mxu0 0.0
          %2823 = vmatprep.subr.mxu0 0.0
          %2824 = vmatpush1.msra.mxu0 0.0
          %2825 = vmatprep.subr.mxu0 0.0
          %2826 = vmatpush1.msra.mxu0 0.0
          %2827 = vmatprep.subr.mxu0 0.0
          %2828 = vmatpush1.msra.mxu0 0.0
          %2829 = vmatprep.subr.mxu0 0.0
          %2830 = vmatpush1.msra.mxu0 0.0
          %2831 = vmatprep.subr.mxu0 0.0
          %2832 = vmatpush1.msra.mxu0 0.0
          %2833 = vmatprep.subr.mxu0 0.0
          %2834 = vmatpush1.msra.mxu0 0.0
          %2835 = vmatprep.subr.mxu0 0.0
          %2836 = vmatpush1.msra.mxu0 0.0
          %2837 = vmatprep.subr.mxu0 0.0
          %2838 = vmatpush1.msra.mxu0 0.0
          %2839 = vmatprep.mubr.f32.mxu0 0.0
          %2840 = vmatmul.mubr.f32.gmra.mrb[0].mxu0 %v2679
          %v2841 = vpop.f32.mrb[0].mxu0
          %v2842 = vadd.f32 0.0, %v2841
          %v2843 = vpop.f32.mrb[0].mxu0
          %v2844 = vadd.f32 0.0, %v2843
          %2845 = vmatprep.mubr.f32.mxu0 0.0
          %2846 = vmatmul.mubr.f32.gmra.mrb[0].mxu0 %v2680
          %v2847 = vpop.f32.mrb[0].mxu0
          %v2848 = vadd.f32 0.0, %v2847
          %v2849 = vpop.f32.mrb[0].mxu0
          %v2850 = vadd.f32 0.0, %v2849
          %2851 = vmatprep.mubr.f32.mxu0 0.0
          %2852 = vmatmul.mubr.f32.gmra.mrb[0].mxu0 %v2681
          %v2853 = vpop.f32.mrb[0].mxu0
          %v2854 = vadd.f32 0.0, %v2853
          %v2855 = vpop.f32.mrb[0].mxu0
          %v2856 = vadd.f32 0.0, %v2855
          %2857 = vmatprep.mubr.f32.mxu0 0.0
          %2858 = vmatmul.mubr.f32.gmra.mrb[0].mxu0 %v2682
          %v2859 = vpop.f32.mrb[0].mxu0
          %v2860 = vadd.f32 0.0, %v2859
          %v2861 = vpop.f32.mrb[0].mxu0
          %v2862 = vadd.f32 0.0, %v2861
          %2863 = vmatprep.mubr.f32.mxu0 0.0
          %2864 = vmatmul.mubr.f32.gmra.mrb[0].mxu0 %v2683
          %v2865 = vpop.f32.mrb[0].mxu0
          %v2866 = vadd.f32 0.0, %v2865
          %v2867 = vpop.f32.mrb[0].mxu0
          %v2868 = vadd.f32 0.0, %v2867
          %2869 = vmatprep.mubr.f32.mxu0 0.0
          %2870 = vmatmul.mubr.f32.gmra.mrb[0].mxu0 %v2684
          %v2871 = vpop.f32.mrb[0].mxu0
          %v2872 = vadd.f32 0.0, %v2871
          %v2873 = vpop.f32.mrb[0].mxu0
          %v2874 = vadd.f32 0.0, %v2873
          %2875 = vmatprep.mubr.f32.mxu0 0.0
          %2876 = vmatmul.mubr.f32.gmra.mrb[0].mxu0 %v2685
          %v2877 = vpop.f32.mrb[0].mxu0
          %v2878 = vadd.f32 0.0, %v2877
          %v2879 = vpop.f32.mrb[0].mxu0
          %v2880 = vadd.f32 0.0, %v2879
          %2881 = vmatprep.mubr.f32.mxu0 0.0
          %2882 = vmatmul.mubr.f32.gmra.mrb[0].mxu0 %v2686
          %v2883 = vpop.f32.mrb[0].mxu0
          %v2884 = vadd.f32 0.0, %v2883
          %v2885 = vpop.f32.mrb[0].mxu0
          %v2886 = vadd.f32 0.0, %v2885
          %2887 = vmatprep.mubr.f32.mxu0 0.0
          %2888 = vmatmul.mubr.f32.gmra.mrb[0].mxu0 %v2687
          %v2889 = vpop.f32.mrb[0].mxu0
          %v2890 = vadd.f32 0.0, %v2889
          %v2891 = vpop.f32.mrb[0].mxu0
          %v2892 = vadd.f32 0.0, %v2891
          %2893 = vmatprep.mubr.f32.mxu0 0.0
          %2894 = vmatmul.mubr.f32.gmra.mrb[0].mxu0 %v2688
          %v2895 = vpop.f32.mrb[0].mxu0
          %v2896 = vadd.f32 0.0, %v2895
          %v2897 = vpop.f32.mrb[0].mxu0
          %v2898 = vadd.f32 0.0, %v2897
          %2899 = vmatprep.mubr.f32.mxu0 0.0
          %2900 = vmatmul.mubr.f32.gmra.mrb[0].mxu0 %v2689
          %v2901 = vpop.f32.mrb[0].mxu0
          %v2902 = vadd.f32 0.0, %v2901
          %v2903 = vpop.f32.mrb[0].mxu0
          %v2904 = vadd.f32 0.0, %v2903
          %2905 = vmatprep.mubr.f32.mxu0 0.0
          %2906 = vmatmul.mubr.f32.gmra.mrb[0].mxu0 %v2690
          %v2907 = vpop.f32.mrb[0].mxu0
          %v2908 = vadd.f32 0.0, %v2907
          %v2909 = vpop.f32.mrb[0].mxu0
          %v2910 = vadd.f32 0.0, %v2909
          %2911 = vmatprep.mubr.f32.mxu0 0.0
          %2912 = vmatmul.mubr.f32.gmra.mrb[0].mxu0 %v2691
          %v2913 = vpop.f32.mrb[0].mxu0
          %v2914 = vadd.f32 0.0, %v2913
          %v2915 = vpop.f32.mrb[0].mxu0
          %v2916 = vadd.f32 0.0, %v2915
          %2917 = vmatprep.mubr.f32.mxu0 0.0
          %2918 = vmatmul.mubr.f32.gmra.mrb[0].mxu0 %v2692
          %v2919 = vpop.f32.mrb[0].mxu0
          %v2920 = vadd.f32 0.0, %v2919
          %v2921 = vpop.f32.mrb[0].mxu0
          %v2922 = vadd.f32 0.0, %v2921
          %2923 = vmatprep.mubr.f32.mxu0 0.0
          %2924 = vmatmul.mubr.f32.gmra.mrb[0].mxu0 %v2693
          %v2925 = vpop.f32.mrb[0].mxu0
          %v2926 = vadd.f32 0.0, %v2925
          %v2927 = vpop.f32.mrb[0].mxu0
          %v2928 = vadd.f32 0.0, %v2927
          %2929 = vmatprep.mubr.f32.mxu0 0.0
          %2930 = vmatmul.mubr.f32.gmra.mrb[0].mxu0 %v2694
          %v2931 = vpop.f32.mrb[0].mxu0
          %v2932 = vadd.f32 0.0, %v2931
          %v2933 = vpop.f32.mrb[0].mxu0
          %v2934 = vadd.f32 0.0, %v2933
          %2935 = vmatprep.mubr.f32.mxu0 0.0
          %2936 = vmatmul.mubr.f32.gmra.mrb[0].mxu0 %v2695
          %v2937 = vpop.f32.mrb[0].mxu0
          %v2938 = vadd.f32 0.0, %v2937
          %v2939 = vpop.f32.mrb[0].mxu0
          %v2940 = vadd.f32 0.0, %v2939
          %2941 = vmatprep.mubr.f32.mxu0 0.0
          %2942 = vmatmul.mubr.f32.gmra.mrb[0].mxu0 %v2696
          %v2943 = vpop.f32.mrb[0].mxu0
          %v2944 = vadd.f32 0.0, %v2943
          %v2945 = vpop.f32.mrb[0].mxu0
          %v2946 = vadd.f32 0.0, %v2945
          %2947 = vmatprep.mubr.f32.mxu0 0.0
          %2948 = vmatmul.mubr.f32.gmra.mrb[0].mxu0 %v2697
          %v2949 = vpop.f32.mrb[0].mxu0
          %v2950 = vadd.f32 0.0, %v2949
          %v2951 = vpop.f32.mrb[0].mxu0
          %v2952 = vadd.f32 0.0, %v2951
          %2953 = vmatprep.mubr.f32.mxu0 0.0
          %2954 = vmatmul.mubr.f32.gmra.mrb[0].mxu0 %v2698
          %v2955 = vpop.f32.mrb[0].mxu0
          %v2956 = vadd.f32 0.0, %v2955
          %v2957 = vpop.f32.mrb[0].mxu0
          %v2958 = vadd.f32 0.0, %v2957
          %2959 = vmatprep.mubr.f32.mxu0 0.0
          %2960 = vmatmul.mubr.f32.gmra.mrb[0].mxu0 %v2699
          %v2961 = vpop.f32.mrb[0].mxu0
          %v2962 = vadd.f32 0.0, %v2961
          %v2963 = vpop.f32.mrb[0].mxu0
          %v2964 = vadd.f32 0.0, %v2963
          %2965 = vmatprep.mubr.f32.mxu0 0.0
          %2966 = vmatmul.mubr.f32.gmra.mrb[0].mxu0 %v2700
          %v2967 = vpop.f32.mrb[0].mxu0
          %v2968 = vadd.f32 0.0, %v2967
          %v2969 = vpop.f32.mrb[0].mxu0
          %v2970 = vadd.f32 0.0, %v2969
          %2971 = vmatprep.mubr.f32.mxu0 0.0
          %2972 = vmatmul.mubr.f32.gmra.mrb[0].mxu0 %v2701
          %v2973 = vpop.f32.mrb[0].mxu0
          %v2974 = vadd.f32 0.0, %v2973
          %v2975 = vpop.f32.mrb[0].mxu0
          %v2976 = vadd.f32 0.0, %v2975
          %2977 = vmatprep.mubr.f32.mxu0 0.0
          %2978 = vmatmul.mubr.f32.gmra.mrb[0].mxu0 %v2702
          %v2979 = vpop.f32.mrb[0].mxu0
          %v2980 = vadd.f32 0.0, %v2979
          %v2981 = vpop.f32.mrb[0].mxu0
          %v2982 = vadd.f32 0.0, %v2981
          %2983 = vmatprep.mubr.f32.mxu0 0.0
          %2984 = vmatmul.mubr.f32.gmra.mrb[0].mxu0 %v2703
          %v2985 = vpop.f32.mrb[0].mxu0
          %v2986 = vadd.f32 0.0, %v2985
          %v2987 = vpop.f32.mrb[0].mxu0
          %v2988 = vadd.f32 0.0, %v2987
          %2989 = vmatprep.mubr.f32.mxu0 0.0
          %2990 = vmatmul.mubr.f32.gmra.mrb[0].mxu0 %v2704
          %v2991 = vpop.f32.mrb[0].mxu0
          %v2992 = vadd.f32 0.0, %v2991
          %v2993 = vpop.f32.mrb[0].mxu0
          %v2994 = vadd.f32 0.0, %v2993
          %2995 = vmatprep.mubr.f32.mxu0 0.0
          %2996 = vmatmul.mubr.f32.gmra.mrb[0].mxu0 %v2705
          %v2997 = vpop.f32.mrb[0].mxu0
          %v2998 = vadd.f32 0.0, %v2997
          %v2999 = vpop.f32.mrb[0].mxu0
          %v3000 = vadd.f32 0.0, %v2999
          %3001 = vmatprep.mubr.f32.mxu0 0.0
          %3002 = vmatmul.mubr.f32.gmra.mrb[0].mxu0 %v2706
          %v3003 = vpop.f32.mrb[0].mxu0
          %v3004 = vadd.f32 0.0, %v3003
          %v3005 = vpop.f32.mrb[0].mxu0
          %v3006 = vadd.f32 0.0, %v3005
          %3007 = vmatprep.mubr.f32.mxu0 0.0
          %3008 = vmatmul.mubr.f32.gmra.mrb[0].mxu0 %v2707
          %v3009 = vpop.f32.mrb[0].mxu0
          %v3010 = vadd.f32 0.0, %v3009
          %v3011 = vpop.f32.mrb[0].mxu0
          %v3012 = vadd.f32 0.0, %v3011
          %3013 = vmatprep.mubr.f32.mxu0 0.0
          %3014 = vmatmul.mubr.f32.gmra.mrb[0].mxu0 %v2708
          %v3015 = vpop.f32.mrb[0].mxu0
          %v3016 = vadd.f32 0.0, %v3015
          %v3017 = vpop.f32.mrb[0].mxu0
          %v3018 = vadd.f32 0.0, %v3017
          %3019 = vmatprep.mubr.f32.mxu0 0.0
          %3020 = vmatmul.mubr.f32.gmra.mrb[0].mxu0 %v2709
          %v3021 = vpop.f32.mrb[0].mxu0
          %v3022 = vadd.f32 0.0, %v3021
          %v3023 = vpop.f32.mrb[0].mxu0
          %v3024 = vadd.f32 0.0, %v3023
          %3025 = vmatprep.mubr.f32.mxu0 0.0
          %3026 = vmatmul.mubr.f32.gmra.mrb[0].mxu0 %v2710
          %v3027 = vpop.f32.mrb[0].mxu0
          %v3028 = vadd.f32 0.0, %v3027
          %v3029 = vpop.f32.mrb[0].mxu0
          %v3030 = vadd.f32 0.0, %v3029
          %3031 = vdwg.mxu0
          %v3032 = vpack.c.bf16 %v2848, %v2842
          %v3033 = vpack.c.bf16 %v2850, %v2844
          %v3034 = vpack.c.bf16 %v2860, %v2854
          %v3035 = vpack.c.bf16 %v2862, %v2856
          %v3036 = vpack.c.bf16 %v2872, %v2866
          %v3037 = vpack.c.bf16 %v2874, %v2868
          %v3038 = vpack.c.bf16 %v2884, %v2878
          %v3039 = vpack.c.bf16 %v2886, %v2880
          %v3040 = vpack.c.bf16 %v2896, %v2890
          %v3041 = vpack.c.bf16 %v2898, %v2892
          %v3042 = vpack.c.bf16 %v2908, %v2902
          %v3043 = vpack.c.bf16 %v2910, %v2904
          %v3044 = vpack.c.bf16 %v2920, %v2914
          %v3045 = vpack.c.bf16 %v2922, %v2916
          %v3046 = vpack.c.bf16 %v2932, %v2926
          %v3047 = vpack.c.bf16 %v2934, %v2928
          %v3048 = vpack.c.bf16 %v2944, %v2938
          %v3049 = vpack.c.bf16 %v2946, %v2940
          %v3050 = vpack.c.bf16 %v2956, %v2950
          %v3051 = vpack.c.bf16 %v2958, %v2952
          %v3052 = vpack.c.bf16 %v2968, %v2962
          %v3053 = vpack.c.bf16 %v2970, %v2964
          %v3054 = vpack.c.bf16 %v2980, %v2974
          %v3055 = vpack.c.bf16 %v2982, %v2976
          %v3056 = vpack.c.bf16 %v2992, %v2986
          %v3057 = vpack.c.bf16 %v2994, %v2988
          %v3058 = vpack.c.bf16 %v3004, %v2998
          %v3059 = vpack.c.bf16 %v3006, %v3000
          %v3060 = vpack.c.bf16 %v3016, %v3010
          %v3061 = vpack.c.bf16 %v3018, %v3012
          %v3062 = vpack.c.bf16 %v3028, %v3022
          %v3063 = vpack.c.bf16 %v3030, %v3024
          %v3096 = vunpack.c.l.b16 %v3032
          %v3097 = vunpack.c.l.b16 %v3033
          %v3098 = vunpack.c.h.b16 %v3032
          %v3099 = vunpack.c.h.b16 %v3033
          %v3100 = vunpack.c.l.b16 %v3034
          %v3101 = vunpack.c.l.b16 %v3035
          %v3102 = vunpack.c.h.b16 %v3034
          %v3103 = vunpack.c.h.b16 %v3035
          %v3104 = vunpack.c.l.b16 %v3036
          %v3105 = vunpack.c.l.b16 %v3037
          %v3106 = vunpack.c.h.b16 %v3036
          %v3107 = vunpack.c.h.b16 %v3037
          %v3108 = vunpack.c.l.b16 %v3038
          %v3109 = vunpack.c.l.b16 %v3039
          %v3110 = vunpack.c.h.b16 %v3038
          %v3111 = vunpack.c.h.b16 %v3039
          %v3112 = vunpack.c.l.b16 %v3040
          %v3113 = vunpack.c.l.b16 %v3041
          %v3114 = vunpack.c.h.b16 %v3040
          %v3115 = vunpack.c.h.b16 %v3041
          %v3116 = vunpack.c.l.b16 %v3042
          %v3117 = vunpack.c.l.b16 %v3043
          %v3118 = vunpack.c.h.b16 %v3042
          %v3119 = vunpack.c.h.b16 %v3043
          %v3120 = vunpack.c.l.b16 %v3044
          %v3121 = vunpack.c.l.b16 %v3045
          %v3122 = vunpack.c.h.b16 %v3044
          %v3123 = vunpack.c.h.b16 %v3045
          %v3124 = vunpack.c.l.b16 %v3046
          %v3125 = vunpack.c.l.b16 %v3047
          %v3126 = vunpack.c.h.b16 %v3046
          %v3127 = vunpack.c.h.b16 %v3047
          %v3128 = vunpack.c.l.b16 %v3048
          %v3129 = vunpack.c.l.b16 %v3049
          %v3130 = vunpack.c.h.b16 %v3048
          %v3131 = vunpack.c.h.b16 %v3049
          %v3132 = vunpack.c.l.b16 %v3050
          %v3133 = vunpack.c.l.b16 %v3051
          %v3134 = vunpack.c.h.b16 %v3050
          %v3135 = vunpack.c.h.b16 %v3051
          %v3136 = vunpack.c.l.b16 %v3052
          %v3137 = vunpack.c.l.b16 %v3053
          %v3138 = vunpack.c.h.b16 %v3052
          %v3139 = vunpack.c.h.b16 %v3053
          %v3140 = vunpack.c.l.b16 %v3054
          %v3141 = vunpack.c.l.b16 %v3055
          %v3142 = vunpack.c.h.b16 %v3054
          %v3143 = vunpack.c.h.b16 %v3055
          %v3144 = vunpack.c.l.b16 %v3056
          %v3145 = vunpack.c.l.b16 %v3057
          %v3146 = vunpack.c.h.b16 %v3056
          %v3147 = vunpack.c.h.b16 %v3057
          %v3148 = vunpack.c.l.b16 %v3058
          %v3149 = vunpack.c.l.b16 %v3059
          %v3150 = vunpack.c.h.b16 %v3058
          %v3151 = vunpack.c.h.b16 %v3059
          %v3152 = vunpack.c.l.b16 %v3060
          %v3153 = vunpack.c.l.b16 %v3061
          %v3154 = vunpack.c.h.b16 %v3060
          %v3155 = vunpack.c.h.b16 %v3061
          %v3156 = vunpack.c.l.b16 %v3062
          %v3157 = vunpack.c.l.b16 %v3063
          %v3158 = vunpack.c.h.b16 %v3062
          %v3159 = vunpack.c.h.b16 %v3063
          %v3160 = vpack.c.b16 %v3097, %v3096
          %v3161 = vpack.c.b16 %v3099, %v3098
          %v3162 = vpack.c.b16 %v3101, %v3100
          %v3163 = vpack.c.b16 %v3103, %v3102
          %v3164 = vpack.c.b16 %v3105, %v3104
          %v3165 = vpack.c.b16 %v3107, %v3106
          %v3166 = vpack.c.b16 %v3109, %v3108
          %v3167 = vpack.c.b16 %v3111, %v3110
          %v3168 = vpack.c.b16 %v3113, %v3112
          %v3169 = vpack.c.b16 %v3115, %v3114
          %v3170 = vpack.c.b16 %v3117, %v3116
          %v3171 = vpack.c.b16 %v3119, %v3118
          %v3172 = vpack.c.b16 %v3121, %v3120
          %v3173 = vpack.c.b16 %v3123, %v3122
          %v3174 = vpack.c.b16 %v3125, %v3124
          %v3175 = vpack.c.b16 %v3127, %v3126
          %v3176 = vpack.c.b16 %v3129, %v3128
          %v3177 = vpack.c.b16 %v3131, %v3130
          %v3178 = vpack.c.b16 %v3133, %v3132
          %v3179 = vpack.c.b16 %v3135, %v3134
          %v3180 = vpack.c.b16 %v3137, %v3136
          %v3181 = vpack.c.b16 %v3139, %v3138
          %v3182 = vpack.c.b16 %v3141, %v3140
          %v3183 = vpack.c.b16 %v3143, %v3142
          %v3184 = vpack.c.b16 %v3145, %v3144
          %v3185 = vpack.c.b16 %v3147, %v3146
          %v3186 = vpack.c.b16 %v3149, %v3148
          %v3187 = vpack.c.b16 %v3151, %v3150
          %v3188 = vpack.c.b16 %v3153, %v3152
          %v3189 = vpack.c.b16 %v3155, %v3154
          %v3190 = vpack.c.b16 %v3157, %v3156
          %v3191 = vpack.c.b16 %v3159, %v3158
          %3224 = vst [vmem:[%s492] sm:$0xff] %v3160
          %3225 = vst [vmem:[%s492 + $0x8] sm:$0xff] %v3161
          %3226 = vst [vmem:[%s492 + $0x10] sm:$0xff] %v3162
          %3227 = vst [vmem:[%s492 + $0x18] sm:$0xff] %v3163
          %3228 = vst [vmem:[%s492 + $0x20] sm:$0xff] %v3164
          %3229 = vst [vmem:[%s492 + $0x28] sm:$0xff] %v3165
          %3230 = vst [vmem:[%s492 + $0x30] sm:$0xff] %v3166
          %3231 = vst [vmem:[%s492 + $0x38] sm:$0xff] %v3167
          %3232 = vst [vmem:[%s492 + $0x40] sm:$0xff] %v3168
          %3233 = vst [vmem:[%s492 + $0x48] sm:$0xff] %v3169
          %3234 = vst [vmem:[%s492 + $0x50] sm:$0xff] %v3170
          %3235 = vst [vmem:[%s492 + $0x58] sm:$0xff] %v3171
          %3236 = vst [vmem:[%s492 + $0x60] sm:$0xff] %v3172
          %3237 = vst [vmem:[%s492 + $0x68] sm:$0xff] %v3173
          %3238 = vst [vmem:[%s492 + $0x70] sm:$0xff] %v3174
          %3239 = vst [vmem:[%s492 + $0x78] sm:$0xff] %v3175
          %3240 = vst [vmem:[%s492 + $0x80] sm:$0xff] %v3176
          %3241 = vst [vmem:[%s492 + $0x88] sm:$0xff] %v3177
          %3242 = vst [vmem:[%s492 + $0x90] sm:$0xff] %v3178
          %3243 = vst [vmem:[%s492 + $0x98] sm:$0xff] %v3179
          %3244 = vst [vmem:[%s492 + $0xa0] sm:$0xff] %v3180
          %3245 = vst [vmem:[%s492 + $0xa8] sm:$0xff] %v3181
          %3246 = vst [vmem:[%s492 + $0xb0] sm:$0xff] %v3182
          %3247 = vst [vmem:[%s492 + $0xb8] sm:$0xff] %v3183
          %3248 = vst [vmem:[%s492 + $0xc0] sm:$0xff] %v3184
          %3249 = vst [vmem:[%s492 + $0xc8] sm:$0xff] %v3185
          %3250 = vst [vmem:[%s492 + $0xd0] sm:$0xff] %v3186
          %3251 = vst [vmem:[%s492 + $0xd8] sm:$0xff] %v3187
          %3252 = vst [vmem:[%s492 + $0xe0] sm:$0xff] %v3188
          %3253 = vst [vmem:[%s492 + $0xe8] sm:$0xff] %v3189
          %3254 = vst [vmem:[%s492 + $0xf0] sm:$0xff] %v3190
          %3255 = vst [vmem:[%s492 + $0xf8] sm:$0xff] %v3191
          %v3256 = vld [vmem:[#allocation11] sm:$0xff]
          %v3257 = vld [vmem:[#allocation11 + $0x8] sm:$0xff]
          %v3258 = vld [vmem:[#allocation11 + $0x10] sm:$0xff]
          %v3259 = vld [vmem:[#allocation11 + $0x18] sm:$0xff]
          %v3260 = vld [vmem:[#allocation11 + $0x20] sm:$0xff]
          %v3261 = vld [vmem:[#allocation11 + $0x28] sm:$0xff]
          %v3262 = vld [vmem:[#allocation11 + $0x30] sm:$0xff]
          %v3263 = vld [vmem:[#allocation11 + $0x38] sm:$0xff]
          %v3264 = vld [vmem:[#allocation11 + $0x40] sm:$0xff]
          %v3265 = vld [vmem:[#allocation11 + $0x48] sm:$0xff]
          %v3266 = vld [vmem:[#allocation11 + $0x50] sm:$0xff]
          %v3267 = vld [vmem:[#allocation11 + $0x58] sm:$0xff]
          %v3268 = vld [vmem:[#allocation11 + $0x60] sm:$0xff]
          %v3269 = vld [vmem:[#allocation11 + $0x68] sm:$0xff]
          %v3270 = vld [vmem:[#allocation11 + $0x70] sm:$0xff]
          %v3271 = vld [vmem:[#allocation11 + $0x78] sm:$0xff]
          %v3272 = vld [vmem:[#allocation11 + $0x80] sm:$0xff]
          %v3273 = vld [vmem:[#allocation11 + $0x88] sm:$0xff]
          %v3274 = vld [vmem:[#allocation11 + $0x90] sm:$0xff]
          %v3275 = vld [vmem:[#allocation11 + $0x98] sm:$0xff]
          %v3276 = vld [vmem:[#allocation11 + $0xa0] sm:$0xff]
          %v3277 = vld [vmem:[#allocation11 + $0xa8] sm:$0xff]
          %v3278 = vld [vmem:[#allocation11 + $0xb0] sm:$0xff]
          %v3279 = vld [vmem:[#allocation11 + $0xb8] sm:$0xff]
          %v3280 = vld [vmem:[#allocation11 + $0xc0] sm:$0xff]
          %v3281 = vld [vmem:[#allocation11 + $0xc8] sm:$0xff]
          %v3282 = vld [vmem:[#allocation11 + $0xd0] sm:$0xff]
          %v3283 = vld [vmem:[#allocation11 + $0xd8] sm:$0xff]
          %v3284 = vld [vmem:[#allocation11 + $0xe0] sm:$0xff]
          %v3285 = vld [vmem:[#allocation11 + $0xe8] sm:$0xff]
          %v3286 = vld [vmem:[#allocation11 + $0xf0] sm:$0xff]
          %v3287 = vld [vmem:[#allocation11 + $0xf8] sm:$0xff]
          %3288 = vmatprep.subr.mxu0 %v3257
          %3289 = vmatpush1.msra.mxu0 %v3256
          %3290 = vmatprep.subr.mxu0 %v3259
          %3291 = vmatpush1.msra.mxu0 %v3258
          %3292 = vmatprep.subr.mxu0 %v3261
          %3293 = vmatpush1.msra.mxu0 %v3260
          %3294 = vmatprep.subr.mxu0 %v3263
          %3295 = vmatpush1.msra.mxu0 %v3262
          %3296 = vmatprep.subr.mxu0 %v3265
          %3297 = vmatpush1.msra.mxu0 %v3264
          %3298 = vmatprep.subr.mxu0 %v3267
          %3299 = vmatpush1.msra.mxu0 %v3266
          %3300 = vmatprep.subr.mxu0 %v3269
          %3301 = vmatpush1.msra.mxu0 %v3268
          %3302 = vmatprep.subr.mxu0 %v3271
          %3303 = vmatpush1.msra.mxu0 %v3270
          %3304 = vmatprep.subr.mxu0 %v3273
          %3305 = vmatpush1.msra.mxu0 %v3272
          %3306 = vmatprep.subr.mxu0 %v3275
          %3307 = vmatpush1.msra.mxu0 %v3274
          %3308 = vmatprep.subr.mxu0 %v3277
          %3309 = vmatpush1.msra.mxu0 %v3276
          %3310 = vmatprep.subr.mxu0 %v3279
          %3311 = vmatpush1.msra.mxu0 %v3278
          %3312 = vmatprep.subr.mxu0 %v3281
          %3313 = vmatpush1.msra.mxu0 %v3280
          %3314 = vmatprep.subr.mxu0 %v3283
          %3315 = vmatpush1.msra.mxu0 %v3282
          %3316 = vmatprep.subr.mxu0 %v3285
          %3317 = vmatpush1.msra.mxu0 %v3284
          %3318 = vmatprep.subr.mxu0 %v3287
          %3319 = vmatpush1.msra.mxu0 %v3286
          %3320 = vmatprep.subr.mxu0 0.0
          %3321 = vmatpush1.msra.mxu0 0.0
          %3322 = vmatprep.subr.mxu0 0.0
          %3323 = vmatpush1.msra.mxu0 0.0
          %3324 = vmatprep.subr.mxu0 0.0
          %3325 = vmatpush1.msra.mxu0 0.0
          %3326 = vmatprep.subr.mxu0 0.0
          %3327 = vmatpush1.msra.mxu0 0.0
          %3328 = vmatprep.subr.mxu0 0.0
          %3329 = vmatpush1.msra.mxu0 0.0
          %3330 = vmatprep.subr.mxu0 0.0
          %3331 = vmatpush1.msra.mxu0 0.0
          %3332 = vmatprep.subr.mxu0 0.0
          %3333 = vmatpush1.msra.mxu0 0.0
          %3334 = vmatprep.subr.mxu0 0.0
          %3335 = vmatpush1.msra.mxu0 0.0
          %3336 = vmatprep.subr.mxu0 0.0
          %3337 = vmatpush1.msra.mxu0 0.0
          %3338 = vmatprep.subr.mxu0 0.0
          %3339 = vmatpush1.msra.mxu0 0.0
          %3340 = vmatprep.subr.mxu0 0.0
          %3341 = vmatpush1.msra.mxu0 0.0
          %3342 = vmatprep.subr.mxu0 0.0
          %3343 = vmatpush1.msra.mxu0 0.0
          %3344 = vmatprep.subr.mxu0 0.0
          %3345 = vmatpush1.msra.mxu0 0.0
          %3346 = vmatprep.subr.mxu0 0.0
          %3347 = vmatpush1.msra.mxu0 0.0
          %3348 = vmatprep.subr.mxu0 0.0
          %3349 = vmatpush1.msra.mxu0 0.0
          %3350 = vmatprep.subr.mxu0 0.0
          %3351 = vmatpush1.msra.mxu0 0.0
          %3352 = vmatprep.mubr.f32.mxu0 0.0
          %3353 = vmatmul.mubr.f32.gmra.mrb[0].mxu0 %v2679
          %v3354 = vpop.f32.mrb[0].mxu0
          %v3355 = vadd.f32 0.0, %v3354
          %v3356 = vpop.f32.mrb[0].mxu0
          %v3357 = vadd.f32 0.0, %v3356
          %3358 = vmatprep.mubr.f32.mxu0 0.0
          %3359 = vmatmul.mubr.f32.gmra.mrb[0].mxu0 %v2680
          %v3360 = vpop.f32.mrb[0].mxu0
          %v3361 = vadd.f32 0.0, %v3360
          %v3362 = vpop.f32.mrb[0].mxu0
          %v3363 = vadd.f32 0.0, %v3362
          %3364 = vmatprep.mubr.f32.mxu0 0.0
          %3365 = vmatmul.mubr.f32.gmra.mrb[0].mxu0 %v2681
          %v3366 = vpop.f32.mrb[0].mxu0
          %v3367 = vadd.f32 0.0, %v3366
          %v3368 = vpop.f32.mrb[0].mxu0
          %v3369 = vadd.f32 0.0, %v3368
          %3370 = vmatprep.mubr.f32.mxu0 0.0
          %3371 = vmatmul.mubr.f32.gmra.mrb[0].mxu0 %v2682
          %v3372 = vpop.f32.mrb[0].mxu0
          %v3373 = vadd.f32 0.0, %v3372
          %v3374 = vpop.f32.mrb[0].mxu0
          %v3375 = vadd.f32 0.0, %v3374
          %3376 = vmatprep.mubr.f32.mxu0 0.0
          %3377 = vmatmul.mubr.f32.gmra.mrb[0].mxu0 %v2683
          %v3378 = vpop.f32.mrb[0].mxu0
          %v3379 = vadd.f32 0.0, %v3378
          %v3380 = vpop.f32.mrb[0].mxu0
          %v3381 = vadd.f32 0.0, %v3380
          %3382 = vmatprep.mubr.f32.mxu0 0.0
          %3383 = vmatmul.mubr.f32.gmra.mrb[0].mxu0 %v2684
          %v3384 = vpop.f32.mrb[0].mxu0
          %v3385 = vadd.f32 0.0, %v3384
          %v3386 = vpop.f32.mrb[0].mxu0
          %v3387 = vadd.f32 0.0, %v3386
          %3388 = vmatprep.mubr.f32.mxu0 0.0
          %3389 = vmatmul.mubr.f32.gmra.mrb[0].mxu0 %v2685
          %v3390 = vpop.f32.mrb[0].mxu0
          %v3391 = vadd.f32 0.0, %v3390
          %v3392 = vpop.f32.mrb[0].mxu0
          %v3393 = vadd.f32 0.0, %v3392
          %3394 = vmatprep.mubr.f32.mxu0 0.0
          %3395 = vmatmul.mubr.f32.gmra.mrb[0].mxu0 %v2686
          %v3396 = vpop.f32.mrb[0].mxu0
          %v3397 = vadd.f32 0.0, %v3396
          %v3398 = vpop.f32.mrb[0].mxu0
          %v3399 = vadd.f32 0.0, %v3398
          %3400 = vmatprep.mubr.f32.mxu0 0.0
          %3401 = vmatmul.mubr.f32.gmra.mrb[0].mxu0 %v2687
          %v3402 = vpop.f32.mrb[0].mxu0
          %v3403 = vadd.f32 0.0, %v3402
          %v3404 = vpop.f32.mrb[0].mxu0
          %v3405 = vadd.f32 0.0, %v3404
          %3406 = vmatprep.mubr.f32.mxu0 0.0
          %3407 = vmatmul.mubr.f32.gmra.mrb[0].mxu0 %v2688
          %v3408 = vpop.f32.mrb[0].mxu0
          %v3409 = vadd.f32 0.0, %v3408
          %v3410 = vpop.f32.mrb[0].mxu0
          %v3411 = vadd.f32 0.0, %v3410
          %3412 = vmatprep.mubr.f32.mxu0 0.0
          %3413 = vmatmul.mubr.f32.gmra.mrb[0].mxu0 %v2689
          %v3414 = vpop.f32.mrb[0].mxu0
          %v3415 = vadd.f32 0.0, %v3414
          %v3416 = vpop.f32.mrb[0].mxu0
          %v3417 = vadd.f32 0.0, %v3416
          %3418 = vmatprep.mubr.f32.mxu0 0.0
          %3419 = vmatmul.mubr.f32.gmra.mrb[0].mxu0 %v2690
          %v3420 = vpop.f32.mrb[0].mxu0
          %v3421 = vadd.f32 0.0, %v3420
          %v3422 = vpop.f32.mrb[0].mxu0
          %v3423 = vadd.f32 0.0, %v3422
          %3424 = vmatprep.mubr.f32.mxu0 0.0
          %3425 = vmatmul.mubr.f32.gmra.mrb[0].mxu0 %v2691
          %v3426 = vpop.f32.mrb[0].mxu0
          %v3427 = vadd.f32 0.0, %v3426
          %v3428 = vpop.f32.mrb[0].mxu0
          %v3429 = vadd.f32 0.0, %v3428
          %3430 = vmatprep.mubr.f32.mxu0 0.0
          %3431 = vmatmul.mubr.f32.gmra.mrb[0].mxu0 %v2692
          %v3432 = vpop.f32.mrb[0].mxu0
          %v3433 = vadd.f32 0.0, %v3432
          %v3434 = vpop.f32.mrb[0].mxu0
          %v3435 = vadd.f32 0.0, %v3434
          %3436 = vmatprep.mubr.f32.mxu0 0.0
          %3437 = vmatmul.mubr.f32.gmra.mrb[0].mxu0 %v2693
          %v3438 = vpop.f32.mrb[0].mxu0
          %v3439 = vadd.f32 0.0, %v3438
          %v3440 = vpop.f32.mrb[0].mxu0
          %v3441 = vadd.f32 0.0, %v3440
          %3442 = vmatprep.mubr.f32.mxu0 0.0
          %3443 = vmatmul.mubr.f32.gmra.mrb[0].mxu0 %v2694
          %v3444 = vpop.f32.mrb[0].mxu0
          %v3445 = vadd.f32 0.0, %v3444
          %v3446 = vpop.f32.mrb[0].mxu0
          %v3447 = vadd.f32 0.0, %v3446
          %3448 = vmatprep.mubr.f32.mxu0 0.0
          %3449 = vmatmul.mubr.f32.gmra.mrb[0].mxu0 %v2695
          %v3450 = vpop.f32.mrb[0].mxu0
          %v3451 = vadd.f32 0.0, %v3450
          %v3452 = vpop.f32.mrb[0].mxu0
          %v3453 = vadd.f32 0.0, %v3452
          %3454 = vmatprep.mubr.f32.mxu0 0.0
          %3455 = vmatmul.mubr.f32.gmra.mrb[0].mxu0 %v2696
          %v3456 = vpop.f32.mrb[0].mxu0
          %v3457 = vadd.f32 0.0, %v3456
          %v3458 = vpop.f32.mrb[0].mxu0
          %v3459 = vadd.f32 0.0, %v3458
          %3460 = vmatprep.mubr.f32.mxu0 0.0
          %3461 = vmatmul.mubr.f32.gmra.mrb[0].mxu0 %v2697
          %v3462 = vpop.f32.mrb[0].mxu0
          %v3463 = vadd.f32 0.0, %v3462
          %v3464 = vpop.f32.mrb[0].mxu0
          %v3465 = vadd.f32 0.0, %v3464
          %3466 = vmatprep.mubr.f32.mxu0 0.0
          %3467 = vmatmul.mubr.f32.gmra.mrb[0].mxu0 %v2698
          %v3468 = vpop.f32.mrb[0].mxu0
          %v3469 = vadd.f32 0.0, %v3468
          %v3470 = vpop.f32.mrb[0].mxu0
          %v3471 = vadd.f32 0.0, %v3470
          %3472 = vmatprep.mubr.f32.mxu0 0.0
          %3473 = vmatmul.mubr.f32.gmra.mrb[0].mxu0 %v2699
          %v3474 = vpop.f32.mrb[0].mxu0
          %v3475 = vadd.f32 0.0, %v3474
          %v3476 = vpop.f32.mrb[0].mxu0
          %v3477 = vadd.f32 0.0, %v3476
          %3478 = vmatprep.mubr.f32.mxu0 0.0
          %3479 = vmatmul.mubr.f32.gmra.mrb[0].mxu0 %v2700
          %v3480 = vpop.f32.mrb[0].mxu0
          %v3481 = vadd.f32 0.0, %v3480
          %v3482 = vpop.f32.mrb[0].mxu0
          %v3483 = vadd.f32 0.0, %v3482
          %3484 = vmatprep.mubr.f32.mxu0 0.0
          %3485 = vmatmul.mubr.f32.gmra.mrb[0].mxu0 %v2701
          %v3486 = vpop.f32.mrb[0].mxu0
          %v3487 = vadd.f32 0.0, %v3486
          %v3488 = vpop.f32.mrb[0].mxu0
          %v3489 = vadd.f32 0.0, %v3488
          %3490 = vmatprep.mubr.f32.mxu0 0.0
          %3491 = vmatmul.mubr.f32.gmra.mrb[0].mxu0 %v2702
          %v3492 = vpop.f32.mrb[0].mxu0
          %v3493 = vadd.f32 0.0, %v3492
          %v3494 = vpop.f32.mrb[0].mxu0
          %v3495 = vadd.f32 0.0, %v3494
          %3496 = vmatprep.mubr.f32.mxu0 0.0
          %3497 = vmatmul.mubr.f32.gmra.mrb[0].mxu0 %v2703
          %v3498 = vpop.f32.mrb[0].mxu0
          %v3499 = vadd.f32 0.0, %v3498
          %v3500 = vpop.f32.mrb[0].mxu0
          %v3501 = vadd.f32 0.0, %v3500
          %3502 = vmatprep.mubr.f32.mxu0 0.0
          %3503 = vmatmul.mubr.f32.gmra.mrb[0].mxu0 %v2704
          %v3504 = vpop.f32.mrb[0].mxu0
          %v3505 = vadd.f32 0.0, %v3504
          %v3506 = vpop.f32.mrb[0].mxu0
          %v3507 = vadd.f32 0.0, %v3506
          %3508 = vmatprep.mubr.f32.mxu0 0.0
          %3509 = vmatmul.mubr.f32.gmra.mrb[0].mxu0 %v2705
          %v3510 = vpop.f32.mrb[0].mxu0
          %v3511 = vadd.f32 0.0, %v3510
          %v3512 = vpop.f32.mrb[0].mxu0
          %v3513 = vadd.f32 0.0, %v3512
          %3514 = vmatprep.mubr.f32.mxu0 0.0
          %3515 = vmatmul.mubr.f32.gmra.mrb[0].mxu0 %v2706
          %v3516 = vpop.f32.mrb[0].mxu0
          %v3517 = vadd.f32 0.0, %v3516
          %v3518 = vpop.f32.mrb[0].mxu0
          %v3519 = vadd.f32 0.0, %v3518
          %3520 = vmatprep.mubr.f32.mxu0 0.0
          %3521 = vmatmul.mubr.f32.gmra.mrb[0].mxu0 %v2707
          %v3522 = vpop.f32.mrb[0].mxu0
          %v3523 = vadd.f32 0.0, %v3522
          %v3524 = vpop.f32.mrb[0].mxu0
          %v3525 = vadd.f32 0.0, %v3524
          %3526 = vmatprep.mubr.f32.mxu0 0.0
          %3527 = vmatmul.mubr.f32.gmra.mrb[0].mxu0 %v2708
          %v3528 = vpop.f32.mrb[0].mxu0
          %v3529 = vadd.f32 0.0, %v3528
          %v3530 = vpop.f32.mrb[0].mxu0
          %v3531 = vadd.f32 0.0, %v3530
          %3532 = vmatprep.mubr.f32.mxu0 0.0
          %3533 = vmatmul.mubr.f32.gmra.mrb[0].mxu0 %v2709
          %v3534 = vpop.f32.mrb[0].mxu0
          %v3535 = vadd.f32 0.0, %v3534
          %v3536 = vpop.f32.mrb[0].mxu0
          %v3537 = vadd.f32 0.0, %v3536
          %3538 = vmatprep.mubr.f32.mxu0 0.0
          %3539 = vmatmul.mubr.f32.gmra.mrb[0].mxu0 %v2710
          %v3540 = vpop.f32.mrb[0].mxu0
          %v3541 = vadd.f32 0.0, %v3540
          %v3542 = vpop.f32.mrb[0].mxu0
          %v3543 = vadd.f32 0.0, %v3542
          %3544 = vdwg.mxu0
          %v3545 = vpack.c.bf16 %v3361, %v3355
          %v3546 = vpack.c.bf16 %v3363, %v3357
          %v3547 = vpack.c.bf16 %v3373, %v3367
          %v3548 = vpack.c.bf16 %v3375, %v3369
          %v3549 = vpack.c.bf16 %v3385, %v3379
          %v3550 = vpack.c.bf16 %v3387, %v3381
          %v3551 = vpack.c.bf16 %v3397, %v3391
          %v3552 = vpack.c.bf16 %v3399, %v3393
          %v3553 = vpack.c.bf16 %v3409, %v3403
          %v3554 = vpack.c.bf16 %v3411, %v3405
          %v3555 = vpack.c.bf16 %v3421, %v3415
          %v3556 = vpack.c.bf16 %v3423, %v3417
          %v3557 = vpack.c.bf16 %v3433, %v3427
          %v3558 = vpack.c.bf16 %v3435, %v3429
          %v3559 = vpack.c.bf16 %v3445, %v3439
          %v3560 = vpack.c.bf16 %v3447, %v3441
          %v3561 = vpack.c.bf16 %v3457, %v3451
          %v3562 = vpack.c.bf16 %v3459, %v3453
          %v3563 = vpack.c.bf16 %v3469, %v3463
          %v3564 = vpack.c.bf16 %v3471, %v3465
          %v3565 = vpack.c.bf16 %v3481, %v3475
          %v3566 = vpack.c.bf16 %v3483, %v3477
          %v3567 = vpack.c.bf16 %v3493, %v3487
          %v3568 = vpack.c.bf16 %v3495, %v3489
          %v3569 = vpack.c.bf16 %v3505, %v3499
          %v3570 = vpack.c.bf16 %v3507, %v3501
          %v3571 = vpack.c.bf16 %v3517, %v3511
          %v3572 = vpack.c.bf16 %v3519, %v3513
          %v3573 = vpack.c.bf16 %v3529, %v3523
          %v3574 = vpack.c.bf16 %v3531, %v3525
          %v3575 = vpack.c.bf16 %v3541, %v3535
          %v3576 = vpack.c.bf16 %v3543, %v3537
          %v3609 = vunpack.c.l.b16 %v3545
          %v3610 = vunpack.c.l.b16 %v3546
          %v3611 = vunpack.c.h.b16 %v3545
          %v3612 = vunpack.c.h.b16 %v3546
          %v3613 = vunpack.c.l.b16 %v3547
          %v3614 = vunpack.c.l.b16 %v3548
          %v3615 = vunpack.c.h.b16 %v3547
          %v3616 = vunpack.c.h.b16 %v3548
          %v3617 = vunpack.c.l.b16 %v3549
          %v3618 = vunpack.c.l.b16 %v3550
          %v3619 = vunpack.c.h.b16 %v3549
          %v3620 = vunpack.c.h.b16 %v3550
          %v3621 = vunpack.c.l.b16 %v3551
          %v3622 = vunpack.c.l.b16 %v3552
          %v3623 = vunpack.c.h.b16 %v3551
          %v3624 = vunpack.c.h.b16 %v3552
          %v3625 = vunpack.c.l.b16 %v3553
          %v3626 = vunpack.c.l.b16 %v3554
          %v3627 = vunpack.c.h.b16 %v3553
          %v3628 = vunpack.c.h.b16 %v3554
          %v3629 = vunpack.c.l.b16 %v3555
          %v3630 = vunpack.c.l.b16 %v3556
          %v3631 = vunpack.c.h.b16 %v3555
          %v3632 = vunpack.c.h.b16 %v3556
          %v3633 = vunpack.c.l.b16 %v3557
          %v3634 = vunpack.c.l.b16 %v3558
          %v3635 = vunpack.c.h.b16 %v3557
          %v3636 = vunpack.c.h.b16 %v3558
          %v3637 = vunpack.c.l.b16 %v3559
          %v3638 = vunpack.c.l.b16 %v3560
          %v3639 = vunpack.c.h.b16 %v3559
          %v3640 = vunpack.c.h.b16 %v3560
          %v3641 = vunpack.c.l.b16 %v3561
          %v3642 = vunpack.c.l.b16 %v3562
          %v3643 = vunpack.c.h.b16 %v3561
          %v3644 = vunpack.c.h.b16 %v3562
          %v3645 = vunpack.c.l.b16 %v3563
          %v3646 = vunpack.c.l.b16 %v3564
          %v3647 = vunpack.c.h.b16 %v3563
          %v3648 = vunpack.c.h.b16 %v3564
          %v3649 = vunpack.c.l.b16 %v3565
          %v3650 = vunpack.c.l.b16 %v3566
          %v3651 = vunpack.c.h.b16 %v3565
          %v3652 = vunpack.c.h.b16 %v3566
          %v3653 = vunpack.c.l.b16 %v3567
          %v3654 = vunpack.c.l.b16 %v3568
          %v3655 = vunpack.c.h.b16 %v3567
          %v3656 = vunpack.c.h.b16 %v3568
          %v3657 = vunpack.c.l.b16 %v3569
          %v3658 = vunpack.c.l.b16 %v3570
          %v3659 = vunpack.c.h.b16 %v3569
          %v3660 = vunpack.c.h.b16 %v3570
          %v3661 = vunpack.c.l.b16 %v3571
          %v3662 = vunpack.c.l.b16 %v3572
          %v3663 = vunpack.c.h.b16 %v3571
          %v3664 = vunpack.c.h.b16 %v3572
          %v3665 = vunpack.c.l.b16 %v3573
          %v3666 = vunpack.c.l.b16 %v3574
          %v3667 = vunpack.c.h.b16 %v3573
          %v3668 = vunpack.c.h.b16 %v3574
          %v3669 = vunpack.c.l.b16 %v3575
          %v3670 = vunpack.c.l.b16 %v3576
          %v3671 = vunpack.c.h.b16 %v3575
          %v3672 = vunpack.c.h.b16 %v3576
          %v3673 = vpack.c.b16 %v3610, %v3609
          %v3674 = vpack.c.b16 %v3612, %v3611
          %v3675 = vpack.c.b16 %v3614, %v3613
          %v3676 = vpack.c.b16 %v3616, %v3615
          %v3677 = vpack.c.b16 %v3618, %v3617
          %v3678 = vpack.c.b16 %v3620, %v3619
          %v3679 = vpack.c.b16 %v3622, %v3621
          %v3680 = vpack.c.b16 %v3624, %v3623
          %v3681 = vpack.c.b16 %v3626, %v3625
          %v3682 = vpack.c.b16 %v3628, %v3627
          %v3683 = vpack.c.b16 %v3630, %v3629
          %v3684 = vpack.c.b16 %v3632, %v3631
          %v3685 = vpack.c.b16 %v3634, %v3633
          %v3686 = vpack.c.b16 %v3636, %v3635
          %v3687 = vpack.c.b16 %v3638, %v3637
          %v3688 = vpack.c.b16 %v3640, %v3639
          %v3689 = vpack.c.b16 %v3642, %v3641
          %v3690 = vpack.c.b16 %v3644, %v3643
          %v3691 = vpack.c.b16 %v3646, %v3645
          %v3692 = vpack.c.b16 %v3648, %v3647
          %v3693 = vpack.c.b16 %v3650, %v3649
          %v3694 = vpack.c.b16 %v3652, %v3651
          %v3695 = vpack.c.b16 %v3654, %v3653
          %v3696 = vpack.c.b16 %v3656, %v3655
          %v3697 = vpack.c.b16 %v3658, %v3657
          %v3698 = vpack.c.b16 %v3660, %v3659
          %v3699 = vpack.c.b16 %v3662, %v3661
          %v3700 = vpack.c.b16 %v3664, %v3663
          %v3701 = vpack.c.b16 %v3666, %v3665
          %v3702 = vpack.c.b16 %v3668, %v3667
          %v3703 = vpack.c.b16 %v3670, %v3669
          %v3704 = vpack.c.b16 %v3672, %v3671
          %3737 = vst [vmem:[%s499] sm:$0xff] %v3673
          %3738 = vst [vmem:[%s499 + $0x8] sm:$0xff] %v3674
          %3739 = vst [vmem:[%s499 + $0x10] sm:$0xff] %v3675
          %3740 = vst [vmem:[%s499 + $0x18] sm:$0xff] %v3676
          %3741 = vst [vmem:[%s499 + $0x20] sm:$0xff] %v3677
          %3742 = vst [vmem:[%s499 + $0x28] sm:$0xff] %v3678
          %3743 = vst [vmem:[%s499 + $0x30] sm:$0xff] %v3679
          %3744 = vst [vmem:[%s499 + $0x38] sm:$0xff] %v3680
          %3745 = vst [vmem:[%s499 + $0x40] sm:$0xff] %v3681
          %3746 = vst [vmem:[%s499 + $0x48] sm:$0xff] %v3682
          %3747 = vst [vmem:[%s499 + $0x50] sm:$0xff] %v3683
          %3748 = vst [vmem:[%s499 + $0x58] sm:$0xff] %v3684
          %3749 = vst [vmem:[%s499 + $0x60] sm:$0xff] %v3685
          %3750 = vst [vmem:[%s499 + $0x68] sm:$0xff] %v3686
          %3751 = vst [vmem:[%s499 + $0x70] sm:$0xff] %v3687
          %3752 = vst [vmem:[%s499 + $0x78] sm:$0xff] %v3688
          %3753 = vst [vmem:[%s499 + $0x80] sm:$0xff] %v3689
          %3754 = vst [vmem:[%s499 + $0x88] sm:$0xff] %v3690
          %3755 = vst [vmem:[%s499 + $0x90] sm:$0xff] %v3691
          %3756 = vst [vmem:[%s499 + $0x98] sm:$0xff] %v3692
          %3757 = vst [vmem:[%s499 + $0xa0] sm:$0xff] %v3693
          %3758 = vst [vmem:[%s499 + $0xa8] sm:$0xff] %v3694
          %3759 = vst [vmem:[%s499 + $0xb0] sm:$0xff] %v3695
          %3760 = vst [vmem:[%s499 + $0xb8] sm:$0xff] %v3696
          %3761 = vst [vmem:[%s499 + $0xc0] sm:$0xff] %v3697
          %3762 = vst [vmem:[%s499 + $0xc8] sm:$0xff] %v3698
          %3763 = vst [vmem:[%s499 + $0xd0] sm:$0xff] %v3699
          %3764 = vst [vmem:[%s499 + $0xd8] sm:$0xff] %v3700
          %3765 = vst [vmem:[%s499 + $0xe0] sm:$0xff] %v3701
          %3766 = vst [vmem:[%s499 + $0xe8] sm:$0xff] %v3702
          %3767 = vst [vmem:[%s499 + $0xf0] sm:$0xff] %v3703
          %3768 = vst [vmem:[%s499 + $0xf8] sm:$0xff] %v3704
        $region76: #{tpu_custom_call.1} parent=51 // pred_fallthru
          _
        %s3769 = sand.u32 %s257, 1
        %s3770 = scalar_lea.sflag [#allocation8], %s3769
        %s3771 = sand.u32 %s257, 1
        %s3772 = smul.addr %s3771, 256
        %s3773 = scalar_lea.vmem [#allocation12], %s3772
        %s3774 = sand.u32 %s42, 1
        %s3775 = scalar_lea.sflag [#allocation14], %s3774
        %s3776 = sand.u32 %s283, 1
        %s3777 = smul.addr %s3776, 256
        %s3778 = scalar_lea.vmem [#allocation13], %s3777
        %s3779 = sand.u32 %s42, 1
        %s3780 = scalar_lea.sflag [#allocation14], %s3779
        %s3781 = sand.u32 %s309, 1
        %s3782 = smul.addr %s3781, 256
        %s3783 = scalar_lea.vmem [#allocation15], %s3782
        // Predicated region
        $region77: #{tpu_custom_call.1} parent=51 // pred_check
          %p3784 = pneg %p267
        $region78: #{tpu_custom_call.1} parent=51 // pred_check_branch
          %3786 = sbr.rel (%p3784) target = $region80
        $region79: #{tpu_custom_call.1} parent=51 // pred_region
          %s3787 = smul.u32 32, %s46
          %s3789 = ssub.s32 4096, 4096
          %3790 = vsyncadd %s3770, %s3789
          %s3791 = smul.addr %s3787, 128
          %s3792 = scalar_lea.hbm %s10, %s3791
          %s3793 = sshll.u32 %s3773, 4
          %s3794 = int_to_ptr.vmem [resolvable:$true] %s3793
          %3799 = dma.vmem_to_hbm [thread:$0]  %s3794, 4096, %s3792, %s3770, 128, 128, 8
        $region80: #{tpu_custom_call.1} parent=51 // pred_fallthru
          _
        // Predicated region
        $region81: #{tpu_custom_call.1} parent=51 // pred_check
          %p3800 = pneg %p293
        $region82: #{tpu_custom_call.1} parent=51 // pred_check_branch
          %3802 = sbr.rel (%p3800) target = $region84
        $region83: #{tpu_custom_call.1} parent=51 // pred_region
          %s3803 = smul.u32 32, %s46
          %s3805 = ssub.s32 4096, 4096
          %3806 = vsyncadd %s3775, %s3805
          %s3807 = smul.addr %s3803, 2
          %s3808 = smul.addr %s3807, 64
          %s3809 = scalar_lea.hbm %s11, %s3808
          %s3810 = sshll.u32 %s3778, 4
          %s3811 = int_to_ptr.vmem [resolvable:$true] %s3810
          %3816 = dma.vmem_to_hbm [thread:$0]  %s3811, 4096, %s3809, %s3775, 128, 128, 8
        $region84: #{tpu_custom_call.1} parent=51 // pred_fallthru
          _
        // Predicated region
        $region85: #{tpu_custom_call.1} parent=51 // pred_check
          %p3817 = pneg %p319
        $region86: #{tpu_custom_call.1} parent=51 // pred_check_branch
          %3819 = sbr.rel (%p3817) target = $region88
        $region87: #{tpu_custom_call.1} parent=51 // pred_region
          %s3820 = smul.u32 32, %s46
          %s3822 = ssub.s32 4096, 4096
          %3823 = vsyncadd %s3780, %s3822
          %s3824 = smul.addr %s3820, 2
          %s3825 = smul.addr %s3824, 64
          %s3826 = scalar_lea.hbm %s12, %s3825
          %s3827 = sshll.u32 %s3783, 4
          %s3828 = int_to_ptr.vmem [resolvable:$true] %s3827
          %3833 = dma.vmem_to_hbm [thread:$0]  %s3828, 4096, %s3826, %s3780, 128, 128, 8
        $region88: #{tpu_custom_call.1} parent=51 // pred_fallthru
          _
      $region52: #{tpu_custom_call.1} parent=5 // pred_fallthru
        _
      %p3834 = scmp.le.s32.totalorder 2, %s37
      // Predicated region
      $region89: #{tpu_custom_call.1} parent=5 // pred_check
        %p3835 = pneg %p3834
      $region90: #{tpu_custom_call.1} parent=5 // pred_check_branch
        %3837 = sbr.rel (%p3835) target = $region92
      $region91: #{tpu_custom_call.1} parent=5 // pred_region
        %s3838 = ssub.s32 %s37, 2
        // Predicated region
        $region93: #{tpu_custom_call.1} parent=91 // pred_check
          %p3839 = pneg %p273
        $region94: #{tpu_custom_call.1} parent=91 // pred_check_branch
          %3841 = sbr.rel (%p3839) target = $region96
        $region95: #{tpu_custom_call.1} parent=91 // pred_region
          %s3842 = sand.u32 %s258, 1
          %s3843 = scalar_lea.sflag [#allocation8], %s3842
          %s3844 = sand.u32 %s258, 1
          %s3845 = smul.addr %s3844, 256
          %s3846 = scalar_lea.vmem [#allocation12], %s3845
          %3847 = dma.done %s3843, 4096
        $region96: #{tpu_custom_call.1} parent=91 // pred_fallthru
          _
        // Predicated region
        $region97: #{tpu_custom_call.1} parent=91 // pred_check
          %p3848 = pneg %p299
        $region98: #{tpu_custom_call.1} parent=91 // pred_check_branch
          %3850 = sbr.rel (%p3848) target = $region100
        $region99: #{tpu_custom_call.1} parent=91 // pred_region
          %s3851 = sand.u32 %s43, 1
          %s3852 = scalar_lea.sflag [#allocation14], %s3851
          %s3853 = sand.u32 %s284, 1
          %s3854 = smul.addr %s3853, 256
          %s3855 = scalar_lea.vmem [#allocation13], %s3854
          %3856 = dma.done %s3852, 4096
        $region100: #{tpu_custom_call.1} parent=91 // pred_fallthru
          _
        // Predicated region
        $region101: #{tpu_custom_call.1} parent=91 // pred_check
          %p3857 = pneg %p325
        $region102: #{tpu_custom_call.1} parent=91 // pred_check_branch
          %3859 = sbr.rel (%p3857) target = $region104
        $region103: #{tpu_custom_call.1} parent=91 // pred_region
          %s3860 = sand.u32 %s43, 1
          %s3861 = scalar_lea.sflag [#allocation14], %s3860
          %s3862 = sand.u32 %s310, 1
          %s3863 = smul.addr %s3862, 256
          %s3864 = scalar_lea.vmem [#allocation15], %s3863
          %3865 = dma.done %s3861, 4096
        $region104: #{tpu_custom_call.1} parent=91 // pred_fallthru
          _
      $region92: #{tpu_custom_call.1} parent=5 // pred_fallthru
        _
    $region6: #{tpu_custom_call.1} parent=1 // loop_footer
      %s41 = sadd.s32 1, %s37
    $region7: #{tpu_custom_call.1} parent=1 // loop_footer_branch
      %36 = sbr.rel target = $region3
    $region8: #{tpu_custom_call.1} parent=1 // loop_exit
      _
    %3866 = vsyncpa [#allocation7], 1
    %s3867 = scalar_lea.sflag [#allocation7], 1
    %3868 = vsyncpa %s3867, 1
    %3869 = vsyncpa [#allocation10], 1
    %3870 = vsyncpa [#allocation8], 1
    %s3871 = scalar_lea.sflag [#allocation8], 1
    %3872 = vsyncpa %s3871, 1
    %3873 = vsyncpa [#allocation14], 1
    %s3874 = scalar_lea.sflag [#allocation14], 1
    %3875 = vsyncpa %s3874, 1

</llo_original>
